<compile_context>
chip_gen: v7x
topology: tpu7x:2x2x1
jax: 0.10.0
libtpu: 0.0.40
codegen_flags: <defaults>
</compile_context>

<pallas_src>
import functools

import jax
import jax.numpy as jnp
from jax.experimental import pallas as pl
from jax.experimental.pallas import tpu as pltpu

EMBED = 32     # fixed mixing embed dim in the PyTorch module (n_agents * 32, 32, ...)
_LANE = 128    # lane-alignment quantum for packed column blocks


def _round_up(x, m):
    return (x + m - 1) // m * m


# -----------------------------------------------------------------------------
# Kernel: one grid step processes a (TB, .) batch tile.
# Packed operands (all lane-aligned; see pack_params for the exact column map):
#   x  (TB, S + A_pad)              = [states | agent_qs]
#   wf (S+A_pad, K2P + 128 + NW1P)  = [hypernet layer-1 of all 4 heads | hyper_b_1 | E]
#   w2 (K2P, NW1P + 256)            = blockdiag(w1b, wfb, wbfb) -> [w1 | w_final | b_final]
#   R  (NW1P, 32)                   = chunk-sum reduce, R[a*32+e, e] = 1
# -----------------------------------------------------------------------------
def _qmix_kernel(x_ref, wf_ref, bf_ref, w2_ref, b2_ref, r_ref, out_ref, *, precision):
    cd = x_ref.dtype                      # compute dtype (f32 parity or bf16 fast path)
    k2p = w2_ref.shape[0]                 # padded 3 * hypernet_embed (multiple of 128)
    nw1p = r_ref.shape[0]                 # padded n_agents * 32       (multiple of 128)
    embed = r_ref.shape[1]                # 32

    x = x_ref[...]                        # (TB, S + A_pad)

    # Fused first layer of all four hypernetworks + agent expansion E: one MXU pass.
    z = (jnp.dot(x, wf_ref[...], preferred_element_type=jnp.float32,
                 precision=precision) + bf_ref[...]).astype(cd)
    za = jnp.maximum(z[:, :k2p], 0.0)               # relu'd hidden of w_1/w_final/b_final
    b1 = z[:, k2p:k2p + embed]                      # hyper_b_1 output (no relu), aligned
    q_exp = z[:, k2p + _LANE:]                      # (TB, NW1P) qs expanded per agent block

    # Fused second layer (block-diagonal): [w1 | w_final | b_final] in one matmul.
    z2 = (jnp.dot(za, w2_ref[...], preferred_element_type=jnp.float32,
                  precision=precision) + b2_ref[...]).astype(cd)
    w1 = jnp.abs(z2[:, :nw1p])                              # (TB, NW1P)
    w_final = jnp.abs(z2[:, nw1p:nw1p + embed])             # (TB, 32), 128-aligned start
    b_final = z2[:, nw1p + _LANE:nw1p + _LANE + 1]          # (TB, 1),  128-aligned start

    # Per-sample agent mix: elementwise multiply expanded qs with w1, chunk-reduce via R
    # (exact 0/1 weights), add b1, relu, then the final 32-wide dot with w_final.
    hidden = jnp.maximum(
        jnp.dot(q_exp * w1, r_ref[...], preferred_element_type=jnp.float32,
                precision=precision) + b1.astype(jnp.float32), 0.0)
    q_tot = (jnp.sum(hidden * w_final.astype(jnp.float32), axis=-1, keepdims=True)
             + b_final.astype(jnp.float32))
    out_ref[...] = q_tot.astype(out_ref.dtype)


# -----------------------------------------------------------------------------
# Wrapper-side parameter packing (layout plumbing, done once outside the kernel).
# -----------------------------------------------------------------------------
def pack_params(p, n_agents, dtype=jnp.float32):
    f32 = jnp.float32
    S, H = p["w1a"].shape
    A = n_agents
    K2 = 3 * H
    K2P = _round_up(K2, _LANE)            # relu block padded to a lane-aligned width
    NW1 = A * EMBED
    NW1P = _round_up(NW1, _LANE)
    A_pad = _round_up(A, 8)
    SA = S + A_pad
    N1 = K2P + _LANE + NW1P               # [relu block | b1 block | q_exp block]
    N2 = NW1P + 2 * _LANE                 # [w1 block   | w_final  | b_final    ]

    # fused first layer: hypernet layer-1 of all 4 heads + hyper_b_1 + E (block diag).
    wf = jnp.zeros((SA, N1), f32)
    wf = wf.at[:S, 0:H].set(p["w1a"])
    wf = wf.at[:S, H:2 * H].set(p["wfa"])
    wf = wf.at[:S, 2 * H:3 * H].set(p["wbfa"])
    wf = wf.at[:S, K2P:K2P + EMBED].set(p["wb1"])
    E = jnp.repeat(jnp.eye(A, dtype=f32), EMBED, axis=1)           # (A, A*32)
    wf = wf.at[S:S + A, K2P + _LANE:K2P + _LANE + NW1].set(E)

    bf = jnp.zeros((1, N1), f32)
    bf = bf.at[:, 0:H].set(p["b1a"])
    bf = bf.at[:, H:2 * H].set(p["bfa"])
    bf = bf.at[:, 2 * H:3 * H].set(p["bbfa"])
    bf = bf.at[:, K2P:K2P + EMBED].set(p["bb1"])

    # fused second layer, block-diagonal: za (TB, K2P) @ w2 -> [w1 | w_final | b_final]
    w2 = jnp.zeros((K2P, N2), f32)
    w2 = w2.at[0:H, 0:NW1].set(p["w1b"])
    w2 = w2.at[H:2 * H, NW1P:NW1P + EMBED].set(p["wfb"])
    w2 = w2.at[2 * H:3 * H, NW1P + _LANE:NW1P + _LANE + 1].set(p["wbfb"])

    b2 = jnp.zeros((1, N2), f32)
    b2 = b2.at[:, 0:NW1].set(p["b1b"])
    b2 = b2.at[:, NW1P:NW1P + EMBED].set(p["bfb"])
    b2 = b2.at[:, NW1P + _LANE:NW1P + _LANE + 1].set(p["bbfb"])

    # chunk-sum reduce matrix (exact 0/1), padded rows are zero.
    R = jnp.zeros((NW1P, EMBED), f32)
    R = R.at[0:NW1].set(jnp.tile(jnp.eye(EMBED, dtype=f32), (A, 1)))

    out = {k: v.astype(dtype) for k, v in
           {"wf": wf, "bf": bf, "w2": w2, "b2": b2, "R": R}.items()}
    out.update(n_agents=A, a_pad=A_pad, state_dim=S)
    return out


def qmix_forward(agent_qs, states, packed, *, block_b=None, vmem_limit_bytes=None,
                 precision=None):
    """agent_qs (B, n_agents) f32, states (B, state_dim) f32 -> (B, 1) f32."""
    B, A = agent_qs.shape
    S = states.shape[1]
    a_pad = packed["a_pad"]
    SA = S + a_pad
    dtype = packed["wf"].dtype

    # per-generation tile / VMEM budget: v7x has 64 MiB physical VMEM vs 128 MiB on
    # v5e/v6e, so it gets a smaller default tile and a lower scoped-VMEM limit.
    try:
        vmem_cap = int(pltpu.get_tpu_info().vmem_capacity_bytes)
    except Exception:
        vmem_cap = 128 * 1024 * 1024        # conservative: behave like v5e/v6e
    small_vmem = vmem_cap <= 64 * 1024 * 1024
    if block_b is None:
        block_b = 2048 if small_vmem else 4096
    if vmem_limit_bytes is None:
        vmem_limit_bytes = (48 if small_vmem else 96) * 1024 * 1024
    if precision is None:
        precision = (jax.lax.Precision.HIGHEST if dtype == jnp.float32
                     else jax.lax.Precision.DEFAULT)

    # batch tiling: sublane-aligned tile; keep >= 2 grid steps so the "parallel"
    # batch axis actually feeds both TensorCores on v7x (harmless on 1-TC chips).
    b8 = _round_up(B, 8)
    tb = min(_round_up(block_b, 8), b8)
    if tb == b8 and b8 >= 16:
        tb = _round_up((b8 + 1) // 2, 8)
    bp = _round_up(B, tb)
    grid = (bp // tb,)

    # single fused input operand [states | agent_qs], padded rows/agent cols are benign.
    qs = agent_qs
    if a_pad != A:
        qs = jnp.pad(qs, ((0, 0), (0, a_pad - A)))
    x = jnp.concatenate([states, qs], axis=1).astype(dtype)
    if bp != B:
        x = jnp.pad(x, ((0, bp - B), (0, 0)))

    def const_spec(a):
        # constant block index -> the operand stays VMEM-resident across steps.
        return pl.BlockSpec(a.shape, lambda i: (0, 0))

    out = pl.pallas_call(
        functools.partial(_qmix_kernel, precision=precision),
        out_shape=jax.ShapeDtypeStruct((bp, 1), jnp.float32),
        grid=grid,
        in_specs=[
            pl.BlockSpec((tb, SA), lambda i: (i, 0)),     # fused batch tile
            const_spec(packed["wf"]),
            const_spec(packed["bf"]),
            const_spec(packed["w2"]),
            const_spec(packed["b2"]),
            const_spec(packed["R"]),
        ],
        out_specs=pl.BlockSpec((tb, 1), lambda i: (i, 0)),
        compiler_params=pltpu.CompilerParams(
            dimension_semantics=("parallel",),            # batch shards across TCs on v7x
            vmem_limit_bytes=vmem_limit_bytes,
        ),
    )(x, packed["wf"], packed["bf"], packed["w2"], packed["b2"], packed["R"])
    return out[:B]


# -----------------------------------------------------------------------------
# Reference init / forward (PyTorch-equivalent, unpacked params)
# -----------------------------------------------------------------------------
def init_params(key, n_agents, state_dim, hypernet_embed=64):
    """Deterministic PyTorch-style uniform(-1/sqrt(fan_in)) init, x @ W + b convention."""
    def linear(k, fan_in, fan_out):
        kw, kb = jax.random.split(k)
        lim = 1.0 / jnp.sqrt(fan_in)
        w = jax.random.uniform(kw, (fan_in, fan_out), jnp.float32, -lim, lim)
        b = jax.random.uniform(kb, (1, fan_out), jnp.float32, -lim, lim)
        return w, b

    ks = jax.random.split(key, 7)
    p = {}
    p["w1a"], p["b1a"] = linear(ks[0], state_dim, hypernet_embed)
    p["w1b"], p["b1b"] = linear(ks[1], hypernet_embed, n_agents * EMBED)
    p["wb1"], p["bb1"] = linear(ks[2], state_dim, EMBED)
    p["wfa"], p["bfa"] = linear(ks[3], state_dim, hypernet_embed)
    p["wfb"], p["bfb"] = linear(ks[4], hypernet_embed, EMBED)
    p["wbfa"], p["bbfa"] = linear(ks[5], state_dim, hypernet_embed)
    p["wbfb"], p["bbfb"] = linear(ks[6], hypernet_embed, 1)
    return p


def qmix_reference(agent_qs, states, p, n_agents):
    B = agent_qs.shape[0]
    relu = lambda x: jnp.maximum(x, 0.0)
    w1 = jnp.abs(relu(states @ p["w1a"] + p["b1a"]) @ p["w1b"] + p["b1b"])
    w1 = w1.reshape(B, n_agents, EMBED)
    b1 = (states @ p["wb1"] + p["bb1"]).reshape(B, 1, EMBED)
    w_final = jnp.abs(relu(states @ p["wfa"] + p["bfa"]) @ p["wfb"] + p["bfb"])
    w_final = w_final.reshape(B, EMBED, 1)
    b_final = (relu(states @ p["wbfa"] + p["bbfa"]) @ p["wbfb"] + p["bbfb"])
    b_final = b_final.reshape(B, 1, 1)
    hidden = relu(jnp.einsum("ba,baj->bj", agent_qs, w1)[:, None, :] + b1)
    q_tot = jnp.einsum("bij,bjk->bik", hidden, w_final) + b_final
    return q_tot.squeeze(-1)  # (B, 1)


if __name__ == "__main__":
    n_agents, state_dim, hypernet_embed, batch = 4, 16, 64, 50

    key = jax.random.PRNGKey(0)
    k_q, k_s, k_p = jax.random.split(key, 3)
    agent_qs = jax.random.normal(k_q, (batch, n_agents), jnp.float32)
    states = jax.random.normal(k_s, (batch, state_dim), jnp.float32)
    params = init_params(k_p, n_agents, state_dim, hypernet_embed)

    packed_f32 = pack_params(params, n_agents)                       # parity path
    packed_bf16 = pack_params(params, n_agents, dtype=jnp.bfloat16)  # fast path (v6e/v7x)

    # default per-chip tile path, plus a tiny tile that exercises a multi-step grid
    # and batch padding, plus the bf16 path.
    out = jax.block_until_ready(qmix_forward(agent_qs, states, packed_f32))
    out_small = jax.block_until_ready(
        qmix_forward(agent_qs, states, packed_f32, block_b=16))
    out_bf16 = jax.block_until_ready(qmix_forward(agent_qs, states, packed_bf16))

    with jax.default_matmul_precision("highest"):
        ref = jax.block_until_ready(qmix_reference(agent_qs, states, params, n_agents))

    assert out.shape == (batch, 1)
    assert jnp.allclose(out, ref, atol=2e-2, rtol=2e-2), (out, ref)
    assert jnp.allclose(out_small, ref, atol=2e-2, rtol=2e-2), (out_small, ref)
    assert jnp.allclose(out_bf16.astype(jnp.float32), ref, atol=1e-1, rtol=1e-1)
    print("KERNEL_OK")
</pallas_src>

<mosaic_0001>
module attributes {stable_mosaic.version = 11 : i64} {
  func.func @_qmix_kernel(%arg0: i32, %arg1: memref<32x24xf32, #tpu.memory_space<vmem>>, %arg2: memref<24x512xf32, #tpu.memory_space<vmem>>, %arg3: memref<1x512xf32, #tpu.memory_space<vmem>>, %arg4: memref<256x384xf32, #tpu.memory_space<vmem>>, %arg5: memref<1x384xf32, #tpu.memory_space<vmem>>, %arg6: memref<128x32xf32, #tpu.memory_space<vmem>>, %arg7: memref<32x1xf32, #tpu.memory_space<vmem>>) attributes {dimension_semantics = [#tpu.dimension_semantics<parallel>], iteration_bounds = array<i64: 2>, scalar_prefetch = 0 : i64, scratch_operands = 0 : i64, tpu.core_type = #tpu.core_type<tc>, window_params = [{transform_indices = @transform_0, window_bounds = array<i64: 32, 24>}, {pipeline_mode = #tpu.pipeline_mode<synchronous>, transform_indices = @transform_1, window_bounds = array<i64: 24, 512>}, {pipeline_mode = #tpu.pipeline_mode<synchronous>, transform_indices = @transform_2, window_bounds = array<i64: 1, 512>}, {pipeline_mode = #tpu.pipeline_mode<synchronous>, transform_indices = @transform_3, window_bounds = array<i64: 256, 384>}, {pipeline_mode = #tpu.pipeline_mode<synchronous>, transform_indices = @transform_4, window_bounds = array<i64: 1, 384>}, {pipeline_mode = #tpu.pipeline_mode<synchronous>, transform_indices = @transform_5, window_bounds = array<i64: 128, 32>}, {transform_indices = @transform_6, window_bounds = array<i64: 32, 1>}]} {
    %c0 = arith.constant 0 : index
    %c0_0 = arith.constant 0 : index
    %0 = vector.load %arg1[%c0, %c0_0] : memref<32x24xf32, #tpu.memory_space<vmem>>, vector<32x24xf32>
    %c0_1 = arith.constant 0 : index
    %c0_2 = arith.constant 0 : index
    %1 = vector.load %arg2[%c0_1, %c0_2] : memref<24x512xf32, #tpu.memory_space<vmem>>, vector<24x512xf32>
    %cst = arith.constant dense<0.000000e+00> : vector<32x512xf32>
    %2 = tpu.matmul %0, %1, %cst {dimension_numbers = #tpu.dot_dimension_numbers<[1], [0], [0], [1], [0, 0, 1, 1], [], []>, precision = #tpu.contract_precision<fp32>} : vector<32x24xf32>, vector<24x512xf32>, vector<32x512xf32> -> vector<32x512xf32>
    %c0_3 = arith.constant 0 : index
    %c0_4 = arith.constant 0 : index
    %3 = vector.load %arg3[%c0_3, %c0_4] : memref<1x512xf32, #tpu.memory_space<vmem>>, vector<1x512xf32>
    %4 = vector.broadcast %3 : vector<1x512xf32> to vector<32x512xf32>
    %5 = arith.addf %2, %4 : vector<32x512xf32>
    %6 = vector.extract_strided_slice %5 {offsets = [0, 0], sizes = [32, 256], strides = [1, 1]} : vector<32x512xf32> to vector<32x256xf32>
    %cst_5 = arith.constant 0.000000e+00 : f32
    %7 = vector.broadcast %cst_5 : f32 to vector<32x256xf32>
    %8 = arith.maximumf %6, %7 : vector<32x256xf32>
    %9 = vector.extract_strided_slice %5 {offsets = [0, 256], sizes = [32, 32], strides = [1, 1]} : vector<32x512xf32> to vector<32x32xf32>
    %10 = vector.extract_strided_slice %5 {offsets = [0, 384], sizes = [32, 128], strides = [1, 1]} : vector<32x512xf32> to vector<32x128xf32>
    %c0_6 = arith.constant 0 : index
    %c0_7 = arith.constant 0 : index
    %11 = vector.load %arg4[%c0_6, %c0_7] : memref<256x384xf32, #tpu.memory_space<vmem>>, vector<256x384xf32>
    %cst_8 = arith.constant dense<0.000000e+00> : vector<32x384xf32>
    %12 = tpu.matmul %8, %11, %cst_8 {dimension_numbers = #tpu.dot_dimension_numbers<[1], [0], [0], [1], [0, 0, 1, 1], [], []>, precision = #tpu.contract_precision<fp32>} : vector<32x256xf32>, vector<256x384xf32>, vector<32x384xf32> -> vector<32x384xf32>
    %c0_9 = arith.constant 0 : index
    %c0_10 = arith.constant 0 : index
    %13 = vector.load %arg5[%c0_9, %c0_10] : memref<1x384xf32, #tpu.memory_space<vmem>>, vector<1x384xf32>
    %14 = vector.broadcast %13 : vector<1x384xf32> to vector<32x384xf32>
    %15 = arith.addf %12, %14 : vector<32x384xf32>
    %16 = vector.extract_strided_slice %15 {offsets = [0, 0], sizes = [32, 128], strides = [1, 1]} : vector<32x384xf32> to vector<32x128xf32>
    %17 = math.absf %16 : vector<32x128xf32>
    %18 = vector.extract_strided_slice %15 {offsets = [0, 128], sizes = [32, 32], strides = [1, 1]} : vector<32x384xf32> to vector<32x32xf32>
    %19 = math.absf %18 : vector<32x32xf32>
    %20 = vector.extract_strided_slice %15 {offsets = [0, 256], sizes = [32, 1], strides = [1, 1]} : vector<32x384xf32> to vector<32x1xf32>
    %21 = arith.mulf %10, %17 : vector<32x128xf32>
    %c0_11 = arith.constant 0 : index
    %c0_12 = arith.constant 0 : index
    %22 = vector.load %arg6[%c0_11, %c0_12] : memref<128x32xf32, #tpu.memory_space<vmem>>, vector<128x32xf32>
    %cst_13 = arith.constant dense<0.000000e+00> : vector<32x32xf32>
    %23 = tpu.matmul %21, %22, %cst_13 {dimension_numbers = #tpu.dot_dimension_numbers<[1], [0], [0], [1], [0, 0, 1, 1], [], []>, precision = #tpu.contract_precision<fp32>} : vector<32x128xf32>, vector<128x32xf32>, vector<32x32xf32> -> vector<32x32xf32>
    %24 = arith.addf %23, %9 : vector<32x32xf32>
    %cst_14 = arith.constant 0.000000e+00 : f32
    %25 = vector.broadcast %cst_14 : f32 to vector<32x32xf32>
    %26 = arith.maximumf %24, %25 : vector<32x32xf32>
    %27 = arith.mulf %26, %19 : vector<32x32xf32>
    %cst_15 = arith.constant dense<0.000000e+00> : vector<32xf32>
    %28 = vector.multi_reduction <add>, %27, %cst_15 [1] : vector<32x32xf32> to vector<32xf32>
    %29 = vector.shape_cast %28 : vector<32xf32> to vector<32x1xf32>
    %30 = arith.addf %29, %20 : vector<32x1xf32>
    %c0_16 = arith.constant 0 : index
    %c0_17 = arith.constant 0 : index
    %31 = vector.load %arg7[%c0_16, %c0_17] : memref<32x1xf32, #tpu.memory_space<vmem>>, vector<32x1xf32>
    tpu.vector_store %arg7[%c0_16, %c0_17], %30 {strides = array<i32>} : memref<32x1xf32, #tpu.memory_space<vmem>>, vector<32x1xf32>,
    return
  }
  func.func @transform_0(%arg0: i32) -> (i32, i32) {
    %c0_i32 = arith.constant 0 : i32
    %c0_i32_0 = arith.constant 0 : i32
    return %arg0, %c0_i32 : i32, i32
  }
  func.func @transform_1(%arg0: i32) -> (i32, i32) {
    %c0_i32 = arith.constant 0 : i32
    %c0_i32_0 = arith.constant 0 : i32
    %c0_i32_1 = arith.constant 0 : i32
    return %c0_i32, %c0_i32_0 : i32, i32
  }
  func.func @transform_2(%arg0: i32) -> (i32, i32) {
    %c0_i32 = arith.constant 0 : i32
    %c0_i32_0 = arith.constant 0 : i32
    %c0_i32_1 = arith.constant 0 : i32
    return %c0_i32, %c0_i32_0 : i32, i32
  }
  func.func @transform_3(%arg0: i32) -> (i32, i32) {
    %c0_i32 = arith.constant 0 : i32
    %c0_i32_0 = arith.constant 0 : i32
    %c0_i32_1 = arith.constant 0 : i32
    return %c0_i32, %c0_i32_0 : i32, i32
  }
  func.func @transform_4(%arg0: i32) -> (i32, i32) {
    %c0_i32 = arith.constant 0 : i32
    %c0_i32_0 = arith.constant 0 : i32
    %c0_i32_1 = arith.constant 0 : i32
    return %c0_i32, %c0_i32_0 : i32, i32
  }
  func.func @transform_5(%arg0: i32) -> (i32, i32) {
    %c0_i32 = arith.constant 0 : i32
    %c0_i32_0 = arith.constant 0 : i32
    %c0_i32_1 = arith.constant 0 : i32
    return %c0_i32, %c0_i32_0 : i32, i32
  }
  func.func @transform_6(%arg0: i32) -> (i32, i32) {
    %c0_i32 = arith.constant 0 : i32
    %c0_i32_0 = arith.constant 0 : i32
    return %arg0, %c0_i32 : i32, i32
  }
}

</mosaic_0001>

<llo_original>
// kernel: tpu_custom_call.1
$region0: #{tpu_custom_call.1}
  #allocation0 [shape = 'u32[]', space=smem, size = 0x4, offset = 0x4, fixed_abs, tag = 'smem constant byte address 0x4 - core index']
  #allocation1 [shape = 'u32[144,128]{1,0:T(1,128)}', space=vmem, size = 0x12000, scoped, tag = 'internal scratch']
  %s0 = inlined_call_operand.hbm [shape: f32[64,24], index: 0, kind: input, shape index: {}]
  %s1 = inlined_call_operand.hbm [shape: f32[24,512], index: 1, kind: input, shape index: {}]
  %s2 = inlined_call_operand.hbm [shape: f32[1,512], index: 2, kind: input, shape index: {}]
  %s3 = inlined_call_operand.hbm [shape: f32[256,384], index: 3, kind: input, shape index: {}]
  %s4 = inlined_call_operand.hbm [shape: f32[1,384], index: 4, kind: input, shape index: {}]
  %s5 = inlined_call_operand.hbm [shape: f32[128,32], index: 5, kind: input, shape index: {}]
  %s6 = inlined_call_operand.hbm [shape: f32[64,1], index: 6, kind: output, shape index: {}]
  %s7 = sld [smem:[#allocation0]]
  $region81: #{tpu_custom_call.1} parent=0
    _
  %s9 = ssub.s32 1, %s7
  %s10 = scalar_select 0, %s9, %s7
  $region1: #{tpu_custom_call.1} parent=0
    #allocation2 [shape = 'u8[32768]{0}', space=vmem, size = 0x8000, scoped, tag = 'input window, operand 0']
    #allocation3 [shape = 's32[2]{0}', space=sflag, size = 0x8, scoped, tag = 'scoped memory for tpu_custom_call.1']
    #allocation4 [shape = 's32[2]{0}', space=sflag, size = 0x8, scoped, tag = 'scoped memory for tpu_custom_call.1']
    #allocation5 [shape = 'u8[49152]{0}', space=vmem, size = 0xc000, scoped, tag = 'input window, operand 1, single buffered']
    #allocation6 [shape = 's32[1]{0}', space=sflag, size = 0x4, scoped, tag = 'scoped memory for tpu_custom_call.1']
    #allocation7 [shape = 'u8[2048]{0}', space=vmem, size = 0x800, scoped, tag = 'input window, operand 2, single buffered']
    #allocation8 [shape = 'u8[393216]{0}', space=vmem, size = 0x60000, scoped, tag = 'input window, operand 3, single buffered']
    #allocation9 [shape = 's32[1]{0}', space=sflag, size = 0x4, scoped, tag = 'scoped memory for tpu_custom_call.1']
    #allocation10 [shape = 'u8[1536]{0}', space=vmem, size = 0x800, scoped, tag = 'input window, operand 4, single buffered']
    #allocation11 [shape = 'u8[65536]{0}', space=vmem, size = 0x10000, scoped, tag = 'input window, operand 5, single buffered']
    #allocation12 [shape = 's32[1]{0}', space=sflag, size = 0x4, scoped, tag = 'scoped memory for tpu_custom_call.1']
    #allocation13 [shape = 'u8[32768]{0}', space=vmem, size = 0x8000, scoped, tag = 'output window, operand 0']
    %11 = vsyncpa [#allocation3], 0
    %s12 = scalar_lea.sflag [#allocation3], 1
    %13 = vsyncpa %s12, 0
    %14 = vsyncpa [#allocation6], 0
    %15 = vsyncpa [#allocation9], 0
    %16 = vsyncpa [#allocation12], 0
    %17 = vsyncpa [#allocation4], 0
    %s18 = scalar_lea.sflag [#allocation4], 1
    %19 = vsyncpa %s18, 0
    loop: start=0, step=1, limit=4
    $region2: #{tpu_custom_call.1} parent=1 // loop_pre_header
      _
    $region3: #{tpu_custom_call.1} parent=1 // loop_header
      %s21 = sphi 0, %s25
      %p22 = scmp.ge.s32.totalorder %s21, 4
      %s31 = sphi 0, %s33
      %s34 = sphi 0, %s31
      %s35 = sphi 0, %s34
      %s51 = sphi 0, %s35
      %s55 = sphi 0, %s55
      %s57 = sphi 0, %s55
      %s58 = sphi 0, %s57
      %s72 = sphi 0, %s58
      %s76 = sphi 0, %s76
      %s78 = sphi 0, %s76
      %s79 = sphi 0, %s78
      %s93 = sphi 0, %s79
      %s97 = sphi 0, %s97
      %s99 = sphi 0, %s97
      %s100 = sphi 0, %s99
      %s114 = sphi 0, %s100
      %s118 = sphi 0, %s118
      %s120 = sphi 0, %s118
      %s121 = sphi 0, %s120
      %s135 = sphi 0, %s121
      %s139 = sphi 0, %s139
      %s141 = sphi 0, %s139
      %s142 = sphi 0, %s141
      %s156 = sphi 0, %s142
      %s162 = sphi 0, %s164
      %s165 = sphi 0, %s162
      %s166 = sphi 0, %s165
      %s182 = sphi 0, %s166
    $region4: #{tpu_custom_call.1} parent=1 // loop_header_branch
      %24 = sbr.rel (%p22) target = $region8
    $region5: #{tpu_custom_call.1} parent=1 // loop_body
      %s26 = ssub.s32 %s21, 1
      %s27 = ssub.s32 %s21, 2
      %s28 = sadd.s32 %s21, 1
      %s29 = ssub.s32 %s21, %s28
      %p30 = scmp.eq.s32.totalorder %s29, 0
      %s32 = sadd.s32 %s31, 1
      %s33 = scalar_select %p30, %s31, %s32
      %p36 = pneg %p30
      %p37 = scmp.eq.s32.totalorder %s21, 1
      %p38 = por %p36, %p37
      %p39 = scmp.ne.s32.totalorder %s31, %s34
      %p40 = scmp.eq.s32.totalorder %s21, 0
      %p41 = por %p39, %p40
      %p42 = scmp.ne.s32.totalorder %s31, %s34
      %p43 = scmp.eq.s32.totalorder %s26, 1
      %p44 = por %p42, %p43
      %p45 = scmp.ne.s32.totalorder %s34, %s35
      %p46 = scmp.eq.s32.totalorder %s26, 0
      %p47 = por %p45, %p46
      %p48 = scmp.ne.s32.totalorder %s34, %s35
      %p49 = scmp.eq.s32.totalorder %s27, 1
      %p50 = por %p48, %p49
      %p52 = scmp.ne.s32.totalorder %s35, %s51
      %p53 = scmp.eq.s32.totalorder %s27, 0
      %p54 = por %p52, %p53
      %s56 = sadd.s32 %s55, 1
      %p59 = scmp.eq.s32.totalorder %s21, 1
      %p60 = scmp.ne.s32.totalorder %s55, %s57
      %p61 = scmp.eq.s32.totalorder %s21, 0
      %p62 = por %p60, %p61
      %p63 = scmp.ne.s32.totalorder %s55, %s57
      %p64 = scmp.eq.s32.totalorder %s26, 1
      %p65 = por %p63, %p64
      %p66 = scmp.ne.s32.totalorder %s57, %s58
      %p67 = scmp.eq.s32.totalorder %s26, 0
      %p68 = por %p66, %p67
      %p69 = scmp.ne.s32.totalorder %s57, %s58
      %p70 = scmp.eq.s32.totalorder %s27, 1
      %p71 = por %p69, %p70
      %p73 = scmp.ne.s32.totalorder %s58, %s72
      %p74 = scmp.eq.s32.totalorder %s27, 0
      %p75 = por %p73, %p74
      %s77 = sadd.s32 %s76, 1
      %p80 = scmp.eq.s32.totalorder %s21, 1
      %p81 = scmp.ne.s32.totalorder %s76, %s78
      %p82 = scmp.eq.s32.totalorder %s21, 0
      %p83 = por %p81, %p82
      %p84 = scmp.ne.s32.totalorder %s76, %s78
      %p85 = scmp.eq.s32.totalorder %s26, 1
      %p86 = por %p84, %p85
      %p87 = scmp.ne.s32.totalorder %s78, %s79
      %p88 = scmp.eq.s32.totalorder %s26, 0
      %p89 = por %p87, %p88
      %p90 = scmp.ne.s32.totalorder %s78, %s79
      %p91 = scmp.eq.s32.totalorder %s27, 1
      %p92 = por %p90, %p91
      %p94 = scmp.ne.s32.totalorder %s79, %s93
      %p95 = scmp.eq.s32.totalorder %s27, 0
      %p96 = por %p94, %p95
      %s98 = sadd.s32 %s97, 1
      %p101 = scmp.eq.s32.totalorder %s21, 1
      %p102 = scmp.ne.s32.totalorder %s97, %s99
      %p103 = scmp.eq.s32.totalorder %s21, 0
      %p104 = por %p102, %p103
      %p105 = scmp.ne.s32.totalorder %s97, %s99
      %p106 = scmp.eq.s32.totalorder %s26, 1
      %p107 = por %p105, %p106
      %p108 = scmp.ne.s32.totalorder %s99, %s100
      %p109 = scmp.eq.s32.totalorder %s26, 0
      %p110 = por %p108, %p109
      %p111 = scmp.ne.s32.totalorder %s99, %s100
      %p112 = scmp.eq.s32.totalorder %s27, 1
      %p113 = por %p111, %p112
      %p115 = scmp.ne.s32.totalorder %s100, %s114
      %p116 = scmp.eq.s32.totalorder %s27, 0
      %p117 = por %p115, %p116
      %s119 = sadd.s32 %s118, 1
      %p122 = scmp.eq.s32.totalorder %s21, 1
      %p123 = scmp.ne.s32.totalorder %s118, %s120
      %p124 = scmp.eq.s32.totalorder %s21, 0
      %p125 = por %p123, %p124
      %p126 = scmp.ne.s32.totalorder %s118, %s120
      %p127 = scmp.eq.s32.totalorder %s26, 1
      %p128 = por %p126, %p127
      %p129 = scmp.ne.s32.totalorder %s120, %s121
      %p130 = scmp.eq.s32.totalorder %s26, 0
      %p131 = por %p129, %p130
      %p132 = scmp.ne.s32.totalorder %s120, %s121
      %p133 = scmp.eq.s32.totalorder %s27, 1
      %p134 = por %p132, %p133
      %p136 = scmp.ne.s32.totalorder %s121, %s135
      %p137 = scmp.eq.s32.totalorder %s27, 0
      %p138 = por %p136, %p137
      %s140 = sadd.s32 %s139, 1
      %p143 = scmp.eq.s32.totalorder %s21, 1
      %p144 = scmp.ne.s32.totalorder %s139, %s141
      %p145 = scmp.eq.s32.totalorder %s21, 0
      %p146 = por %p144, %p145
      %p147 = scmp.ne.s32.totalorder %s139, %s141
      %p148 = scmp.eq.s32.totalorder %s26, 1
      %p149 = por %p147, %p148
      %p150 = scmp.ne.s32.totalorder %s141, %s142
      %p151 = scmp.eq.s32.totalorder %s26, 0
      %p152 = por %p150, %p151
      %p153 = scmp.ne.s32.totalorder %s141, %s142
      %p154 = scmp.eq.s32.totalorder %s27, 1
      %p155 = por %p153, %p154
      %p157 = scmp.ne.s32.totalorder %s142, %s156
      %p158 = scmp.eq.s32.totalorder %s27, 0
      %p159 = por %p157, %p158
      %s160 = ssub.s32 %s21, %s28
      %p161 = scmp.eq.s32.totalorder %s160, 0
      %s163 = sadd.s32 %s162, 1
      %s164 = scalar_select %p161, %s162, %s163
      %p167 = pneg %p161
      %p168 = scmp.eq.s32.totalorder %s21, 1
      %p169 = por %p167, %p168
      %p170 = scmp.ne.s32.totalorder %s162, %s165
      %p171 = scmp.eq.s32.totalorder %s21, 0
      %p172 = por %p170, %p171
      %p173 = scmp.ne.s32.totalorder %s162, %s165
      %p174 = scmp.eq.s32.totalorder %s26, 1
      %p175 = por %p173, %p174
      %p176 = scmp.ne.s32.totalorder %s165, %s166
      %p177 = scmp.eq.s32.totalorder %s26, 0
      %p178 = por %p176, %p177
      %p179 = scmp.ne.s32.totalorder %s165, %s166
      %p180 = scmp.eq.s32.totalorder %s27, 1
      %p181 = por %p179, %p180
      %p183 = scmp.ne.s32.totalorder %s166, %s182
      %p184 = scmp.eq.s32.totalorder %s27, 0
      %p185 = por %p183, %p184
      %p186 = scmp.le.s32.totalorder 1, %s21
      %p187 = scmp.lt.s32.totalorder %s21, 3
      %p188 = pnand %p186, %p187
      %p189 = pneg %p188
      // Predicated region
      $region9: #{tpu_custom_call.1} parent=5 // pred_check
        _
      $region10: #{tpu_custom_call.1} parent=5 // pred_check_branch
        %191 = sbr.rel (%p188) target = $region12
      $region11: #{tpu_custom_call.1} parent=5 // pred_region
        %s192 = ssub.s32 %s21, 1
        // Predicated region
        $region13: #{tpu_custom_call.1} parent=11 // pred_check
          %p193 = pneg %p68
        $region14: #{tpu_custom_call.1} parent=11 // pred_check_branch
          %195 = sbr.rel (%p193) target = $region16
        $region15: #{tpu_custom_call.1} parent=11 // pred_region
          %s197 = ssub.s32 1536, 1536
          %198 = vsyncadd [#allocation6], %s197
          %s199 = sshll.u32 [#allocation5], 4
          %s200 = int_to_ptr.vmem [resolvable:$true] %s199
          %205 = dma.hbm_to_vmem [thread:$0]  %s1, 1536, %s200, [#allocation6], 512, 512, 32
        $region16: #{tpu_custom_call.1} parent=11 // pred_fallthru
          _
        // Predicated region
        $region17: #{tpu_custom_call.1} parent=11 // pred_check
          %p206 = pneg %p89
        $region18: #{tpu_custom_call.1} parent=11 // pred_check_branch
          %208 = sbr.rel (%p206) target = $region20
        $region19: #{tpu_custom_call.1} parent=11 // pred_region
          %s210 = ssub.s32 64, 64
          %211 = vsyncadd [#allocation6], %s210
          %s213 = sshll.u32 [#allocation7], 4
          %s214 = int_to_ptr.vmem [resolvable:$true] %s213
          %216 = dma.hbm_to_vmem [thread:$0]  %s2, 64, %s214, [#allocation6]
        $region20: #{tpu_custom_call.1} parent=11 // pred_fallthru
          _
        // Predicated region
        $region21: #{tpu_custom_call.1} parent=11 // pred_check
          %p217 = pneg %p110
        $region22: #{tpu_custom_call.1} parent=11 // pred_check_branch
          %219 = sbr.rel (%p217) target = $region24
        $region23: #{tpu_custom_call.1} parent=11 // pred_region
          %s221 = ssub.s32 12288, 12288
          %222 = vsyncadd [#allocation9], %s221
          %s223 = sshll.u32 [#allocation8], 4
          %s224 = int_to_ptr.vmem [resolvable:$true] %s223
          %229 = dma.hbm_to_vmem [thread:$0]  %s3, 12288, %s224, [#allocation9], 384, 384, 24
        $region24: #{tpu_custom_call.1} parent=11 // pred_fallthru
          _
        // Predicated region
        $region25: #{tpu_custom_call.1} parent=11 // pred_check
          %p230 = pneg %p131
        $region26: #{tpu_custom_call.1} parent=11 // pred_check_branch
          %232 = sbr.rel (%p230) target = $region28
        $region27: #{tpu_custom_call.1} parent=11 // pred_region
          %s234 = ssub.s32 48, 48
          %235 = vsyncadd [#allocation9], %s234
          %s237 = sshll.u32 [#allocation10], 4
          %s238 = int_to_ptr.vmem [resolvable:$true] %s237
          %240 = dma.hbm_to_vmem [thread:$0]  %s4, 48, %s238, [#allocation9]
        $region28: #{tpu_custom_call.1} parent=11 // pred_fallthru
          _
        // Predicated region
        $region29: #{tpu_custom_call.1} parent=11 // pred_check
          %p241 = pneg %p152
        $region30: #{tpu_custom_call.1} parent=11 // pred_check_branch
          %243 = sbr.rel (%p241) target = $region32
        $region31: #{tpu_custom_call.1} parent=11 // pred_region
          %s245 = ssub.s32 2048, 2048
          %246 = vsyncadd [#allocation12], %s245
          %s247 = sshll.u32 [#allocation11], 4
          %s248 = int_to_ptr.vmem [resolvable:$true] %s247
          %253 = dma.hbm_to_vmem [thread:$0]  %s5, 2048, %s248, [#allocation12], 128, 128, 8
        $region32: #{tpu_custom_call.1} parent=11 // pred_fallthru
          _
      $region12: #{tpu_custom_call.1} parent=5 // pred_fallthru
        _
      %p254 = scmp.lt.s32.totalorder %s21, 2
      // Predicated region
      $region33: #{tpu_custom_call.1} parent=5 // pred_check
        %p255 = pneg %p254
      $region34: #{tpu_custom_call.1} parent=5 // pred_check_branch
        %257 = sbr.rel (%p255) target = $region36
      $region35: #{tpu_custom_call.1} parent=5 // pred_region
        // Predicated region
        $region37: #{tpu_custom_call.1} parent=35 // pred_check
          %p258 = pneg %p41
        $region38: #{tpu_custom_call.1} parent=35 // pred_check_branch
          %260 = sbr.rel (%p258) target = $region40
        $region39: #{tpu_custom_call.1} parent=35 // pred_region
          %s261 = sand.u32 %s31, 1
          %s262 = scalar_lea.sflag [#allocation3], %s261
          %s263 = sand.u32 %s31, 1
          %s264 = smul.addr %s263, 32
          %s265 = scalar_lea.vmem [#allocation2], %s264
          %s266 = smul.u32 4, %s21
          %s268 = ssub.s32 512, 512
          %269 = vsyncadd %s262, %s268
          %s270 = smul.addr %s266, 128
          %s271 = scalar_lea.hbm %s0, %s270
          %s272 = sshll.u32 %s265, 4
          %s273 = int_to_ptr.vmem [resolvable:$true] %s272
          %278 = dma.hbm_to_vmem [thread:$0]  %s271, 512, %s273, %s262, 128, 128, 8
        $region40: #{tpu_custom_call.1} parent=35 // pred_fallthru
          _
      $region36: #{tpu_custom_call.1} parent=5 // pred_fallthru
        _
      %p279 = scmp.le.s32.totalorder 1, %s21
      %p280 = scmp.lt.s32.totalorder %s21, 3
      %p281 = pnand %p279, %p280
      %p282 = pneg %p281
      // Predicated region
      $region41: #{tpu_custom_call.1} parent=5 // pred_check
        _
      $region42: #{tpu_custom_call.1} parent=5 // pred_check_branch
        %284 = sbr.rel (%p281) target = $region44
      $region43: #{tpu_custom_call.1} parent=5 // pred_region
        %s285 = ssub.s32 %s21, 1
        %s286 = sand.u32 %s34, 1
        %s287 = scalar_lea.sflag [#allocation3], %s286
        %s288 = sand.u32 %s34, 1
        %s289 = smul.addr %s288, 32
        %s290 = scalar_lea.vmem [#allocation2], %s289
        // Predicated region
        $region45: #{tpu_custom_call.1} parent=43 // pred_check
          %p291 = pneg %p47
        $region46: #{tpu_custom_call.1} parent=43 // pred_check_branch
          %293 = sbr.rel (%p291) target = $region48
        $region47: #{tpu_custom_call.1} parent=43 // pred_region
          %294 = dma.done %s287, 512
        $region48: #{tpu_custom_call.1} parent=43 // pred_fallthru
          _
        // Predicated region
        $region49: #{tpu_custom_call.1} parent=43 // pred_check
          %p295 = pneg %p68
        $region50: #{tpu_custom_call.1} parent=43 // pred_check_branch
          %297 = sbr.rel (%p295) target = $region52
        $region51: #{tpu_custom_call.1} parent=43 // pred_region
          %298 = dma.done [#allocation6], 1536
        $region52: #{tpu_custom_call.1} parent=43 // pred_fallthru
          _
        // Predicated region
        $region53: #{tpu_custom_call.1} parent=43 // pred_check
          %p299 = pneg %p89
        $region54: #{tpu_custom_call.1} parent=43 // pred_check_branch
          %301 = sbr.rel (%p299) target = $region56
        $region55: #{tpu_custom_call.1} parent=43 // pred_region
          %302 = dma.done [#allocation6], 64
        $region56: #{tpu_custom_call.1} parent=43 // pred_fallthru
          _
        // Predicated region
        $region57: #{tpu_custom_call.1} parent=43 // pred_check
          %p303 = pneg %p110
        $region58: #{tpu_custom_call.1} parent=43 // pred_check_branch
          %305 = sbr.rel (%p303) target = $region60
        $region59: #{tpu_custom_call.1} parent=43 // pred_region
          %306 = dma.done [#allocation9], 12288
        $region60: #{tpu_custom_call.1} parent=43 // pred_fallthru
          _
        // Predicated region
        $region61: #{tpu_custom_call.1} parent=43 // pred_check
          %p307 = pneg %p131
        $region62: #{tpu_custom_call.1} parent=43 // pred_check_branch
          %309 = sbr.rel (%p307) target = $region64
        $region63: #{tpu_custom_call.1} parent=43 // pred_region
          %310 = dma.done [#allocation9], 48
        $region64: #{tpu_custom_call.1} parent=43 // pred_fallthru
          _
        // Predicated region
        $region65: #{tpu_custom_call.1} parent=43 // pred_check
          %p311 = pneg %p152
        $region66: #{tpu_custom_call.1} parent=43 // pred_check_branch
          %313 = sbr.rel (%p311) target = $region68
        $region67: #{tpu_custom_call.1} parent=43 // pred_region
          %314 = dma.done [#allocation12], 2048
        $region68: #{tpu_custom_call.1} parent=43 // pred_fallthru
          _
        %s315 = sand.u32 %s34, 1
        %s316 = scalar_lea.sflag [#allocation3], %s315
        %s317 = sand.u32 %s34, 1
        %s318 = smul.addr %s317, 32
        %s319 = scalar_lea.vmem [#allocation2], %s318
        %p320 = pneg %p47
        %p321 = pneg %p44
        %p322 = pneg %p68
        %p323 = pneg %p65
        %p324 = pneg %p89
        %p325 = pneg %p86
        %p326 = pneg %p110
        %p327 = pneg %p107
        %p328 = pneg %p131
        %p329 = pneg %p128
        %p330 = pneg %p152
        %p331 = pneg %p149
        %p332 = pneg %p178
        %p333 = pneg %p175
        %s334 = sand.u32 %s165, 1
        %s335 = scalar_lea.sflag [#allocation4], %s334
        %s336 = sand.u32 %s165, 1
        %s337 = smul.addr %s336, 32
        %s338 = scalar_lea.vmem [#allocation13], %s337
        %s339 = smul.u32 4, %s26
        %s340 = smul.u32 4, %s26
        %v341 = vld [vmem:[%s290] sm:$0xff]
        %v342 = vld [vmem:[%s290 + $0x8] sm:$0xff]
        %v343 = vld [vmem:[%s290 + $0x10] sm:$0xff]
        %v344 = vld [vmem:[%s290 + $0x18] sm:$0xff]
        %v345 = vld [vmem:[#allocation5] sm:$0xff]
        %v346 = vld [vmem:[#allocation5 + $0x8] sm:$0xff]
        %v347 = vld [vmem:[#allocation5 + $0x10] sm:$0xff]
        %v348 = vld [vmem:[#allocation5 + $0x18] sm:$0xff]
        %v349 = vld [vmem:[#allocation5 + $0x20] sm:$0xff]
        %v350 = vld [vmem:[#allocation5 + $0x28] sm:$0xff]
        %v351 = vld [vmem:[#allocation5 + $0x30] sm:$0xff]
        %v352 = vld [vmem:[#allocation5 + $0x38] sm:$0xff]
        %v353 = vld [vmem:[#allocation5 + $0x40] sm:$0xff]
        %v354 = vld [vmem:[#allocation5 + $0x48] sm:$0xff]
        %v355 = vld [vmem:[#allocation5 + $0x50] sm:$0xff]
        %v356 = vld [vmem:[#allocation5 + $0x58] sm:$0xff]
        %v357 = vld [vmem:[#allocation7] sm:$0xf]
        %v359 = vlaneseq
        %v360 = vshrl.u32 %v359, 7
        %v361 = vsub.s32 0, %v360
        %v362 = vrot.slane %v357, %v361
        %v363 = vlaneseq
        %v364 = vshrl.u32 %v363, 7
        %v365 = vsub.s32 1, %v364
        %v366 = vrot.slane %v357, %v365
        %v367 = vlaneseq
        %v368 = vshrl.u32 %v367, 7
        %v369 = vsub.s32 2, %v368
        %v370 = vrot.slane %v357, %v369
        %v371 = vlaneseq
        %v372 = vshrl.u32 %v371, 7
        %v373 = vsub.s32 3, %v372
        %v374 = vrot.slane %v357, %v373
        %vm379 = vcmask 195584
        %v381 = vsel %vm379, %v341, 0
        %v384 = vsel %vm379, %v342, 0
        %v387 = vsel %vm379, %v343, 0
        %v390 = vsel %vm379, %v344, 0
        %v392 = vand.u32 %v346, 4294901760
        %393 = vmatprep.subr.mxu0 %v392
        %v394 = vand.u32 %v345, 4294901760
        %395 = vmatpush1.msra.mxu0 %v394
        %v396 = vand.u32 %v350, 4294901760
        %397 = vmatprep.subr.mxu0 %v396
        %v398 = vand.u32 %v349, 4294901760
        %399 = vmatpush1.msra.mxu0 %v398
        %v400 = vand.u32 %v354, 4294901760
        %401 = vmatprep.subr.mxu0 %v400
        %v402 = vand.u32 %v353, 4294901760
        %403 = vmatpush1.msra.mxu0 %v402
        %404 = vmatprep.subr.mxu0 0.0
        %405 = vmatpush1.msra.mxu0 0.0
        %406 = vmatprep.subr.mxu0 0.0
        %407 = vmatpush1.msra.mxu0 0.0
        %408 = vmatprep.subr.mxu0 0.0
        %409 = vmatpush1.msra.mxu0 0.0
        %410 = vmatprep.subr.mxu0 0.0
        %411 = vmatpush1.msra.mxu0 0.0
        %412 = vmatprep.subr.mxu0 0.0
        %413 = vmatpush1.msra.mxu0 0.0
        %414 = vmatprep.subr.mxu0 0.0
        %415 = vmatpush1.msra.mxu0 0.0
        %416 = vmatprep.subr.mxu0 0.0
        %417 = vmatpush1.msra.mxu0 0.0
        %418 = vmatprep.subr.mxu0 0.0
        %419 = vmatpush1.msra.mxu0 0.0
        %420 = vmatprep.subr.mxu0 0.0
        %421 = vmatpush1.msra.mxu0 0.0
        %422 = vmatprep.subr.mxu0 0.0
        %423 = vmatpush1.msra.mxu0 0.0
        %424 = vmatprep.subr.mxu0 0.0
        %425 = vmatpush1.msra.mxu0 0.0
        %426 = vmatprep.subr.mxu0 0.0
        %427 = vmatpush1.msra.mxu0 0.0
        %428 = vmatprep.subr.mxu0 0.0
        %429 = vmatpush1.msra.mxu0 0.0
        %430 = vmatprep.subr.mxu0 0.0
        %431 = vmatpush1.msra.mxu0 0.0
        %432 = vmatprep.subr.mxu0 0.0
        %433 = vmatpush1.msra.mxu0 0.0
        %434 = vmatprep.subr.mxu0 0.0
        %435 = vmatpush1.msra.mxu0 0.0
        %436 = vmatprep.subr.mxu0 0.0
        %437 = vmatpush1.msra.mxu0 0.0
        %438 = vmatprep.subr.mxu0 0.0
        %439 = vmatpush1.msra.mxu0 0.0
        %440 = vmatprep.subr.mxu0 0.0
        %441 = vmatpush1.msra.mxu0 0.0
        %442 = vmatprep.subr.mxu0 0.0
        %443 = vmatpush1.msra.mxu0 0.0
        %444 = vmatprep.subr.mxu0 0.0
        %445 = vmatpush1.msra.mxu0 0.0
        %446 = vmatprep.subr.mxu0 0.0
        %447 = vmatpush1.msra.mxu0 0.0
        %448 = vmatprep.subr.mxu0 0.0
        %449 = vmatpush1.msra.mxu0 0.0
        %450 = vmatprep.subr.mxu0 0.0
        %451 = vmatpush1.msra.mxu0 0.0
        %452 = vmatprep.subr.mxu0 0.0
        %453 = vmatpush1.msra.mxu0 0.0
        %454 = vmatprep.subr.mxu0 0.0
        %455 = vmatpush1.msra.mxu0 0.0
        %456 = vmatprep.subr.mxu0 0.0
        %457 = vmatpush1.msra.mxu0 0.0
        %458 = vmatprep.subr.mxu0 0.0
        %459 = vmatpush1.msra.mxu0 0.0
        %460 = vmatprep.subr.mxu0 0.0
        %461 = vmatpush1.msra.mxu0 0.0
        %462 = vmatprep.mubr.f32.mxu0 0.0
        %v463 = vand.u32 %v381, 4294901760
        %v464 = vsub.f32 %v381, %v463
        %v465 = vand.u32 %v464, 4294901760
        %v466 = vsub.f32 %v464, %v465
        %v467 = vand.u32 %v466, 4294901760
        %468 = vmatmul.mubr.f32.gmra.mrb[0].mxu0 %v467
        %v469 = vpop.f32.mrb[0].mxu0
        %v470 = vadd.f32 %v362, %v469
        %v471 = vpop.f32.mrb[0].mxu0
        %v472 = vadd.f32 %v366, %v471
        %473 = vmatprep.mubr.f32.mxu0 0.0
        %v474 = vand.u32 %v384, 4294901760
        %v475 = vsub.f32 %v384, %v474
        %v476 = vand.u32 %v475, 4294901760
        %v477 = vsub.f32 %v475, %v476
        %v478 = vand.u32 %v477, 4294901760
        %479 = vmatmul.mubr.f32.gmra.mrb[0].mxu0 %v478
        %v480 = vpop.f32.mrb[0].mxu0
        %v481 = vadd.f32 %v362, %v480
        %v482 = vpop.f32.mrb[0].mxu0
        %v483 = vadd.f32 %v366, %v482
        %484 = vmatprep.mubr.f32.mxu0 0.0
        %v485 = vand.u32 %v387, 4294901760
        %v486 = vsub.f32 %v387, %v485
        %v487 = vand.u32 %v486, 4294901760
        %v488 = vsub.f32 %v486, %v487
        %v489 = vand.u32 %v488, 4294901760
        %490 = vmatmul.mubr.f32.gmra.mrb[0].mxu0 %v489
        %v491 = vpop.f32.mrb[0].mxu0
        %v492 = vadd.f32 %v362, %v491
        %v493 = vpop.f32.mrb[0].mxu0
        %v494 = vadd.f32 %v366, %v493
        %495 = vmatprep.mubr.f32.mxu0 0.0
        %v496 = vand.u32 %v390, 4294901760
        %v497 = vsub.f32 %v390, %v496
        %v498 = vand.u32 %v497, 4294901760
        %v499 = vsub.f32 %v497, %v498
        %v500 = vand.u32 %v499, 4294901760
        %501 = vmatmul.mubr.f32.gmra.mrb[0].mxu0 %v500
        %v502 = vpop.f32.mrb[0].mxu0
        %v503 = vadd.f32 %v362, %v502
        %v504 = vpop.f32.mrb[0].mxu0
        %v505 = vadd.f32 %v366, %v504
        %506 = vdwg.mxu0
        %v507 = vand.u32 %v346, 4294901760
        %v508 = vsub.f32 %v346, %v507
        %v509 = vand.u32 %v508, 4294901760
        %v510 = vsub.f32 %v508, %v509
        %v511 = vand.u32 %v510, 4294901760
        %512 = vmatprep.subr.mxu0 %v511
        %v513 = vand.u32 %v345, 4294901760
        %v514 = vsub.f32 %v345, %v513
        %v515 = vand.u32 %v514, 4294901760
        %v516 = vsub.f32 %v514, %v515
        %v517 = vand.u32 %v516, 4294901760
        %518 = vmatpush1.msra.mxu0 %v517
        %v519 = vand.u32 %v350, 4294901760
        %v520 = vsub.f32 %v350, %v519
        %v521 = vand.u32 %v520, 4294901760
        %v522 = vsub.f32 %v520, %v521
        %v523 = vand.u32 %v522, 4294901760
        %524 = vmatprep.subr.mxu0 %v523
        %v525 = vand.u32 %v349, 4294901760
        %v526 = vsub.f32 %v349, %v525
        %v527 = vand.u32 %v526, 4294901760
        %v528 = vsub.f32 %v526, %v527
        %v529 = vand.u32 %v528, 4294901760
        %530 = vmatpush1.msra.mxu0 %v529
        %v531 = vand.u32 %v354, 4294901760
        %v532 = vsub.f32 %v354, %v531
        %v533 = vand.u32 %v532, 4294901760
        %v534 = vsub.f32 %v532, %v533
        %v535 = vand.u32 %v534, 4294901760
        %536 = vmatprep.subr.mxu0 %v535
        %v537 = vand.u32 %v353, 4294901760
        %v538 = vsub.f32 %v353, %v537
        %v539 = vand.u32 %v538, 4294901760
        %v540 = vsub.f32 %v538, %v539
        %v541 = vand.u32 %v540, 4294901760
        %542 = vmatpush1.msra.mxu0 %v541
        %543 = vmatprep.subr.mxu0 0.0
        %544 = vmatpush1.msra.mxu0 0.0
        %545 = vmatprep.subr.mxu0 0.0
        %546 = vmatpush1.msra.mxu0 0.0
        %547 = vmatprep.subr.mxu0 0.0
        %548 = vmatpush1.msra.mxu0 0.0
        %549 = vmatprep.subr.mxu0 0.0
        %550 = vmatpush1.msra.mxu0 0.0
        %551 = vmatprep.subr.mxu0 0.0
        %552 = vmatpush1.msra.mxu0 0.0
        %553 = vmatprep.subr.mxu0 0.0
        %554 = vmatpush1.msra.mxu0 0.0
        %555 = vmatprep.subr.mxu0 0.0
        %556 = vmatpush1.msra.mxu0 0.0
        %557 = vmatprep.subr.mxu0 0.0
        %558 = vmatpush1.msra.mxu0 0.0
        %559 = vmatprep.subr.mxu0 0.0
        %560 = vmatpush1.msra.mxu0 0.0
        %561 = vmatprep.subr.mxu0 0.0
        %562 = vmatpush1.msra.mxu0 0.0
        %563 = vmatprep.subr.mxu0 0.0
        %564 = vmatpush1.msra.mxu0 0.0
        %565 = vmatprep.subr.mxu0 0.0
        %566 = vmatpush1.msra.mxu0 0.0
        %567 = vmatprep.subr.mxu0 0.0
        %568 = vmatpush1.msra.mxu0 0.0
        %569 = vmatprep.subr.mxu0 0.0
        %570 = vmatpush1.msra.mxu0 0.0
        %571 = vmatprep.subr.mxu0 0.0
        %572 = vmatpush1.msra.mxu0 0.0
        %573 = vmatprep.subr.mxu0 0.0
        %574 = vmatpush1.msra.mxu0 0.0
        %575 = vmatprep.subr.mxu0 0.0
        %576 = vmatpush1.msra.mxu0 0.0
        %577 = vmatprep.subr.mxu0 0.0
        %578 = vmatpush1.msra.mxu0 0.0
        %579 = vmatprep.subr.mxu0 0.0
        %580 = vmatpush1.msra.mxu0 0.0
        %581 = vmatprep.subr.mxu0 0.0
        %582 = vmatpush1.msra.mxu0 0.0
        %583 = vmatprep.subr.mxu0 0.0
        %584 = vmatpush1.msra.mxu0 0.0
        %585 = vmatprep.subr.mxu0 0.0
        %586 = vmatpush1.msra.mxu0 0.0
        %587 = vmatprep.subr.mxu0 0.0
        %588 = vmatpush1.msra.mxu0 0.0
        %589 = vmatprep.subr.mxu0 0.0
        %590 = vmatpush1.msra.mxu0 0.0
        %591 = vmatprep.subr.mxu0 0.0
        %592 = vmatpush1.msra.mxu0 0.0
        %593 = vmatprep.subr.mxu0 0.0
        %594 = vmatpush1.msra.mxu0 0.0
        %595 = vmatprep.subr.mxu0 0.0
        %596 = vmatpush1.msra.mxu0 0.0
        %597 = vmatprep.subr.mxu0 0.0
        %598 = vmatpush1.msra.mxu0 0.0
        %599 = vmatprep.subr.mxu0 0.0
        %600 = vmatpush1.msra.mxu0 0.0
        %601 = vmatprep.mubr.f32.mxu0 0.0
        %v602 = vand.u32 %v381, 4294901760
        %603 = vmatmul.mubr.f32.gmra.mrb[0].mxu0 %v602
        %v604 = vpop.f32.mrb[0].mxu0
        %v605 = vadd.f32 %v470, %v604
        %v606 = vpop.f32.mrb[0].mxu0
        %v607 = vadd.f32 %v472, %v606
        %608 = vmatprep.mubr.f32.mxu0 0.0
        %v609 = vand.u32 %v384, 4294901760
        %610 = vmatmul.mubr.f32.gmra.mrb[0].mxu0 %v609
        %v611 = vpop.f32.mrb[0].mxu0
        %v612 = vadd.f32 %v481, %v611
        %v613 = vpop.f32.mrb[0].mxu0
        %v614 = vadd.f32 %v483, %v613
        %615 = vmatprep.mubr.f32.mxu0 0.0
        %v616 = vand.u32 %v387, 4294901760
        %617 = vmatmul.mubr.f32.gmra.mrb[0].mxu0 %v616
        %v618 = vpop.f32.mrb[0].mxu0
        %v619 = vadd.f32 %v492, %v618
        %v620 = vpop.f32.mrb[0].mxu0
        %v621 = vadd.f32 %v494, %v620
        %622 = vmatprep.mubr.f32.mxu0 0.0
        %v623 = vand.u32 %v390, 4294901760
        %624 = vmatmul.mubr.f32.gmra.mrb[0].mxu0 %v623
        %v625 = vpop.f32.mrb[0].mxu0
        %v626 = vadd.f32 %v503, %v625
        %v627 = vpop.f32.mrb[0].mxu0
        %v628 = vadd.f32 %v505, %v627
        %629 = vdwg.mxu0
        %v630 = vand.u32 %v346, 4294901760
        %v631 = vsub.f32 %v346, %v630
        %632 = vmatprep.subr.mxu0 %v631
        %v633 = vand.u32 %v345, 4294901760
        %v634 = vsub.f32 %v345, %v633
        %635 = vmatpush1.msra.mxu0 %v634
        %v636 = vand.u32 %v350, 4294901760
        %v637 = vsub.f32 %v350, %v636
        %638 = vmatprep.subr.mxu0 %v637
        %v639 = vand.u32 %v349, 4294901760
        %v640 = vsub.f32 %v349, %v639
        %641 = vmatpush1.msra.mxu0 %v640
        %v642 = vand.u32 %v354, 4294901760
        %v643 = vsub.f32 %v354, %v642
        %644 = vmatprep.subr.mxu0 %v643
        %v645 = vand.u32 %v353, 4294901760
        %v646 = vsub.f32 %v353, %v645
        %647 = vmatpush1.msra.mxu0 %v646
        %648 = vmatprep.subr.mxu0 0.0
        %649 = vmatpush1.msra.mxu0 0.0
        %650 = vmatprep.subr.mxu0 0.0
        %651 = vmatpush1.msra.mxu0 0.0
        %652 = vmatprep.subr.mxu0 0.0
        %653 = vmatpush1.msra.mxu0 0.0
        %654 = vmatprep.subr.mxu0 0.0
        %655 = vmatpush1.msra.mxu0 0.0
        %656 = vmatprep.subr.mxu0 0.0
        %657 = vmatpush1.msra.mxu0 0.0
        %658 = vmatprep.subr.mxu0 0.0
        %659 = vmatpush1.msra.mxu0 0.0
        %660 = vmatprep.subr.mxu0 0.0
        %661 = vmatpush1.msra.mxu0 0.0
        %662 = vmatprep.subr.mxu0 0.0
        %663 = vmatpush1.msra.mxu0 0.0
        %664 = vmatprep.subr.mxu0 0.0
        %665 = vmatpush1.msra.mxu0 0.0
        %666 = vmatprep.subr.mxu0 0.0
        %667 = vmatpush1.msra.mxu0 0.0
        %668 = vmatprep.subr.mxu0 0.0
        %669 = vmatpush1.msra.mxu0 0.0
        %670 = vmatprep.subr.mxu0 0.0
        %671 = vmatpush1.msra.mxu0 0.0
        %672 = vmatprep.subr.mxu0 0.0
        %673 = vmatpush1.msra.mxu0 0.0
        %674 = vmatprep.subr.mxu0 0.0
        %675 = vmatpush1.msra.mxu0 0.0
        %676 = vmatprep.subr.mxu0 0.0
        %677 = vmatpush1.msra.mxu0 0.0
        %678 = vmatprep.subr.mxu0 0.0
        %679 = vmatpush1.msra.mxu0 0.0
        %680 = vmatprep.subr.mxu0 0.0
        %681 = vmatpush1.msra.mxu0 0.0
        %682 = vmatprep.subr.mxu0 0.0
        %683 = vmatpush1.msra.mxu0 0.0
        %684 = vmatprep.subr.mxu0 0.0
        %685 = vmatpush1.msra.mxu0 0.0
        %686 = vmatprep.subr.mxu0 0.0
        %687 = vmatpush1.msra.mxu0 0.0
        %688 = vmatprep.subr.mxu0 0.0
        %689 = vmatpush1.msra.mxu0 0.0
        %690 = vmatprep.subr.mxu0 0.0
        %691 = vmatpush1.msra.mxu0 0.0
        %692 = vmatprep.subr.mxu0 0.0
        %693 = vmatpush1.msra.mxu0 0.0
        %694 = vmatprep.subr.mxu0 0.0
        %695 = vmatpush1.msra.mxu0 0.0
        %696 = vmatprep.subr.mxu0 0.0
        %697 = vmatpush1.msra.mxu0 0.0
        %698 = vmatprep.subr.mxu0 0.0
        %699 = vmatpush1.msra.mxu0 0.0
        %700 = vmatprep.subr.mxu0 0.0
        %701 = vmatpush1.msra.mxu0 0.0
        %702 = vmatprep.subr.mxu0 0.0
        %703 = vmatpush1.msra.mxu0 0.0
        %704 = vmatprep.subr.mxu0 0.0
        %705 = vmatpush1.msra.mxu0 0.0
        %706 = vmatprep.mubr.f32.mxu0 0.0
        %v707 = vand.u32 %v381, 4294901760
        %v708 = vsub.f32 %v381, %v707
        %709 = vmatmul.mubr.f32.gmra.mrb[0].mxu0 %v708
        %v710 = vpop.f32.mrb[0].mxu0
        %v711 = vadd.f32 %v605, %v710
        %v712 = vpop.f32.mrb[0].mxu0
        %v713 = vadd.f32 %v607, %v712
        %714 = vmatprep.mubr.f32.mxu0 0.0
        %v715 = vand.u32 %v384, 4294901760
        %v716 = vsub.f32 %v384, %v715
        %717 = vmatmul.mubr.f32.gmra.mrb[0].mxu0 %v716
        %v718 = vpop.f32.mrb[0].mxu0
        %v719 = vadd.f32 %v612, %v718
        %v720 = vpop.f32.mrb[0].mxu0
        %v721 = vadd.f32 %v614, %v720
        %722 = vmatprep.mubr.f32.mxu0 0.0
        %v723 = vand.u32 %v387, 4294901760
        %v724 = vsub.f32 %v387, %v723
        %725 = vmatmul.mubr.f32.gmra.mrb[0].mxu0 %v724
        %v726 = vpop.f32.mrb[0].mxu0
        %v727 = vadd.f32 %v619, %v726
        %v728 = vpop.f32.mrb[0].mxu0
        %v729 = vadd.f32 %v621, %v728
        %730 = vmatprep.mubr.f32.mxu0 0.0
        %v731 = vand.u32 %v390, 4294901760
        %v732 = vsub.f32 %v390, %v731
        %733 = vmatmul.mubr.f32.gmra.mrb[0].mxu0 %v732
        %v734 = vpop.f32.mrb[0].mxu0
        %v735 = vadd.f32 %v626, %v734
        %v736 = vpop.f32.mrb[0].mxu0
        %v737 = vadd.f32 %v628, %v736
        %738 = vdwg.mxu0
        %v739 = vand.u32 %v346, 4294901760
        %740 = vmatprep.subr.mxu0 %v739
        %v741 = vand.u32 %v345, 4294901760
        %742 = vmatpush1.msra.mxu0 %v741
        %v743 = vand.u32 %v350, 4294901760
        %744 = vmatprep.subr.mxu0 %v743
        %v745 = vand.u32 %v349, 4294901760
        %746 = vmatpush1.msra.mxu0 %v745
        %v747 = vand.u32 %v354, 4294901760
        %748 = vmatprep.subr.mxu0 %v747
        %v749 = vand.u32 %v353, 4294901760
        %750 = vmatpush1.msra.mxu0 %v749
        %751 = vmatprep.subr.mxu0 0.0
        %752 = vmatpush1.msra.mxu0 0.0
        %753 = vmatprep.subr.mxu0 0.0
        %754 = vmatpush1.msra.mxu0 0.0
        %755 = vmatprep.subr.mxu0 0.0
        %756 = vmatpush1.msra.mxu0 0.0
        %757 = vmatprep.subr.mxu0 0.0
        %758 = vmatpush1.msra.mxu0 0.0
        %759 = vmatprep.subr.mxu0 0.0
        %760 = vmatpush1.msra.mxu0 0.0
        %761 = vmatprep.subr.mxu0 0.0
        %762 = vmatpush1.msra.mxu0 0.0
        %763 = vmatprep.subr.mxu0 0.0
        %764 = vmatpush1.msra.mxu0 0.0
        %765 = vmatprep.subr.mxu0 0.0
        %766 = vmatpush1.msra.mxu0 0.0
        %767 = vmatprep.subr.mxu0 0.0
        %768 = vmatpush1.msra.mxu0 0.0
        %769 = vmatprep.subr.mxu0 0.0
        %770 = vmatpush1.msra.mxu0 0.0
        %771 = vmatprep.subr.mxu0 0.0
        %772 = vmatpush1.msra.mxu0 0.0
        %773 = vmatprep.subr.mxu0 0.0
        %774 = vmatpush1.msra.mxu0 0.0
        %775 = vmatprep.subr.mxu0 0.0
        %776 = vmatpush1.msra.mxu0 0.0
        %777 = vmatprep.subr.mxu0 0.0
        %778 = vmatpush1.msra.mxu0 0.0
        %779 = vmatprep.subr.mxu0 0.0
        %780 = vmatpush1.msra.mxu0 0.0
        %781 = vmatprep.subr.mxu0 0.0
        %782 = vmatpush1.msra.mxu0 0.0
        %783 = vmatprep.subr.mxu0 0.0
        %784 = vmatpush1.msra.mxu0 0.0
        %785 = vmatprep.subr.mxu0 0.0
        %786 = vmatpush1.msra.mxu0 0.0
        %787 = vmatprep.subr.mxu0 0.0
        %788 = vmatpush1.msra.mxu0 0.0
        %789 = vmatprep.subr.mxu0 0.0
        %790 = vmatpush1.msra.mxu0 0.0
        %791 = vmatprep.subr.mxu0 0.0
        %792 = vmatpush1.msra.mxu0 0.0
        %793 = vmatprep.subr.mxu0 0.0
        %794 = vmatpush1.msra.mxu0 0.0
        %795 = vmatprep.subr.mxu0 0.0
        %796 = vmatpush1.msra.mxu0 0.0
        %797 = vmatprep.subr.mxu0 0.0
        %798 = vmatpush1.msra.mxu0 0.0
        %799 = vmatprep.subr.mxu0 0.0
        %800 = vmatpush1.msra.mxu0 0.0
        %801 = vmatprep.subr.mxu0 0.0
        %802 = vmatpush1.msra.mxu0 0.0
        %803 = vmatprep.subr.mxu0 0.0
        %804 = vmatpush1.msra.mxu0 0.0
        %805 = vmatprep.subr.mxu0 0.0
        %806 = vmatpush1.msra.mxu0 0.0
        %807 = vmatprep.subr.mxu0 0.0
        %808 = vmatpush1.msra.mxu0 0.0
        %809 = vmatprep.mubr.f32.mxu0 0.0
        %v810 = vand.u32 %v381, 4294901760
        %v811 = vsub.f32 %v381, %v810
        %v812 = vand.u32 %v811, 4294901760
        %813 = vmatmul.mubr.f32.gmra.mrb[0].mxu0 %v812
        %v814 = vpop.f32.mrb[0].mxu0
        %v815 = vadd.f32 %v711, %v814
        %v816 = vpop.f32.mrb[0].mxu0
        %v817 = vadd.f32 %v713, %v816
        %818 = vmatprep.mubr.f32.mxu0 0.0
        %v819 = vand.u32 %v384, 4294901760
        %v820 = vsub.f32 %v384, %v819
        %v821 = vand.u32 %v820, 4294901760
        %822 = vmatmul.mubr.f32.gmra.mrb[0].mxu0 %v821
        %v823 = vpop.f32.mrb[0].mxu0
        %v824 = vadd.f32 %v719, %v823
        %v825 = vpop.f32.mrb[0].mxu0
        %v826 = vadd.f32 %v721, %v825
        %827 = vmatprep.mubr.f32.mxu0 0.0
        %v828 = vand.u32 %v387, 4294901760
        %v829 = vsub.f32 %v387, %v828
        %v830 = vand.u32 %v829, 4294901760
        %831 = vmatmul.mubr.f32.gmra.mrb[0].mxu0 %v830
        %v832 = vpop.f32.mrb[0].mxu0
        %v833 = vadd.f32 %v727, %v832
        %v834 = vpop.f32.mrb[0].mxu0
        %v835 = vadd.f32 %v729, %v834
        %836 = vmatprep.mubr.f32.mxu0 0.0
        %v837 = vand.u32 %v390, 4294901760
        %v838 = vsub.f32 %v390, %v837
        %v839 = vand.u32 %v838, 4294901760
        %840 = vmatmul.mubr.f32.gmra.mrb[0].mxu0 %v839
        %v841 = vpop.f32.mrb[0].mxu0
        %v842 = vadd.f32 %v735, %v841
        %v843 = vpop.f32.mrb[0].mxu0
        %v844 = vadd.f32 %v737, %v843
        %845 = vdwg.mxu0
        %v846 = vand.u32 %v346, 4294901760
        %v847 = vsub.f32 %v346, %v846
        %v848 = vand.u32 %v847, 4294901760
        %849 = vmatprep.subr.mxu0 %v848
        %v850 = vand.u32 %v345, 4294901760
        %v851 = vsub.f32 %v345, %v850
        %v852 = vand.u32 %v851, 4294901760
        %853 = vmatpush1.msra.mxu0 %v852
        %v854 = vand.u32 %v350, 4294901760
        %v855 = vsub.f32 %v350, %v854
        %v856 = vand.u32 %v855, 4294901760
        %857 = vmatprep.subr.mxu0 %v856
        %v858 = vand.u32 %v349, 4294901760
        %v859 = vsub.f32 %v349, %v858
        %v860 = vand.u32 %v859, 4294901760
        %861 = vmatpush1.msra.mxu0 %v860
        %v862 = vand.u32 %v354, 4294901760
        %v863 = vsub.f32 %v354, %v862
        %v864 = vand.u32 %v863, 4294901760
        %865 = vmatprep.subr.mxu0 %v864
        %v866 = vand.u32 %v353, 4294901760
        %v867 = vsub.f32 %v353, %v866
        %v868 = vand.u32 %v867, 4294901760
        %869 = vmatpush1.msra.mxu0 %v868
        %870 = vmatprep.subr.mxu0 0.0
        %871 = vmatpush1.msra.mxu0 0.0
        %872 = vmatprep.subr.mxu0 0.0
        %873 = vmatpush1.msra.mxu0 0.0
        %874 = vmatprep.subr.mxu0 0.0
        %875 = vmatpush1.msra.mxu0 0.0
        %876 = vmatprep.subr.mxu0 0.0
        %877 = vmatpush1.msra.mxu0 0.0
        %878 = vmatprep.subr.mxu0 0.0
        %879 = vmatpush1.msra.mxu0 0.0
        %880 = vmatprep.subr.mxu0 0.0
        %881 = vmatpush1.msra.mxu0 0.0
        %882 = vmatprep.subr.mxu0 0.0
        %883 = vmatpush1.msra.mxu0 0.0
        %884 = vmatprep.subr.mxu0 0.0
        %885 = vmatpush1.msra.mxu0 0.0
        %886 = vmatprep.subr.mxu0 0.0
        %887 = vmatpush1.msra.mxu0 0.0
        %888 = vmatprep.subr.mxu0 0.0
        %889 = vmatpush1.msra.mxu0 0.0
        %890 = vmatprep.subr.mxu0 0.0
        %891 = vmatpush1.msra.mxu0 0.0
        %892 = vmatprep.subr.mxu0 0.0
        %893 = vmatpush1.msra.mxu0 0.0
        %894 = vmatprep.subr.mxu0 0.0
        %895 = vmatpush1.msra.mxu0 0.0
        %896 = vmatprep.subr.mxu0 0.0
        %897 = vmatpush1.msra.mxu0 0.0
        %898 = vmatprep.subr.mxu0 0.0
        %899 = vmatpush1.msra.mxu0 0.0
        %900 = vmatprep.subr.mxu0 0.0
        %901 = vmatpush1.msra.mxu0 0.0
        %902 = vmatprep.subr.mxu0 0.0
        %903 = vmatpush1.msra.mxu0 0.0
        %904 = vmatprep.subr.mxu0 0.0
        %905 = vmatpush1.msra.mxu0 0.0
        %906 = vmatprep.subr.mxu0 0.0
        %907 = vmatpush1.msra.mxu0 0.0
        %908 = vmatprep.subr.mxu0 0.0
        %909 = vmatpush1.msra.mxu0 0.0
        %910 = vmatprep.subr.mxu0 0.0
        %911 = vmatpush1.msra.mxu0 0.0
        %912 = vmatprep.subr.mxu0 0.0
        %913 = vmatpush1.msra.mxu0 0.0
        %914 = vmatprep.subr.mxu0 0.0
        %915 = vmatpush1.msra.mxu0 0.0
        %916 = vmatprep.subr.mxu0 0.0
        %917 = vmatpush1.msra.mxu0 0.0
        %918 = vmatprep.subr.mxu0 0.0
        %919 = vmatpush1.msra.mxu0 0.0
        %920 = vmatprep.subr.mxu0 0.0
        %921 = vmatpush1.msra.mxu0 0.0
        %922 = vmatprep.subr.mxu0 0.0
        %923 = vmatpush1.msra.mxu0 0.0
        %924 = vmatprep.subr.mxu0 0.0
        %925 = vmatpush1.msra.mxu0 0.0
        %926 = vmatprep.subr.mxu0 0.0
        %927 = vmatpush1.msra.mxu0 0.0
        %928 = vmatprep.mubr.f32.mxu0 0.0
        %v929 = vand.u32 %v381, 4294901760
        %930 = vmatmul.mubr.f32.gmra.mrb[0].mxu0 %v929
        %v931 = vpop.f32.mrb[0].mxu0
        %v932 = vadd.f32 %v815, %v931
        %v933 = vpop.f32.mrb[0].mxu0
        %v934 = vadd.f32 %v817, %v933
        %935 = vmatprep.mubr.f32.mxu0 0.0
        %v936 = vand.u32 %v384, 4294901760
        %937 = vmatmul.mubr.f32.gmra.mrb[0].mxu0 %v936
        %v938 = vpop.f32.mrb[0].mxu0
        %v939 = vadd.f32 %v824, %v938
        %v940 = vpop.f32.mrb[0].mxu0
        %v941 = vadd.f32 %v826, %v940
        %942 = vmatprep.mubr.f32.mxu0 0.0
        %v943 = vand.u32 %v387, 4294901760
        %944 = vmatmul.mubr.f32.gmra.mrb[0].mxu0 %v943
        %v945 = vpop.f32.mrb[0].mxu0
        %v946 = vadd.f32 %v833, %v945
        %v947 = vpop.f32.mrb[0].mxu0
        %v948 = vadd.f32 %v835, %v947
        %949 = vmatprep.mubr.f32.mxu0 0.0
        %v950 = vand.u32 %v390, 4294901760
        %951 = vmatmul.mubr.f32.gmra.mrb[0].mxu0 %v950
        %v952 = vpop.f32.mrb[0].mxu0
        %v953 = vadd.f32 %v842, %v952
        %v954 = vpop.f32.mrb[0].mxu0
        %v955 = vadd.f32 %v844, %v954
        %956 = vdwg.mxu0
        %v957 = vand.u32 %v346, 4294901760
        %958 = vmatprep.subr.mxu0 %v957
        %v959 = vand.u32 %v345, 4294901760
        %960 = vmatpush1.msra.mxu0 %v959
        %v961 = vand.u32 %v350, 4294901760
        %962 = vmatprep.subr.mxu0 %v961
        %v963 = vand.u32 %v349, 4294901760
        %964 = vmatpush1.msra.mxu0 %v963
        %v965 = vand.u32 %v354, 4294901760
        %966 = vmatprep.subr.mxu0 %v965
        %v967 = vand.u32 %v353, 4294901760
        %968 = vmatpush1.msra.mxu0 %v967
        %969 = vmatprep.subr.mxu0 0.0
        %970 = vmatpush1.msra.mxu0 0.0
        %971 = vmatprep.subr.mxu0 0.0
        %972 = vmatpush1.msra.mxu0 0.0
        %973 = vmatprep.subr.mxu0 0.0
        %974 = vmatpush1.msra.mxu0 0.0
        %975 = vmatprep.subr.mxu0 0.0
        %976 = vmatpush1.msra.mxu0 0.0
        %977 = vmatprep.subr.mxu0 0.0
        %978 = vmatpush1.msra.mxu0 0.0
        %979 = vmatprep.subr.mxu0 0.0
        %980 = vmatpush1.msra.mxu0 0.0
        %981 = vmatprep.subr.mxu0 0.0
        %982 = vmatpush1.msra.mxu0 0.0
        %983 = vmatprep.subr.mxu0 0.0
        %984 = vmatpush1.msra.mxu0 0.0
        %985 = vmatprep.subr.mxu0 0.0
        %986 = vmatpush1.msra.mxu0 0.0
        %987 = vmatprep.subr.mxu0 0.0
        %988 = vmatpush1.msra.mxu0 0.0
        %989 = vmatprep.subr.mxu0 0.0
        %990 = vmatpush1.msra.mxu0 0.0
        %991 = vmatprep.subr.mxu0 0.0
        %992 = vmatpush1.msra.mxu0 0.0
        %993 = vmatprep.subr.mxu0 0.0
        %994 = vmatpush1.msra.mxu0 0.0
        %995 = vmatprep.subr.mxu0 0.0
        %996 = vmatpush1.msra.mxu0 0.0
        %997 = vmatprep.subr.mxu0 0.0
        %998 = vmatpush1.msra.mxu0 0.0
        %999 = vmatprep.subr.mxu0 0.0
        %1000 = vmatpush1.msra.mxu0 0.0
        %1001 = vmatprep.subr.mxu0 0.0
        %1002 = vmatpush1.msra.mxu0 0.0
        %1003 = vmatprep.subr.mxu0 0.0
        %1004 = vmatpush1.msra.mxu0 0.0
        %1005 = vmatprep.subr.mxu0 0.0
        %1006 = vmatpush1.msra.mxu0 0.0
        %1007 = vmatprep.subr.mxu0 0.0
        %1008 = vmatpush1.msra.mxu0 0.0
        %1009 = vmatprep.subr.mxu0 0.0
        %1010 = vmatpush1.msra.mxu0 0.0
        %1011 = vmatprep.subr.mxu0 0.0
        %1012 = vmatpush1.msra.mxu0 0.0
        %1013 = vmatprep.subr.mxu0 0.0
        %1014 = vmatpush1.msra.mxu0 0.0
        %1015 = vmatprep.subr.mxu0 0.0
        %1016 = vmatpush1.msra.mxu0 0.0
        %1017 = vmatprep.subr.mxu0 0.0
        %1018 = vmatpush1.msra.mxu0 0.0
        %1019 = vmatprep.subr.mxu0 0.0
        %1020 = vmatpush1.msra.mxu0 0.0
        %1021 = vmatprep.subr.mxu0 0.0
        %1022 = vmatpush1.msra.mxu0 0.0
        %1023 = vmatprep.subr.mxu0 0.0
        %1024 = vmatpush1.msra.mxu0 0.0
        %1025 = vmatprep.subr.mxu0 0.0
        %1026 = vmatpush1.msra.mxu0 0.0
        %1027 = vmatprep.mubr.f32.mxu0 0.0
        %v1028 = vand.u32 %v381, 4294901760
        %1029 = vmatmul.mubr.f32.gmra.mrb[0].mxu0 %v1028
        %v1030 = vpop.f32.mrb[0].mxu0
        %v1031 = vadd.f32 %v932, %v1030
        %v1032 = vpop.f32.mrb[0].mxu0
        %v1033 = vadd.f32 %v934, %v1032
        %1034 = vmatprep.mubr.f32.mxu0 0.0
        %v1035 = vand.u32 %v384, 4294901760
        %1036 = vmatmul.mubr.f32.gmra.mrb[0].mxu0 %v1035
        %v1037 = vpop.f32.mrb[0].mxu0
        %v1038 = vadd.f32 %v939, %v1037
        %v1039 = vpop.f32.mrb[0].mxu0
        %v1040 = vadd.f32 %v941, %v1039
        %1041 = vmatprep.mubr.f32.mxu0 0.0
        %v1042 = vand.u32 %v387, 4294901760
        %1043 = vmatmul.mubr.f32.gmra.mrb[0].mxu0 %v1042
        %v1044 = vpop.f32.mrb[0].mxu0
        %v1045 = vadd.f32 %v946, %v1044
        %v1046 = vpop.f32.mrb[0].mxu0
        %v1047 = vadd.f32 %v948, %v1046
        %1048 = vmatprep.mubr.f32.mxu0 0.0
        %v1049 = vand.u32 %v390, 4294901760
        %1050 = vmatmul.mubr.f32.gmra.mrb[0].mxu0 %v1049
        %v1051 = vpop.f32.mrb[0].mxu0
        %v1052 = vadd.f32 %v953, %v1051
        %v1053 = vpop.f32.mrb[0].mxu0
        %v1054 = vadd.f32 %v955, %v1053
        %1055 = vdwg.mxu0
        %v1056 = vand.u32 %v348, 4294901760
        %1057 = vmatprep.subr.mxu0 %v1056
        %v1058 = vand.u32 %v347, 4294901760
        %1059 = vmatpush1.msra.mxu0 %v1058
        %v1060 = vand.u32 %v352, 4294901760
        %1061 = vmatprep.subr.mxu0 %v1060
        %v1062 = vand.u32 %v351, 4294901760
        %1063 = vmatpush1.msra.mxu0 %v1062
        %v1064 = vand.u32 %v356, 4294901760
        %1065 = vmatprep.subr.mxu0 %v1064
        %v1066 = vand.u32 %v355, 4294901760
        %1067 = vmatpush1.msra.mxu0 %v1066
        %1068 = vmatprep.subr.mxu0 0.0
        %1069 = vmatpush1.msra.mxu0 0.0
        %1070 = vmatprep.subr.mxu0 0.0
        %1071 = vmatpush1.msra.mxu0 0.0
        %1072 = vmatprep.subr.mxu0 0.0
        %1073 = vmatpush1.msra.mxu0 0.0
        %1074 = vmatprep.subr.mxu0 0.0
        %1075 = vmatpush1.msra.mxu0 0.0
        %1076 = vmatprep.subr.mxu0 0.0
        %1077 = vmatpush1.msra.mxu0 0.0
        %1078 = vmatprep.subr.mxu0 0.0
        %1079 = vmatpush1.msra.mxu0 0.0
        %1080 = vmatprep.subr.mxu0 0.0
        %1081 = vmatpush1.msra.mxu0 0.0
        %1082 = vmatprep.subr.mxu0 0.0
        %1083 = vmatpush1.msra.mxu0 0.0
        %1084 = vmatprep.subr.mxu0 0.0
        %1085 = vmatpush1.msra.mxu0 0.0
        %1086 = vmatprep.subr.mxu0 0.0
        %1087 = vmatpush1.msra.mxu0 0.0
        %1088 = vmatprep.subr.mxu0 0.0
        %1089 = vmatpush1.msra.mxu0 0.0
        %1090 = vmatprep.subr.mxu0 0.0
        %1091 = vmatpush1.msra.mxu0 0.0
        %1092 = vmatprep.subr.mxu0 0.0
        %1093 = vmatpush1.msra.mxu0 0.0
        %1094 = vmatprep.subr.mxu0 0.0
        %1095 = vmatpush1.msra.mxu0 0.0
        %1096 = vmatprep.subr.mxu0 0.0
        %1097 = vmatpush1.msra.mxu0 0.0
        %1098 = vmatprep.subr.mxu0 0.0
        %1099 = vmatpush1.msra.mxu0 0.0
        %1100 = vmatprep.subr.mxu0 0.0
        %1101 = vmatpush1.msra.mxu0 0.0
        %1102 = vmatprep.subr.mxu0 0.0
        %1103 = vmatpush1.msra.mxu0 0.0
        %1104 = vmatprep.subr.mxu0 0.0
        %1105 = vmatpush1.msra.mxu0 0.0
        %1106 = vmatprep.subr.mxu0 0.0
        %1107 = vmatpush1.msra.mxu0 0.0
        %1108 = vmatprep.subr.mxu0 0.0
        %1109 = vmatpush1.msra.mxu0 0.0
        %1110 = vmatprep.subr.mxu0 0.0
        %1111 = vmatpush1.msra.mxu0 0.0
        %1112 = vmatprep.subr.mxu0 0.0
        %1113 = vmatpush1.msra.mxu0 0.0
        %1114 = vmatprep.subr.mxu0 0.0
        %1115 = vmatpush1.msra.mxu0 0.0
        %1116 = vmatprep.subr.mxu0 0.0
        %1117 = vmatpush1.msra.mxu0 0.0
        %1118 = vmatprep.subr.mxu0 0.0
        %1119 = vmatpush1.msra.mxu0 0.0
        %1120 = vmatprep.subr.mxu0 0.0
        %1121 = vmatpush1.msra.mxu0 0.0
        %1122 = vmatprep.subr.mxu0 0.0
        %1123 = vmatpush1.msra.mxu0 0.0
        %1124 = vmatprep.subr.mxu0 0.0
        %1125 = vmatpush1.msra.mxu0 0.0
        %1126 = vmatprep.mubr.f32.mxu0 0.0
        %v1127 = vand.u32 %v381, 4294901760
        %v1128 = vsub.f32 %v381, %v1127
        %v1129 = vand.u32 %v1128, 4294901760
        %v1130 = vsub.f32 %v1128, %v1129
        %v1131 = vand.u32 %v1130, 4294901760
        %1132 = vmatmul.mubr.f32.gmra.mrb[0].mxu0 %v1131
        %v1133 = vpop.f32.mrb[0].mxu0
        %v1134 = vadd.f32 %v370, %v1133
        %v1135 = vpop.f32.mrb[0].mxu0
        %v1136 = vadd.f32 %v374, %v1135
        %1137 = vmatprep.mubr.f32.mxu0 0.0
        %v1138 = vand.u32 %v384, 4294901760
        %v1139 = vsub.f32 %v384, %v1138
        %v1140 = vand.u32 %v1139, 4294901760
        %v1141 = vsub.f32 %v1139, %v1140
        %v1142 = vand.u32 %v1141, 4294901760
        %1143 = vmatmul.mubr.f32.gmra.mrb[0].mxu0 %v1142
        %v1144 = vpop.f32.mrb[0].mxu0
        %v1145 = vadd.f32 %v370, %v1144
        %v1146 = vpop.f32.mrb[0].mxu0
        %v1147 = vadd.f32 %v374, %v1146
        %1148 = vmatprep.mubr.f32.mxu0 0.0
        %v1149 = vand.u32 %v387, 4294901760
        %v1150 = vsub.f32 %v387, %v1149
        %v1151 = vand.u32 %v1150, 4294901760
        %v1152 = vsub.f32 %v1150, %v1151
        %v1153 = vand.u32 %v1152, 4294901760
        %1154 = vmatmul.mubr.f32.gmra.mrb[0].mxu0 %v1153
        %v1155 = vpop.f32.mrb[0].mxu0
        %v1156 = vadd.f32 %v370, %v1155
        %v1157 = vpop.f32.mrb[0].mxu0
        %v1158 = vadd.f32 %v374, %v1157
        %1159 = vmatprep.mubr.f32.mxu0 0.0
        %v1160 = vand.u32 %v390, 4294901760
        %v1161 = vsub.f32 %v390, %v1160
        %v1162 = vand.u32 %v1161, 4294901760
        %v1163 = vsub.f32 %v1161, %v1162
        %v1164 = vand.u32 %v1163, 4294901760
        %1165 = vmatmul.mubr.f32.gmra.mrb[0].mxu0 %v1164
        %v1166 = vpop.f32.mrb[0].mxu0
        %v1167 = vadd.f32 %v370, %v1166
        %v1168 = vpop.f32.mrb[0].mxu0
        %v1169 = vadd.f32 %v374, %v1168
        %1170 = vdwg.mxu0
        %v1171 = vand.u32 %v348, 4294901760
        %v1172 = vsub.f32 %v348, %v1171
        %v1173 = vand.u32 %v1172, 4294901760
        %v1174 = vsub.f32 %v1172, %v1173
        %v1175 = vand.u32 %v1174, 4294901760
        %1176 = vmatprep.subr.mxu0 %v1175
        %v1177 = vand.u32 %v347, 4294901760
        %v1178 = vsub.f32 %v347, %v1177
        %v1179 = vand.u32 %v1178, 4294901760
        %v1180 = vsub.f32 %v1178, %v1179
        %v1181 = vand.u32 %v1180, 4294901760
        %1182 = vmatpush1.msra.mxu0 %v1181
        %v1183 = vand.u32 %v352, 4294901760
        %v1184 = vsub.f32 %v352, %v1183
        %v1185 = vand.u32 %v1184, 4294901760
        %v1186 = vsub.f32 %v1184, %v1185
        %v1187 = vand.u32 %v1186, 4294901760
        %1188 = vmatprep.subr.mxu0 %v1187
        %v1189 = vand.u32 %v351, 4294901760
        %v1190 = vsub.f32 %v351, %v1189
        %v1191 = vand.u32 %v1190, 4294901760
        %v1192 = vsub.f32 %v1190, %v1191
        %v1193 = vand.u32 %v1192, 4294901760
        %1194 = vmatpush1.msra.mxu0 %v1193
        %v1195 = vand.u32 %v356, 4294901760
        %v1196 = vsub.f32 %v356, %v1195
        %v1197 = vand.u32 %v1196, 4294901760
        %v1198 = vsub.f32 %v1196, %v1197
        %v1199 = vand.u32 %v1198, 4294901760
        %1200 = vmatprep.subr.mxu0 %v1199
        %v1201 = vand.u32 %v355, 4294901760
        %v1202 = vsub.f32 %v355, %v1201
        %v1203 = vand.u32 %v1202, 4294901760
        %v1204 = vsub.f32 %v1202, %v1203
        %v1205 = vand.u32 %v1204, 4294901760
        %1206 = vmatpush1.msra.mxu0 %v1205
        %1207 = vmatprep.subr.mxu0 0.0
        %1208 = vmatpush1.msra.mxu0 0.0
        %1209 = vmatprep.subr.mxu0 0.0
        %1210 = vmatpush1.msra.mxu0 0.0
        %1211 = vmatprep.subr.mxu0 0.0
        %1212 = vmatpush1.msra.mxu0 0.0
        %1213 = vmatprep.subr.mxu0 0.0
        %1214 = vmatpush1.msra.mxu0 0.0
        %1215 = vmatprep.subr.mxu0 0.0
        %1216 = vmatpush1.msra.mxu0 0.0
        %1217 = vmatprep.subr.mxu0 0.0
        %1218 = vmatpush1.msra.mxu0 0.0
        %1219 = vmatprep.subr.mxu0 0.0
        %1220 = vmatpush1.msra.mxu0 0.0
        %1221 = vmatprep.subr.mxu0 0.0
        %1222 = vmatpush1.msra.mxu0 0.0
        %1223 = vmatprep.subr.mxu0 0.0
        %1224 = vmatpush1.msra.mxu0 0.0
        %1225 = vmatprep.subr.mxu0 0.0
        %1226 = vmatpush1.msra.mxu0 0.0
        %1227 = vmatprep.subr.mxu0 0.0
        %1228 = vmatpush1.msra.mxu0 0.0
        %1229 = vmatprep.subr.mxu0 0.0
        %1230 = vmatpush1.msra.mxu0 0.0
        %1231 = vmatprep.subr.mxu0 0.0
        %1232 = vmatpush1.msra.mxu0 0.0
        %1233 = vmatprep.subr.mxu0 0.0
        %1234 = vmatpush1.msra.mxu0 0.0
        %1235 = vmatprep.subr.mxu0 0.0
        %1236 = vmatpush1.msra.mxu0 0.0
        %1237 = vmatprep.subr.mxu0 0.0
        %1238 = vmatpush1.msra.mxu0 0.0
        %1239 = vmatprep.subr.mxu0 0.0
        %1240 = vmatpush1.msra.mxu0 0.0
        %1241 = vmatprep.subr.mxu0 0.0
        %1242 = vmatpush1.msra.mxu0 0.0
        %1243 = vmatprep.subr.mxu0 0.0
        %1244 = vmatpush1.msra.mxu0 0.0
        %1245 = vmatprep.subr.mxu0 0.0
        %1246 = vmatpush1.msra.mxu0 0.0
        %1247 = vmatprep.subr.mxu0 0.0
        %1248 = vmatpush1.msra.mxu0 0.0
        %1249 = vmatprep.subr.mxu0 0.0
        %1250 = vmatpush1.msra.mxu0 0.0
        %1251 = vmatprep.subr.mxu0 0.0
        %1252 = vmatpush1.msra.mxu0 0.0
        %1253 = vmatprep.subr.mxu0 0.0
        %1254 = vmatpush1.msra.mxu0 0.0
        %1255 = vmatprep.subr.mxu0 0.0
        %1256 = vmatpush1.msra.mxu0 0.0
        %1257 = vmatprep.subr.mxu0 0.0
        %1258 = vmatpush1.msra.mxu0 0.0
        %1259 = vmatprep.subr.mxu0 0.0
        %1260 = vmatpush1.msra.mxu0 0.0
        %1261 = vmatprep.subr.mxu0 0.0
        %1262 = vmatpush1.msra.mxu0 0.0
        %1263 = vmatprep.subr.mxu0 0.0
        %1264 = vmatpush1.msra.mxu0 0.0
        %1265 = vmatprep.mubr.f32.mxu0 0.0
        %v1266 = vand.u32 %v381, 4294901760
        %1267 = vmatmul.mubr.f32.gmra.mrb[0].mxu0 %v1266
        %v1268 = vpop.f32.mrb[0].mxu0
        %v1269 = vadd.f32 %v1134, %v1268
        %v1270 = vpop.f32.mrb[0].mxu0
        %v1271 = vadd.f32 %v1136, %v1270
        %1272 = vmatprep.mubr.f32.mxu0 0.0
        %v1273 = vand.u32 %v384, 4294901760
        %1274 = vmatmul.mubr.f32.gmra.mrb[0].mxu0 %v1273
        %v1275 = vpop.f32.mrb[0].mxu0
        %v1276 = vadd.f32 %v1145, %v1275
        %v1277 = vpop.f32.mrb[0].mxu0
        %v1278 = vadd.f32 %v1147, %v1277
        %1279 = vmatprep.mubr.f32.mxu0 0.0
        %v1280 = vand.u32 %v387, 4294901760
        %1281 = vmatmul.mubr.f32.gmra.mrb[0].mxu0 %v1280
        %v1282 = vpop.f32.mrb[0].mxu0
        %v1283 = vadd.f32 %v1156, %v1282
        %v1284 = vpop.f32.mrb[0].mxu0
        %v1285 = vadd.f32 %v1158, %v1284
        %1286 = vmatprep.mubr.f32.mxu0 0.0
        %v1287 = vand.u32 %v390, 4294901760
        %1288 = vmatmul.mubr.f32.gmra.mrb[0].mxu0 %v1287
        %v1289 = vpop.f32.mrb[0].mxu0
        %v1290 = vadd.f32 %v1167, %v1289
        %v1291 = vpop.f32.mrb[0].mxu0
        %v1292 = vadd.f32 %v1169, %v1291
        %1293 = vdwg.mxu0
        %v1294 = vand.u32 %v348, 4294901760
        %v1295 = vsub.f32 %v348, %v1294
        %1296 = vmatprep.subr.mxu0 %v1295
        %v1297 = vand.u32 %v347, 4294901760
        %v1298 = vsub.f32 %v347, %v1297
        %1299 = vmatpush1.msra.mxu0 %v1298
        %v1300 = vand.u32 %v352, 4294901760
        %v1301 = vsub.f32 %v352, %v1300
        %1302 = vmatprep.subr.mxu0 %v1301
        %v1303 = vand.u32 %v351, 4294901760
        %v1304 = vsub.f32 %v351, %v1303
        %1305 = vmatpush1.msra.mxu0 %v1304
        %v1306 = vand.u32 %v356, 4294901760
        %v1307 = vsub.f32 %v356, %v1306
        %1308 = vmatprep.subr.mxu0 %v1307
        %v1309 = vand.u32 %v355, 4294901760
        %v1310 = vsub.f32 %v355, %v1309
        %1311 = vmatpush1.msra.mxu0 %v1310
        %1312 = vmatprep.subr.mxu0 0.0
        %1313 = vmatpush1.msra.mxu0 0.0
        %1314 = vmatprep.subr.mxu0 0.0
        %1315 = vmatpush1.msra.mxu0 0.0
        %1316 = vmatprep.subr.mxu0 0.0
        %1317 = vmatpush1.msra.mxu0 0.0
        %1318 = vmatprep.subr.mxu0 0.0
        %1319 = vmatpush1.msra.mxu0 0.0
        %1320 = vmatprep.subr.mxu0 0.0
        %1321 = vmatpush1.msra.mxu0 0.0
        %1322 = vmatprep.subr.mxu0 0.0
        %1323 = vmatpush1.msra.mxu0 0.0
        %1324 = vmatprep.subr.mxu0 0.0
        %1325 = vmatpush1.msra.mxu0 0.0
        %1326 = vmatprep.subr.mxu0 0.0
        %1327 = vmatpush1.msra.mxu0 0.0
        %1328 = vmatprep.subr.mxu0 0.0
        %1329 = vmatpush1.msra.mxu0 0.0
        %1330 = vmatprep.subr.mxu0 0.0
        %1331 = vmatpush1.msra.mxu0 0.0
        %1332 = vmatprep.subr.mxu0 0.0
        %1333 = vmatpush1.msra.mxu0 0.0
        %1334 = vmatprep.subr.mxu0 0.0
        %1335 = vmatpush1.msra.mxu0 0.0
        %1336 = vmatprep.subr.mxu0 0.0
        %1337 = vmatpush1.msra.mxu0 0.0
        %1338 = vmatprep.subr.mxu0 0.0
        %1339 = vmatpush1.msra.mxu0 0.0
        %1340 = vmatprep.subr.mxu0 0.0
        %1341 = vmatpush1.msra.mxu0 0.0
        %1342 = vmatprep.subr.mxu0 0.0
        %1343 = vmatpush1.msra.mxu0 0.0
        %1344 = vmatprep.subr.mxu0 0.0
        %1345 = vmatpush1.msra.mxu0 0.0
        %1346 = vmatprep.subr.mxu0 0.0
        %1347 = vmatpush1.msra.mxu0 0.0
        %1348 = vmatprep.subr.mxu0 0.0
        %1349 = vmatpush1.msra.mxu0 0.0
        %1350 = vmatprep.subr.mxu0 0.0
        %1351 = vmatpush1.msra.mxu0 0.0
        %1352 = vmatprep.subr.mxu0 0.0
        %1353 = vmatpush1.msra.mxu0 0.0
        %1354 = vmatprep.subr.mxu0 0.0
        %1355 = vmatpush1.msra.mxu0 0.0
        %1356 = vmatprep.subr.mxu0 0.0
        %1357 = vmatpush1.msra.mxu0 0.0
        %1358 = vmatprep.subr.mxu0 0.0
        %1359 = vmatpush1.msra.mxu0 0.0
        %1360 = vmatprep.subr.mxu0 0.0
        %1361 = vmatpush1.msra.mxu0 0.0
        %1362 = vmatprep.subr.mxu0 0.0
        %1363 = vmatpush1.msra.mxu0 0.0
        %1364 = vmatprep.subr.mxu0 0.0
        %1365 = vmatpush1.msra.mxu0 0.0
        %1366 = vmatprep.subr.mxu0 0.0
        %1367 = vmatpush1.msra.mxu0 0.0
        %1368 = vmatprep.subr.mxu0 0.0
        %1369 = vmatpush1.msra.mxu0 0.0
        %1370 = vmatprep.mubr.f32.mxu0 0.0
        %v1371 = vand.u32 %v381, 4294901760
        %v1372 = vsub.f32 %v381, %v1371
        %1373 = vmatmul.mubr.f32.gmra.mrb[0].mxu0 %v1372
        %v1374 = vpop.f32.mrb[0].mxu0
        %v1375 = vadd.f32 %v1269, %v1374
        %v1376 = vpop.f32.mrb[0].mxu0
        %v1377 = vadd.f32 %v1271, %v1376
        %1378 = vmatprep.mubr.f32.mxu0 0.0
        %v1379 = vand.u32 %v384, 4294901760
        %v1380 = vsub.f32 %v384, %v1379
        %1381 = vmatmul.mubr.f32.gmra.mrb[0].mxu0 %v1380
        %v1382 = vpop.f32.mrb[0].mxu0
        %v1383 = vadd.f32 %v1276, %v1382
        %v1384 = vpop.f32.mrb[0].mxu0
        %v1385 = vadd.f32 %v1278, %v1384
        %1386 = vmatprep.mubr.f32.mxu0 0.0
        %v1387 = vand.u32 %v387, 4294901760
        %v1388 = vsub.f32 %v387, %v1387
        %1389 = vmatmul.mubr.f32.gmra.mrb[0].mxu0 %v1388
        %v1390 = vpop.f32.mrb[0].mxu0
        %v1391 = vadd.f32 %v1283, %v1390
        %v1392 = vpop.f32.mrb[0].mxu0
        %v1393 = vadd.f32 %v1285, %v1392
        %1394 = vmatprep.mubr.f32.mxu0 0.0
        %v1395 = vand.u32 %v390, 4294901760
        %v1396 = vsub.f32 %v390, %v1395
        %1397 = vmatmul.mubr.f32.gmra.mrb[0].mxu0 %v1396
        %v1398 = vpop.f32.mrb[0].mxu0
        %v1399 = vadd.f32 %v1290, %v1398
        %v1400 = vpop.f32.mrb[0].mxu0
        %v1401 = vadd.f32 %v1292, %v1400
        %1402 = vdwg.mxu0
        %v1403 = vand.u32 %v348, 4294901760
        %1404 = vmatprep.subr.mxu0 %v1403
        %v1405 = vand.u32 %v347, 4294901760
        %1406 = vmatpush1.msra.mxu0 %v1405
        %v1407 = vand.u32 %v352, 4294901760
        %1408 = vmatprep.subr.mxu0 %v1407
        %v1409 = vand.u32 %v351, 4294901760
        %1410 = vmatpush1.msra.mxu0 %v1409
        %v1411 = vand.u32 %v356, 4294901760
        %1412 = vmatprep.subr.mxu0 %v1411
        %v1413 = vand.u32 %v355, 4294901760
        %1414 = vmatpush1.msra.mxu0 %v1413
        %1415 = vmatprep.subr.mxu0 0.0
        %1416 = vmatpush1.msra.mxu0 0.0
        %1417 = vmatprep.subr.mxu0 0.0
        %1418 = vmatpush1.msra.mxu0 0.0
        %1419 = vmatprep.subr.mxu0 0.0
        %1420 = vmatpush1.msra.mxu0 0.0
        %1421 = vmatprep.subr.mxu0 0.0
        %1422 = vmatpush1.msra.mxu0 0.0
        %1423 = vmatprep.subr.mxu0 0.0
        %1424 = vmatpush1.msra.mxu0 0.0
        %1425 = vmatprep.subr.mxu0 0.0
        %1426 = vmatpush1.msra.mxu0 0.0
        %1427 = vmatprep.subr.mxu0 0.0
        %1428 = vmatpush1.msra.mxu0 0.0
        %1429 = vmatprep.subr.mxu0 0.0
        %1430 = vmatpush1.msra.mxu0 0.0
        %1431 = vmatprep.subr.mxu0 0.0
        %1432 = vmatpush1.msra.mxu0 0.0
        %1433 = vmatprep.subr.mxu0 0.0
        %1434 = vmatpush1.msra.mxu0 0.0
        %1435 = vmatprep.subr.mxu0 0.0
        %1436 = vmatpush1.msra.mxu0 0.0
        %1437 = vmatprep.subr.mxu0 0.0
        %1438 = vmatpush1.msra.mxu0 0.0
        %1439 = vmatprep.subr.mxu0 0.0
        %1440 = vmatpush1.msra.mxu0 0.0
        %1441 = vmatprep.subr.mxu0 0.0
        %1442 = vmatpush1.msra.mxu0 0.0
        %1443 = vmatprep.subr.mxu0 0.0
        %1444 = vmatpush1.msra.mxu0 0.0
        %1445 = vmatprep.subr.mxu0 0.0
        %1446 = vmatpush1.msra.mxu0 0.0
        %1447 = vmatprep.subr.mxu0 0.0
        %1448 = vmatpush1.msra.mxu0 0.0
        %1449 = vmatprep.subr.mxu0 0.0
        %1450 = vmatpush1.msra.mxu0 0.0
        %1451 = vmatprep.subr.mxu0 0.0
        %1452 = vmatpush1.msra.mxu0 0.0
        %1453 = vmatprep.subr.mxu0 0.0
        %1454 = vmatpush1.msra.mxu0 0.0
        %1455 = vmatprep.subr.mxu0 0.0
        %1456 = vmatpush1.msra.mxu0 0.0
        %1457 = vmatprep.subr.mxu0 0.0
        %1458 = vmatpush1.msra.mxu0 0.0
        %1459 = vmatprep.subr.mxu0 0.0
        %1460 = vmatpush1.msra.mxu0 0.0
        %1461 = vmatprep.subr.mxu0 0.0
        %1462 = vmatpush1.msra.mxu0 0.0
        %1463 = vmatprep.subr.mxu0 0.0
        %1464 = vmatpush1.msra.mxu0 0.0
        %1465 = vmatprep.subr.mxu0 0.0
        %1466 = vmatpush1.msra.mxu0 0.0
        %1467 = vmatprep.subr.mxu0 0.0
        %1468 = vmatpush1.msra.mxu0 0.0
        %1469 = vmatprep.subr.mxu0 0.0
        %1470 = vmatpush1.msra.mxu0 0.0
        %1471 = vmatprep.subr.mxu0 0.0
        %1472 = vmatpush1.msra.mxu0 0.0
        %1473 = vmatprep.mubr.f32.mxu0 0.0
        %v1474 = vand.u32 %v381, 4294901760
        %v1475 = vsub.f32 %v381, %v1474
        %v1476 = vand.u32 %v1475, 4294901760
        %1477 = vmatmul.mubr.f32.gmra.mrb[0].mxu0 %v1476
        %v1478 = vpop.f32.mrb[0].mxu0
        %v1479 = vadd.f32 %v1375, %v1478
        %v1480 = vpop.f32.mrb[0].mxu0
        %v1481 = vadd.f32 %v1377, %v1480
        %1482 = vmatprep.mubr.f32.mxu0 0.0
        %v1483 = vand.u32 %v384, 4294901760
        %v1484 = vsub.f32 %v384, %v1483
        %v1485 = vand.u32 %v1484, 4294901760
        %1486 = vmatmul.mubr.f32.gmra.mrb[0].mxu0 %v1485
        %v1487 = vpop.f32.mrb[0].mxu0
        %v1488 = vadd.f32 %v1383, %v1487
        %v1489 = vpop.f32.mrb[0].mxu0
        %v1490 = vadd.f32 %v1385, %v1489
        %1491 = vmatprep.mubr.f32.mxu0 0.0
        %v1492 = vand.u32 %v387, 4294901760
        %v1493 = vsub.f32 %v387, %v1492
        %v1494 = vand.u32 %v1493, 4294901760
        %1495 = vmatmul.mubr.f32.gmra.mrb[0].mxu0 %v1494
        %v1496 = vpop.f32.mrb[0].mxu0
        %v1497 = vadd.f32 %v1391, %v1496
        %v1498 = vpop.f32.mrb[0].mxu0
        %v1499 = vadd.f32 %v1393, %v1498
        %1500 = vmatprep.mubr.f32.mxu0 0.0
        %v1501 = vand.u32 %v390, 4294901760
        %v1502 = vsub.f32 %v390, %v1501
        %v1503 = vand.u32 %v1502, 4294901760
        %1504 = vmatmul.mubr.f32.gmra.mrb[0].mxu0 %v1503
        %v1505 = vpop.f32.mrb[0].mxu0
        %v1506 = vadd.f32 %v1399, %v1505
        %v1507 = vpop.f32.mrb[0].mxu0
        %v1508 = vadd.f32 %v1401, %v1507
        %1509 = vdwg.mxu0
        %v1510 = vand.u32 %v348, 4294901760
        %v1511 = vsub.f32 %v348, %v1510
        %v1512 = vand.u32 %v1511, 4294901760
        %1513 = vmatprep.subr.mxu0 %v1512
        %v1514 = vand.u32 %v347, 4294901760
        %v1515 = vsub.f32 %v347, %v1514
        %v1516 = vand.u32 %v1515, 4294901760
        %1517 = vmatpush1.msra.mxu0 %v1516
        %v1518 = vand.u32 %v352, 4294901760
        %v1519 = vsub.f32 %v352, %v1518
        %v1520 = vand.u32 %v1519, 4294901760
        %1521 = vmatprep.subr.mxu0 %v1520
        %v1522 = vand.u32 %v351, 4294901760
        %v1523 = vsub.f32 %v351, %v1522
        %v1524 = vand.u32 %v1523, 4294901760
        %1525 = vmatpush1.msra.mxu0 %v1524
        %v1526 = vand.u32 %v356, 4294901760
        %v1527 = vsub.f32 %v356, %v1526
        %v1528 = vand.u32 %v1527, 4294901760
        %1529 = vmatprep.subr.mxu0 %v1528
        %v1530 = vand.u32 %v355, 4294901760
        %v1531 = vsub.f32 %v355, %v1530
        %v1532 = vand.u32 %v1531, 4294901760
        %1533 = vmatpush1.msra.mxu0 %v1532
        %1534 = vmatprep.subr.mxu0 0.0
        %1535 = vmatpush1.msra.mxu0 0.0
        %1536 = vmatprep.subr.mxu0 0.0
        %1537 = vmatpush1.msra.mxu0 0.0
        %1538 = vmatprep.subr.mxu0 0.0
        %1539 = vmatpush1.msra.mxu0 0.0
        %1540 = vmatprep.subr.mxu0 0.0
        %1541 = vmatpush1.msra.mxu0 0.0
        %1542 = vmatprep.subr.mxu0 0.0
        %1543 = vmatpush1.msra.mxu0 0.0
        %1544 = vmatprep.subr.mxu0 0.0
        %1545 = vmatpush1.msra.mxu0 0.0
        %1546 = vmatprep.subr.mxu0 0.0
        %1547 = vmatpush1.msra.mxu0 0.0
        %1548 = vmatprep.subr.mxu0 0.0
        %1549 = vmatpush1.msra.mxu0 0.0
        %1550 = vmatprep.subr.mxu0 0.0
        %1551 = vmatpush1.msra.mxu0 0.0
        %1552 = vmatprep.subr.mxu0 0.0
        %1553 = vmatpush1.msra.mxu0 0.0
        %1554 = vmatprep.subr.mxu0 0.0
        %1555 = vmatpush1.msra.mxu0 0.0
        %1556 = vmatprep.subr.mxu0 0.0
        %1557 = vmatpush1.msra.mxu0 0.0
        %1558 = vmatprep.subr.mxu0 0.0
        %1559 = vmatpush1.msra.mxu0 0.0
        %1560 = vmatprep.subr.mxu0 0.0
        %1561 = vmatpush1.msra.mxu0 0.0
        %1562 = vmatprep.subr.mxu0 0.0
        %1563 = vmatpush1.msra.mxu0 0.0
        %1564 = vmatprep.subr.mxu0 0.0
        %1565 = vmatpush1.msra.mxu0 0.0
        %1566 = vmatprep.subr.mxu0 0.0
        %1567 = vmatpush1.msra.mxu0 0.0
        %1568 = vmatprep.subr.mxu0 0.0
        %1569 = vmatpush1.msra.mxu0 0.0
        %1570 = vmatprep.subr.mxu0 0.0
        %1571 = vmatpush1.msra.mxu0 0.0
        %1572 = vmatprep.subr.mxu0 0.0
        %1573 = vmatpush1.msra.mxu0 0.0
        %1574 = vmatprep.subr.mxu0 0.0
        %1575 = vmatpush1.msra.mxu0 0.0
        %1576 = vmatprep.subr.mxu0 0.0
        %1577 = vmatpush1.msra.mxu0 0.0
        %1578 = vmatprep.subr.mxu0 0.0
        %1579 = vmatpush1.msra.mxu0 0.0
        %1580 = vmatprep.subr.mxu0 0.0
        %1581 = vmatpush1.msra.mxu0 0.0
        %1582 = vmatprep.subr.mxu0 0.0
        %1583 = vmatpush1.msra.mxu0 0.0
        %1584 = vmatprep.subr.mxu0 0.0
        %1585 = vmatpush1.msra.mxu0 0.0
        %1586 = vmatprep.subr.mxu0 0.0
        %1587 = vmatpush1.msra.mxu0 0.0
        %1588 = vmatprep.subr.mxu0 0.0
        %1589 = vmatpush1.msra.mxu0 0.0
        %1590 = vmatprep.subr.mxu0 0.0
        %1591 = vmatpush1.msra.mxu0 0.0
        %1592 = vmatprep.mubr.f32.mxu0 0.0
        %v1593 = vand.u32 %v381, 4294901760
        %1594 = vmatmul.mubr.f32.gmra.mrb[0].mxu0 %v1593
        %v1595 = vpop.f32.mrb[0].mxu0
        %v1596 = vadd.f32 %v1479, %v1595
        %v1597 = vpop.f32.mrb[0].mxu0
        %v1598 = vadd.f32 %v1481, %v1597
        %1599 = vmatprep.mubr.f32.mxu0 0.0
        %v1600 = vand.u32 %v384, 4294901760
        %1601 = vmatmul.mubr.f32.gmra.mrb[0].mxu0 %v1600
        %v1602 = vpop.f32.mrb[0].mxu0
        %v1603 = vadd.f32 %v1488, %v1602
        %v1604 = vpop.f32.mrb[0].mxu0
        %v1605 = vadd.f32 %v1490, %v1604
        %1606 = vmatprep.mubr.f32.mxu0 0.0
        %v1607 = vand.u32 %v387, 4294901760
        %1608 = vmatmul.mubr.f32.gmra.mrb[0].mxu0 %v1607
        %v1609 = vpop.f32.mrb[0].mxu0
        %v1610 = vadd.f32 %v1497, %v1609
        %v1611 = vpop.f32.mrb[0].mxu0
        %v1612 = vadd.f32 %v1499, %v1611
        %1613 = vmatprep.mubr.f32.mxu0 0.0
        %v1614 = vand.u32 %v390, 4294901760
        %1615 = vmatmul.mubr.f32.gmra.mrb[0].mxu0 %v1614
        %v1616 = vpop.f32.mrb[0].mxu0
        %v1617 = vadd.f32 %v1506, %v1616
        %v1618 = vpop.f32.mrb[0].mxu0
        %v1619 = vadd.f32 %v1508, %v1618
        %1620 = vdwg.mxu0
        %v1621 = vand.u32 %v348, 4294901760
        %1622 = vmatprep.subr.mxu0 %v1621
        %v1623 = vand.u32 %v347, 4294901760
        %1624 = vmatpush1.msra.mxu0 %v1623
        %v1625 = vand.u32 %v352, 4294901760
        %1626 = vmatprep.subr.mxu0 %v1625
        %v1627 = vand.u32 %v351, 4294901760
        %1628 = vmatpush1.msra.mxu0 %v1627
        %v1629 = vand.u32 %v356, 4294901760
        %1630 = vmatprep.subr.mxu0 %v1629
        %v1631 = vand.u32 %v355, 4294901760
        %1632 = vmatpush1.msra.mxu0 %v1631
        %1633 = vmatprep.subr.mxu0 0.0
        %1634 = vmatpush1.msra.mxu0 0.0
        %1635 = vmatprep.subr.mxu0 0.0
        %1636 = vmatpush1.msra.mxu0 0.0
        %1637 = vmatprep.subr.mxu0 0.0
        %1638 = vmatpush1.msra.mxu0 0.0
        %1639 = vmatprep.subr.mxu0 0.0
        %1640 = vmatpush1.msra.mxu0 0.0
        %1641 = vmatprep.subr.mxu0 0.0
        %1642 = vmatpush1.msra.mxu0 0.0
        %1643 = vmatprep.subr.mxu0 0.0
        %1644 = vmatpush1.msra.mxu0 0.0
        %1645 = vmatprep.subr.mxu0 0.0
        %1646 = vmatpush1.msra.mxu0 0.0
        %1647 = vmatprep.subr.mxu0 0.0
        %1648 = vmatpush1.msra.mxu0 0.0
        %1649 = vmatprep.subr.mxu0 0.0
        %1650 = vmatpush1.msra.mxu0 0.0
        %1651 = vmatprep.subr.mxu0 0.0
        %1652 = vmatpush1.msra.mxu0 0.0
        %1653 = vmatprep.subr.mxu0 0.0
        %1654 = vmatpush1.msra.mxu0 0.0
        %1655 = vmatprep.subr.mxu0 0.0
        %1656 = vmatpush1.msra.mxu0 0.0
        %1657 = vmatprep.subr.mxu0 0.0
        %1658 = vmatpush1.msra.mxu0 0.0
        %1659 = vmatprep.subr.mxu0 0.0
        %1660 = vmatpush1.msra.mxu0 0.0
        %1661 = vmatprep.subr.mxu0 0.0
        %1662 = vmatpush1.msra.mxu0 0.0
        %1663 = vmatprep.subr.mxu0 0.0
        %1664 = vmatpush1.msra.mxu0 0.0
        %1665 = vmatprep.subr.mxu0 0.0
        %1666 = vmatpush1.msra.mxu0 0.0
        %1667 = vmatprep.subr.mxu0 0.0
        %1668 = vmatpush1.msra.mxu0 0.0
        %1669 = vmatprep.subr.mxu0 0.0
        %1670 = vmatpush1.msra.mxu0 0.0
        %1671 = vmatprep.subr.mxu0 0.0
        %1672 = vmatpush1.msra.mxu0 0.0
        %1673 = vmatprep.subr.mxu0 0.0
        %1674 = vmatpush1.msra.mxu0 0.0
        %1675 = vmatprep.subr.mxu0 0.0
        %1676 = vmatpush1.msra.mxu0 0.0
        %1677 = vmatprep.subr.mxu0 0.0
        %1678 = vmatpush1.msra.mxu0 0.0
        %1679 = vmatprep.subr.mxu0 0.0
        %1680 = vmatpush1.msra.mxu0 0.0
        %1681 = vmatprep.subr.mxu0 0.0
        %1682 = vmatpush1.msra.mxu0 0.0
        %1683 = vmatprep.subr.mxu0 0.0
        %1684 = vmatpush1.msra.mxu0 0.0
        %1685 = vmatprep.subr.mxu0 0.0
        %1686 = vmatpush1.msra.mxu0 0.0
        %1687 = vmatprep.subr.mxu0 0.0
        %1688 = vmatpush1.msra.mxu0 0.0
        %1689 = vmatprep.subr.mxu0 0.0
        %1690 = vmatpush1.msra.mxu0 0.0
        %1691 = vmatprep.mubr.f32.mxu0 0.0
        %v1692 = vand.u32 %v381, 4294901760
        %1693 = vmatmul.mubr.f32.gmra.mrb[0].mxu0 %v1692
        %v1694 = vpop.f32.mrb[0].mxu0
        %v1695 = vadd.f32 %v1596, %v1694
        %v1696 = vpop.f32.mrb[0].mxu0
        %v1697 = vadd.f32 %v1598, %v1696
        %1698 = vmatprep.mubr.f32.mxu0 0.0
        %v1699 = vand.u32 %v384, 4294901760
        %1700 = vmatmul.mubr.f32.gmra.mrb[0].mxu0 %v1699
        %v1701 = vpop.f32.mrb[0].mxu0
        %v1702 = vadd.f32 %v1603, %v1701
        %v1703 = vpop.f32.mrb[0].mxu0
        %v1704 = vadd.f32 %v1605, %v1703
        %1705 = vmatprep.mubr.f32.mxu0 0.0
        %v1706 = vand.u32 %v387, 4294901760
        %1707 = vmatmul.mubr.f32.gmra.mrb[0].mxu0 %v1706
        %v1708 = vpop.f32.mrb[0].mxu0
        %v1709 = vadd.f32 %v1610, %v1708
        %v1710 = vpop.f32.mrb[0].mxu0
        %v1711 = vadd.f32 %v1612, %v1710
        %1712 = vmatprep.mubr.f32.mxu0 0.0
        %v1713 = vand.u32 %v390, 4294901760
        %1714 = vmatmul.mubr.f32.gmra.mrb[0].mxu0 %v1713
        %v1715 = vpop.f32.mrb[0].mxu0
        %v1716 = vadd.f32 %v1617, %v1715
        %v1717 = vpop.f32.mrb[0].mxu0
        %v1718 = vadd.f32 %v1619, %v1717
        %1719 = vdwg.mxu0
        %v1720 = vmax.f32 %v1031, 0.0
        %v1721 = vmax.f32 %v1033, 0.0
        %v1722 = vmax.f32 %v1038, 0.0
        %v1723 = vmax.f32 %v1040, 0.0
        %v1724 = vmax.f32 %v1045, 0.0
        %v1725 = vmax.f32 %v1047, 0.0
        %v1726 = vmax.f32 %v1052, 0.0
        %v1727 = vmax.f32 %v1054, 0.0
        %v1728 = vld [vmem:[#allocation8] sm:$0xff]
        %v1729 = vld [vmem:[#allocation8 + $0x8] sm:$0xff]
        %v1730 = vld [vmem:[#allocation8 + $0x10] sm:$0xff]
        %v1731 = vld [vmem:[#allocation8 + $0x18] sm:$0xff]
        %v1732 = vld [vmem:[#allocation8 + $0x20] sm:$0xff]
        %v1733 = vld [vmem:[#allocation8 + $0x28] sm:$0xff]
        %v1734 = vld [vmem:[#allocation8 + $0x30] sm:$0xff]
        %v1735 = vld [vmem:[#allocation8 + $0x38] sm:$0xff]
        %v1736 = vld [vmem:[#allocation8 + $0x40] sm:$0xff]
        %v1737 = vld [vmem:[#allocation8 + $0x48] sm:$0xff]
        %v1738 = vld [vmem:[#allocation8 + $0x50] sm:$0xff]
        %v1739 = vld [vmem:[#allocation8 + $0x58] sm:$0xff]
        %v1740 = vld [vmem:[#allocation8 + $0x60] sm:$0xff]
        %v1741 = vld [vmem:[#allocation8 + $0x68] sm:$0xff]
        %v1742 = vld [vmem:[#allocation8 + $0x70] sm:$0xff]
        %v1743 = vld [vmem:[#allocation8 + $0x78] sm:$0xff]
        %v1744 = vld [vmem:[#allocation8 + $0x80] sm:$0xff]
        %v1745 = vld [vmem:[#allocation8 + $0x88] sm:$0xff]
        %v1746 = vld [vmem:[#allocation8 + $0x90] sm:$0xff]
        %v1747 = vld [vmem:[#allocation8 + $0x98] sm:$0xff]
        %v1748 = vld [vmem:[#allocation8 + $0xa0] sm:$0xff]
        %v1749 = vld [vmem:[#allocation8 + $0xa8] sm:$0xff]
        %v1750 = vld [vmem:[#allocation8 + $0xb0] sm:$0xff]
        %v1751 = vld [vmem:[#allocation8 + $0xb8] sm:$0xff]
        %v1752 = vld [vmem:[#allocation8 + $0xc0] sm:$0xff]
        %v1753 = vld [vmem:[#allocation8 + $0xc8] sm:$0xff]
        %v1754 = vld [vmem:[#allocation8 + $0xd0] sm:$0xff]
        %v1755 = vld [vmem:[#allocation8 + $0xd8] sm:$0xff]
        %v1756 = vld [vmem:[#allocation8 + $0xe0] sm:$0xff]
        %v1757 = vld [vmem:[#allocation8 + $0xe8] sm:$0xff]
        %v1758 = vld [vmem:[#allocation8 + $0xf0] sm:$0xff]
        %v1759 = vld [vmem:[#allocation8 + $0xf8] sm:$0xff]
        %v1760 = vld [vmem:[#allocation8 + $0x100] sm:$0xff]
        %v1761 = vld [vmem:[#allocation8 + $0x108] sm:$0xff]
        %v1762 = vld [vmem:[#allocation8 + $0x110] sm:$0xff]
        %v1763 = vld [vmem:[#allocation8 + $0x118] sm:$0xff]
        %v1764 = vld [vmem:[#allocation8 + $0x120] sm:$0xff]
        %v1765 = vld [vmem:[#allocation8 + $0x128] sm:$0xff]
        %v1766 = vld [vmem:[#allocation8 + $0x130] sm:$0xff]
        %v1767 = vld [vmem:[#allocation8 + $0x138] sm:$0xff]
        %v1768 = vld [vmem:[#allocation8 + $0x140] sm:$0xff]
        %v1769 = vld [vmem:[#allocation8 + $0x148] sm:$0xff]
        %v1770 = vld [vmem:[#allocation8 + $0x150] sm:$0xff]
        %v1771 = vld [vmem:[#allocation8 + $0x158] sm:$0xff]
        %v1772 = vld [vmem:[#allocation8 + $0x160] sm:$0xff]
        %v1773 = vld [vmem:[#allocation8 + $0x168] sm:$0xff]
        %v1774 = vld [vmem:[#allocation8 + $0x170] sm:$0xff]
        %v1775 = vld [vmem:[#allocation8 + $0x178] sm:$0xff]
        %v1776 = vld [vmem:[#allocation8 + $0x180] sm:$0xff]
        %v1777 = vld [vmem:[#allocation8 + $0x188] sm:$0xff]
        %v1778 = vld [vmem:[#allocation8 + $0x190] sm:$0xff]
        %v1779 = vld [vmem:[#allocation8 + $0x198] sm:$0xff]
        %v1780 = vld [vmem:[#allocation8 + $0x1a0] sm:$0xff]
        %v1781 = vld [vmem:[#allocation8 + $0x1a8] sm:$0xff]
        %v1782 = vld [vmem:[#allocation8 + $0x1b0] sm:$0xff]
        %v1783 = vld [vmem:[#allocation8 + $0x1b8] sm:$0xff]
        %v1784 = vld [vmem:[#allocation8 + $0x1c0] sm:$0xff]
        %v1785 = vld [vmem:[#allocation8 + $0x1c8] sm:$0xff]
        %v1786 = vld [vmem:[#allocation8 + $0x1d0] sm:$0xff]
        %v1787 = vld [vmem:[#allocation8 + $0x1d8] sm:$0xff]
        %v1788 = vld [vmem:[#allocation8 + $0x1e0] sm:$0xff]
        %v1789 = vld [vmem:[#allocation8 + $0x1e8] sm:$0xff]
        %v1790 = vld [vmem:[#allocation8 + $0x1f0] sm:$0xff]
        %v1791 = vld [vmem:[#allocation8 + $0x1f8] sm:$0xff]
        %v1792 = vld [vmem:[#allocation8 + $0x200] sm:$0xff]
        %v1793 = vld [vmem:[#allocation8 + $0x208] sm:$0xff]
        %v1794 = vld [vmem:[#allocation8 + $0x210] sm:$0xff]
        %v1795 = vld [vmem:[#allocation8 + $0x218] sm:$0xff]
        %v1796 = vld [vmem:[#allocation8 + $0x220] sm:$0xff]
        %v1797 = vld [vmem:[#allocation8 + $0x228] sm:$0xff]
        %v1798 = vld [vmem:[#allocation8 + $0x230] sm:$0xff]
        %v1799 = vld [vmem:[#allocation8 + $0x238] sm:$0xff]
        %v1800 = vld [vmem:[#allocation8 + $0x240] sm:$0xff]
        %v1801 = vld [vmem:[#allocation8 + $0x248] sm:$0xff]
        %v1802 = vld [vmem:[#allocation8 + $0x250] sm:$0xff]
        %v1803 = vld [vmem:[#allocation8 + $0x258] sm:$0xff]
        %v1804 = vld [vmem:[#allocation8 + $0x260] sm:$0xff]
        %v1805 = vld [vmem:[#allocation8 + $0x268] sm:$0xff]
        %v1806 = vld [vmem:[#allocation8 + $0x270] sm:$0xff]
        %v1807 = vld [vmem:[#allocation8 + $0x278] sm:$0xff]
        %v1808 = vld [vmem:[#allocation8 + $0x280] sm:$0xff]
        %v1809 = vld [vmem:[#allocation8 + $0x288] sm:$0xff]
        %v1810 = vld [vmem:[#allocation8 + $0x290] sm:$0xff]
        %v1811 = vld [vmem:[#allocation8 + $0x298] sm:$0xff]
        %v1812 = vld [vmem:[#allocation8 + $0x2a0] sm:$0xff]
        %v1813 = vld [vmem:[#allocation8 + $0x2a8] sm:$0xff]
        %v1814 = vld [vmem:[#allocation8 + $0x2b0] sm:$0xff]
        %v1815 = vld [vmem:[#allocation8 + $0x2b8] sm:$0xff]
        %v1816 = vld [vmem:[#allocation8 + $0x2c0] sm:$0xff]
        %v1817 = vld [vmem:[#allocation8 + $0x2c8] sm:$0xff]
        %v1818 = vld [vmem:[#allocation8 + $0x2d0] sm:$0xff]
        %v1819 = vld [vmem:[#allocation8 + $0x2d8] sm:$0xff]
        %v1820 = vld [vmem:[#allocation8 + $0x2e0] sm:$0xff]
        %v1821 = vld [vmem:[#allocation8 + $0x2e8] sm:$0xff]
        %v1822 = vld [vmem:[#allocation8 + $0x2f0] sm:$0xff]
        %v1823 = vld [vmem:[#allocation8 + $0x2f8] sm:$0xff]
        %v1824 = vld [vmem:[#allocation10] sm:$0x7]
        %v1826 = vlaneseq
        %v1827 = vshrl.u32 %v1826, 7
        %v1828 = vsub.s32 0, %v1827
        %v1829 = vrot.slane %v1824, %v1828
        %v1830 = vlaneseq
        %v1831 = vshrl.u32 %v1830, 7
        %v1832 = vsub.s32 1, %v1831
        %v1833 = vrot.slane %v1824, %v1832
        %v1834 = vlaneseq
        %v1835 = vshrl.u32 %v1834, 7
        %v1836 = vsub.s32 2, %v1835
        %v1837 = vrot.slane %v1824, %v1836
        %v1841 = vand.u32 %v1729, 4294901760
        %1842 = vmatprep.subr.mxu0 %v1841
        %v1843 = vand.u32 %v1728, 4294901760
        %1844 = vmatpush1.msra.mxu0 %v1843
        %v1845 = vand.u32 %v1732, 4294901760
        %1846 = vmatprep.subr.mxu0 %v1845
        %v1847 = vand.u32 %v1731, 4294901760
        %1848 = vmatpush1.msra.mxu0 %v1847
        %v1849 = vand.u32 %v1735, 4294901760
        %1850 = vmatprep.subr.mxu0 %v1849
        %v1851 = vand.u32 %v1734, 4294901760
        %1852 = vmatpush1.msra.mxu0 %v1851
        %v1853 = vand.u32 %v1738, 4294901760
        %1854 = vmatprep.subr.mxu0 %v1853
        %v1855 = vand.u32 %v1737, 4294901760
        %1856 = vmatpush1.msra.mxu0 %v1855
        %v1857 = vand.u32 %v1741, 4294901760
        %1858 = vmatprep.subr.mxu0 %v1857
        %v1859 = vand.u32 %v1740, 4294901760
        %1860 = vmatpush1.msra.mxu0 %v1859
        %v1861 = vand.u32 %v1744, 4294901760
        %1862 = vmatprep.subr.mxu0 %v1861
        %v1863 = vand.u32 %v1743, 4294901760
        %1864 = vmatpush1.msra.mxu0 %v1863
        %v1865 = vand.u32 %v1747, 4294901760
        %1866 = vmatprep.subr.mxu0 %v1865
        %v1867 = vand.u32 %v1746, 4294901760
        %1868 = vmatpush1.msra.mxu0 %v1867
        %v1869 = vand.u32 %v1750, 4294901760
        %1870 = vmatprep.subr.mxu0 %v1869
        %v1871 = vand.u32 %v1749, 4294901760
        %1872 = vmatpush1.msra.mxu0 %v1871
        %v1873 = vand.u32 %v1753, 4294901760
        %1874 = vmatprep.subr.mxu0 %v1873
        %v1875 = vand.u32 %v1752, 4294901760
        %1876 = vmatpush1.msra.mxu0 %v1875
        %v1877 = vand.u32 %v1756, 4294901760
        %1878 = vmatprep.subr.mxu0 %v1877
        %v1879 = vand.u32 %v1755, 4294901760
        %1880 = vmatpush1.msra.mxu0 %v1879
        %v1881 = vand.u32 %v1759, 4294901760
        %1882 = vmatprep.subr.mxu0 %v1881
        %v1883 = vand.u32 %v1758, 4294901760
        %1884 = vmatpush1.msra.mxu0 %v1883
        %v1885 = vand.u32 %v1762, 4294901760
        %1886 = vmatprep.subr.mxu0 %v1885
        %v1887 = vand.u32 %v1761, 4294901760
        %1888 = vmatpush1.msra.mxu0 %v1887
        %v1889 = vand.u32 %v1765, 4294901760
        %1890 = vmatprep.subr.mxu0 %v1889
        %v1891 = vand.u32 %v1764, 4294901760
        %1892 = vmatpush1.msra.mxu0 %v1891
        %v1893 = vand.u32 %v1768, 4294901760
        %1894 = vmatprep.subr.mxu0 %v1893
        %v1895 = vand.u32 %v1767, 4294901760
        %1896 = vmatpush1.msra.mxu0 %v1895
        %v1897 = vand.u32 %v1771, 4294901760
        %1898 = vmatprep.subr.mxu0 %v1897
        %v1899 = vand.u32 %v1770, 4294901760
        %1900 = vmatpush1.msra.mxu0 %v1899
        %v1901 = vand.u32 %v1774, 4294901760
        %1902 = vmatprep.subr.mxu0 %v1901
        %v1903 = vand.u32 %v1773, 4294901760
        %1904 = vmatpush1.msra.mxu0 %v1903
        %v1905 = vand.u32 %v1777, 4294901760
        %1906 = vmatprep.subr.mxu0 %v1905
        %v1907 = vand.u32 %v1776, 4294901760
        %1908 = vmatpush1.msra.mxu0 %v1907
        %v1909 = vand.u32 %v1780, 4294901760
        %1910 = vmatprep.subr.mxu0 %v1909
        %v1911 = vand.u32 %v1779, 4294901760
        %1912 = vmatpush1.msra.mxu0 %v1911
        %v1913 = vand.u32 %v1783, 4294901760
        %1914 = vmatprep.subr.mxu0 %v1913
        %v1915 = vand.u32 %v1782, 4294901760
        %1916 = vmatpush1.msra.mxu0 %v1915
        %v1917 = vand.u32 %v1786, 4294901760
        %1918 = vmatprep.subr.mxu0 %v1917
        %v1919 = vand.u32 %v1785, 4294901760
        %1920 = vmatpush1.msra.mxu0 %v1919
        %v1921 = vand.u32 %v1789, 4294901760
        %1922 = vmatprep.subr.mxu0 %v1921
        %v1923 = vand.u32 %v1788, 4294901760
        %1924 = vmatpush1.msra.mxu0 %v1923
        %v1925 = vand.u32 %v1792, 4294901760
        %1926 = vmatprep.subr.mxu0 %v1925
        %v1927 = vand.u32 %v1791, 4294901760
        %1928 = vmatpush1.msra.mxu0 %v1927
        %v1929 = vand.u32 %v1795, 4294901760
        %1930 = vmatprep.subr.mxu0 %v1929
        %v1931 = vand.u32 %v1794, 4294901760
        %1932 = vmatpush1.msra.mxu0 %v1931
        %v1933 = vand.u32 %v1798, 4294901760
        %1934 = vmatprep.subr.mxu0 %v1933
        %v1935 = vand.u32 %v1797, 4294901760
        %1936 = vmatpush1.msra.mxu0 %v1935
        %v1937 = vand.u32 %v1801, 4294901760
        %1938 = vmatprep.subr.mxu0 %v1937
        %v1939 = vand.u32 %v1800, 4294901760
        %1940 = vmatpush1.msra.mxu0 %v1939
        %v1941 = vand.u32 %v1804, 4294901760
        %1942 = vmatprep.subr.mxu0 %v1941
        %v1943 = vand.u32 %v1803, 4294901760
        %1944 = vmatpush1.msra.mxu0 %v1943
        %v1945 = vand.u32 %v1807, 4294901760
        %1946 = vmatprep.subr.mxu0 %v1945
        %v1947 = vand.u32 %v1806, 4294901760
        %1948 = vmatpush1.msra.mxu0 %v1947
        %v1949 = vand.u32 %v1810, 4294901760
        %1950 = vmatprep.subr.mxu0 %v1949
        %v1951 = vand.u32 %v1809, 4294901760
        %1952 = vmatpush1.msra.mxu0 %v1951
        %v1953 = vand.u32 %v1813, 4294901760
        %1954 = vmatprep.subr.mxu0 %v1953
        %v1955 = vand.u32 %v1812, 4294901760
        %1956 = vmatpush1.msra.mxu0 %v1955
        %v1957 = vand.u32 %v1816, 4294901760
        %1958 = vmatprep.subr.mxu0 %v1957
        %v1959 = vand.u32 %v1815, 4294901760
        %1960 = vmatpush1.msra.mxu0 %v1959
        %v1961 = vand.u32 %v1819, 4294901760
        %1962 = vmatprep.subr.mxu0 %v1961
        %v1963 = vand.u32 %v1818, 4294901760
        %1964 = vmatpush1.msra.mxu0 %v1963
        %v1965 = vand.u32 %v1822, 4294901760
        %1966 = vmatprep.subr.mxu0 %v1965
        %v1967 = vand.u32 %v1821, 4294901760
        %1968 = vmatpush1.msra.mxu0 %v1967
        %v1969 = vand.u32 %v1721, 4294901760
        %v1970 = vsub.f32 %v1721, %v1969
        %v1971 = vand.u32 %v1970, 4294901760
        %v1972 = vsub.f32 %v1970, %v1971
        %v1973 = vand.u32 %v1972, 4294901760
        %1974 = vmatprep.mubr.f32.mxu0 %v1973
        %v1975 = vand.u32 %v1720, 4294901760
        %v1976 = vsub.f32 %v1720, %v1975
        %v1977 = vand.u32 %v1976, 4294901760
        %v1978 = vsub.f32 %v1976, %v1977
        %v1979 = vand.u32 %v1978, 4294901760
        %1980 = vmatmul.mubr.f32.gmra.mrb[0].mxu0 %v1979
        %v1981 = vpop.f32.mrb[0].mxu0
        %v1982 = vadd.f32 %v1829, %v1981
        %v1983 = vpop.f32.mrb[0].mxu0
        %v1984 = vadd.f32 %v1833, %v1983
        %v1985 = vand.u32 %v1723, 4294901760
        %v1986 = vsub.f32 %v1723, %v1985
        %v1987 = vand.u32 %v1986, 4294901760
        %v1988 = vsub.f32 %v1986, %v1987
        %v1989 = vand.u32 %v1988, 4294901760
        %1990 = vmatprep.mubr.f32.mxu0 %v1989
        %v1991 = vand.u32 %v1722, 4294901760
        %v1992 = vsub.f32 %v1722, %v1991
        %v1993 = vand.u32 %v1992, 4294901760
        %v1994 = vsub.f32 %v1992, %v1993
        %v1995 = vand.u32 %v1994, 4294901760
        %1996 = vmatmul.mubr.f32.gmra.mrb[0].mxu0 %v1995
        %v1997 = vpop.f32.mrb[0].mxu0
        %v1998 = vadd.f32 %v1829, %v1997
        %v1999 = vpop.f32.mrb[0].mxu0
        %v2000 = vadd.f32 %v1833, %v1999
        %v2001 = vand.u32 %v1725, 4294901760
        %v2002 = vsub.f32 %v1725, %v2001
        %v2003 = vand.u32 %v2002, 4294901760
        %v2004 = vsub.f32 %v2002, %v2003
        %v2005 = vand.u32 %v2004, 4294901760
        %2006 = vmatprep.mubr.f32.mxu0 %v2005
        %v2007 = vand.u32 %v1724, 4294901760
        %v2008 = vsub.f32 %v1724, %v2007
        %v2009 = vand.u32 %v2008, 4294901760
        %v2010 = vsub.f32 %v2008, %v2009
        %v2011 = vand.u32 %v2010, 4294901760
        %2012 = vmatmul.mubr.f32.gmra.mrb[0].mxu0 %v2011
        %v2013 = vpop.f32.mrb[0].mxu0
        %v2014 = vadd.f32 %v1829, %v2013
        %v2015 = vpop.f32.mrb[0].mxu0
        %v2016 = vadd.f32 %v1833, %v2015
        %v2017 = vand.u32 %v1727, 4294901760
        %v2018 = vsub.f32 %v1727, %v2017
        %v2019 = vand.u32 %v2018, 4294901760
        %v2020 = vsub.f32 %v2018, %v2019
        %v2021 = vand.u32 %v2020, 4294901760
        %2022 = vmatprep.mubr.f32.mxu0 %v2021
        %v2023 = vand.u32 %v1726, 4294901760
        %v2024 = vsub.f32 %v1726, %v2023
        %v2025 = vand.u32 %v2024, 4294901760
        %v2026 = vsub.f32 %v2024, %v2025
        %v2027 = vand.u32 %v2026, 4294901760
        %2028 = vmatmul.mubr.f32.gmra.mrb[0].mxu0 %v2027
        %v2029 = vpop.f32.mrb[0].mxu0
        %v2030 = vadd.f32 %v1829, %v2029
        %v2031 = vpop.f32.mrb[0].mxu0
        %v2032 = vadd.f32 %v1833, %v2031
        %2033 = vdwg.mxu0
        %v2034 = vand.u32 %v1729, 4294901760
        %v2035 = vsub.f32 %v1729, %v2034
        %v2036 = vand.u32 %v2035, 4294901760
        %v2037 = vsub.f32 %v2035, %v2036
        %v2038 = vand.u32 %v2037, 4294901760
        %2039 = vmatprep.subr.mxu0 %v2038
        %v2040 = vand.u32 %v1728, 4294901760
        %v2041 = vsub.f32 %v1728, %v2040
        %v2042 = vand.u32 %v2041, 4294901760
        %v2043 = vsub.f32 %v2041, %v2042
        %v2044 = vand.u32 %v2043, 4294901760
        %2045 = vmatpush1.msra.mxu0 %v2044
        %v2046 = vand.u32 %v1732, 4294901760
        %v2047 = vsub.f32 %v1732, %v2046
        %v2048 = vand.u32 %v2047, 4294901760
        %v2049 = vsub.f32 %v2047, %v2048
        %v2050 = vand.u32 %v2049, 4294901760
        %2051 = vmatprep.subr.mxu0 %v2050
        %v2052 = vand.u32 %v1731, 4294901760
        %v2053 = vsub.f32 %v1731, %v2052
        %v2054 = vand.u32 %v2053, 4294901760
        %v2055 = vsub.f32 %v2053, %v2054
        %v2056 = vand.u32 %v2055, 4294901760
        %2057 = vmatpush1.msra.mxu0 %v2056
        %v2058 = vand.u32 %v1735, 4294901760
        %v2059 = vsub.f32 %v1735, %v2058
        %v2060 = vand.u32 %v2059, 4294901760
        %v2061 = vsub.f32 %v2059, %v2060
        %v2062 = vand.u32 %v2061, 4294901760
        %2063 = vmatprep.subr.mxu0 %v2062
        %v2064 = vand.u32 %v1734, 4294901760
        %v2065 = vsub.f32 %v1734, %v2064
        %v2066 = vand.u32 %v2065, 4294901760
        %v2067 = vsub.f32 %v2065, %v2066
        %v2068 = vand.u32 %v2067, 4294901760
        %2069 = vmatpush1.msra.mxu0 %v2068
        %v2070 = vand.u32 %v1738, 4294901760
        %v2071 = vsub.f32 %v1738, %v2070
        %v2072 = vand.u32 %v2071, 4294901760
        %v2073 = vsub.f32 %v2071, %v2072
        %v2074 = vand.u32 %v2073, 4294901760
        %2075 = vmatprep.subr.mxu0 %v2074
        %v2076 = vand.u32 %v1737, 4294901760
        %v2077 = vsub.f32 %v1737, %v2076
        %v2078 = vand.u32 %v2077, 4294901760
        %v2079 = vsub.f32 %v2077, %v2078
        %v2080 = vand.u32 %v2079, 4294901760
        %2081 = vmatpush1.msra.mxu0 %v2080
        %v2082 = vand.u32 %v1741, 4294901760
        %v2083 = vsub.f32 %v1741, %v2082
        %v2084 = vand.u32 %v2083, 4294901760
        %v2085 = vsub.f32 %v2083, %v2084
        %v2086 = vand.u32 %v2085, 4294901760
        %2087 = vmatprep.subr.mxu0 %v2086
        %v2088 = vand.u32 %v1740, 4294901760
        %v2089 = vsub.f32 %v1740, %v2088
        %v2090 = vand.u32 %v2089, 4294901760
        %v2091 = vsub.f32 %v2089, %v2090
        %v2092 = vand.u32 %v2091, 4294901760
        %2093 = vmatpush1.msra.mxu0 %v2092
        %v2094 = vand.u32 %v1744, 4294901760
        %v2095 = vsub.f32 %v1744, %v2094
        %v2096 = vand.u32 %v2095, 4294901760
        %v2097 = vsub.f32 %v2095, %v2096
        %v2098 = vand.u32 %v2097, 4294901760
        %2099 = vmatprep.subr.mxu0 %v2098
        %v2100 = vand.u32 %v1743, 4294901760
        %v2101 = vsub.f32 %v1743, %v2100
        %v2102 = vand.u32 %v2101, 4294901760
        %v2103 = vsub.f32 %v2101, %v2102
        %v2104 = vand.u32 %v2103, 4294901760
        %2105 = vmatpush1.msra.mxu0 %v2104
        %v2106 = vand.u32 %v1747, 4294901760
        %v2107 = vsub.f32 %v1747, %v2106
        %v2108 = vand.u32 %v2107, 4294901760
        %v2109 = vsub.f32 %v2107, %v2108
        %v2110 = vand.u32 %v2109, 4294901760
        %2111 = vmatprep.subr.mxu0 %v2110
        %v2112 = vand.u32 %v1746, 4294901760
        %v2113 = vsub.f32 %v1746, %v2112
        %v2114 = vand.u32 %v2113, 4294901760
        %v2115 = vsub.f32 %v2113, %v2114
        %v2116 = vand.u32 %v2115, 4294901760
        %2117 = vmatpush1.msra.mxu0 %v2116
        %v2118 = vand.u32 %v1750, 4294901760
        %v2119 = vsub.f32 %v1750, %v2118
        %v2120 = vand.u32 %v2119, 4294901760
        %v2121 = vsub.f32 %v2119, %v2120
        %v2122 = vand.u32 %v2121, 4294901760
        %2123 = vmatprep.subr.mxu0 %v2122
        %v2124 = vand.u32 %v1749, 4294901760
        %v2125 = vsub.f32 %v1749, %v2124
        %v2126 = vand.u32 %v2125, 4294901760
        %v2127 = vsub.f32 %v2125, %v2126
        %v2128 = vand.u32 %v2127, 4294901760
        %2129 = vmatpush1.msra.mxu0 %v2128
        %v2130 = vand.u32 %v1753, 4294901760
        %v2131 = vsub.f32 %v1753, %v2130
        %v2132 = vand.u32 %v2131, 4294901760
        %v2133 = vsub.f32 %v2131, %v2132
        %v2134 = vand.u32 %v2133, 4294901760
        %2135 = vmatprep.subr.mxu0 %v2134
        %v2136 = vand.u32 %v1752, 4294901760
        %v2137 = vsub.f32 %v1752, %v2136
        %v2138 = vand.u32 %v2137, 4294901760
        %v2139 = vsub.f32 %v2137, %v2138
        %v2140 = vand.u32 %v2139, 4294901760
        %2141 = vmatpush1.msra.mxu0 %v2140
        %v2142 = vand.u32 %v1756, 4294901760
        %v2143 = vsub.f32 %v1756, %v2142
        %v2144 = vand.u32 %v2143, 4294901760
        %v2145 = vsub.f32 %v2143, %v2144
        %v2146 = vand.u32 %v2145, 4294901760
        %2147 = vmatprep.subr.mxu0 %v2146
        %v2148 = vand.u32 %v1755, 4294901760
        %v2149 = vsub.f32 %v1755, %v2148
        %v2150 = vand.u32 %v2149, 4294901760
        %v2151 = vsub.f32 %v2149, %v2150
        %v2152 = vand.u32 %v2151, 4294901760
        %2153 = vmatpush1.msra.mxu0 %v2152
        %v2154 = vand.u32 %v1759, 4294901760
        %v2155 = vsub.f32 %v1759, %v2154
        %v2156 = vand.u32 %v2155, 4294901760
        %v2157 = vsub.f32 %v2155, %v2156
        %v2158 = vand.u32 %v2157, 4294901760
        %2159 = vmatprep.subr.mxu0 %v2158
        %v2160 = vand.u32 %v1758, 4294901760
        %v2161 = vsub.f32 %v1758, %v2160
        %v2162 = vand.u32 %v2161, 4294901760
        %v2163 = vsub.f32 %v2161, %v2162
        %v2164 = vand.u32 %v2163, 4294901760
        %2165 = vmatpush1.msra.mxu0 %v2164
        %v2166 = vand.u32 %v1762, 4294901760
        %v2167 = vsub.f32 %v1762, %v2166
        %v2168 = vand.u32 %v2167, 4294901760
        %v2169 = vsub.f32 %v2167, %v2168
        %v2170 = vand.u32 %v2169, 4294901760
        %2171 = vmatprep.subr.mxu0 %v2170
        %v2172 = vand.u32 %v1761, 4294901760
        %v2173 = vsub.f32 %v1761, %v2172
        %v2174 = vand.u32 %v2173, 4294901760
        %v2175 = vsub.f32 %v2173, %v2174
        %v2176 = vand.u32 %v2175, 4294901760
        %2177 = vmatpush1.msra.mxu0 %v2176
        %v2178 = vand.u32 %v1765, 4294901760
        %v2179 = vsub.f32 %v1765, %v2178
        %v2180 = vand.u32 %v2179, 4294901760
        %v2181 = vsub.f32 %v2179, %v2180
        %v2182 = vand.u32 %v2181, 4294901760
        %2183 = vmatprep.subr.mxu0 %v2182
        %v2184 = vand.u32 %v1764, 4294901760
        %v2185 = vsub.f32 %v1764, %v2184
        %v2186 = vand.u32 %v2185, 4294901760
        %v2187 = vsub.f32 %v2185, %v2186
        %v2188 = vand.u32 %v2187, 4294901760
        %2189 = vmatpush1.msra.mxu0 %v2188
        %v2190 = vand.u32 %v1768, 4294901760
        %v2191 = vsub.f32 %v1768, %v2190
        %v2192 = vand.u32 %v2191, 4294901760
        %v2193 = vsub.f32 %v2191, %v2192
        %v2194 = vand.u32 %v2193, 4294901760
        %2195 = vmatprep.subr.mxu0 %v2194
        %v2196 = vand.u32 %v1767, 4294901760
        %v2197 = vsub.f32 %v1767, %v2196
        %v2198 = vand.u32 %v2197, 4294901760
        %v2199 = vsub.f32 %v2197, %v2198
        %v2200 = vand.u32 %v2199, 4294901760
        %2201 = vmatpush1.msra.mxu0 %v2200
        %v2202 = vand.u32 %v1771, 4294901760
        %v2203 = vsub.f32 %v1771, %v2202
        %v2204 = vand.u32 %v2203, 4294901760
        %v2205 = vsub.f32 %v2203, %v2204
        %v2206 = vand.u32 %v2205, 4294901760
        %2207 = vmatprep.subr.mxu0 %v2206
        %v2208 = vand.u32 %v1770, 4294901760
        %v2209 = vsub.f32 %v1770, %v2208
        %v2210 = vand.u32 %v2209, 4294901760
        %v2211 = vsub.f32 %v2209, %v2210
        %v2212 = vand.u32 %v2211, 4294901760
        %2213 = vmatpush1.msra.mxu0 %v2212
        %v2214 = vand.u32 %v1774, 4294901760
        %v2215 = vsub.f32 %v1774, %v2214
        %v2216 = vand.u32 %v2215, 4294901760
        %v2217 = vsub.f32 %v2215, %v2216
        %v2218 = vand.u32 %v2217, 4294901760
        %2219 = vmatprep.subr.mxu0 %v2218
        %v2220 = vand.u32 %v1773, 4294901760
        %v2221 = vsub.f32 %v1773, %v2220
        %v2222 = vand.u32 %v2221, 4294901760
        %v2223 = vsub.f32 %v2221, %v2222
        %v2224 = vand.u32 %v2223, 4294901760
        %2225 = vmatpush1.msra.mxu0 %v2224
        %v2226 = vand.u32 %v1777, 4294901760
        %v2227 = vsub.f32 %v1777, %v2226
        %v2228 = vand.u32 %v2227, 4294901760
        %v2229 = vsub.f32 %v2227, %v2228
        %v2230 = vand.u32 %v2229, 4294901760
        %2231 = vmatprep.subr.mxu0 %v2230
        %v2232 = vand.u32 %v1776, 4294901760
        %v2233 = vsub.f32 %v1776, %v2232
        %v2234 = vand.u32 %v2233, 4294901760
        %v2235 = vsub.f32 %v2233, %v2234
        %v2236 = vand.u32 %v2235, 4294901760
        %2237 = vmatpush1.msra.mxu0 %v2236
        %v2238 = vand.u32 %v1780, 4294901760
        %v2239 = vsub.f32 %v1780, %v2238
        %v2240 = vand.u32 %v2239, 4294901760
        %v2241 = vsub.f32 %v2239, %v2240
        %v2242 = vand.u32 %v2241, 4294901760
        %2243 = vmatprep.subr.mxu0 %v2242
        %v2244 = vand.u32 %v1779, 4294901760
        %v2245 = vsub.f32 %v1779, %v2244
        %v2246 = vand.u32 %v2245, 4294901760
        %v2247 = vsub.f32 %v2245, %v2246
        %v2248 = vand.u32 %v2247, 4294901760
        %2249 = vmatpush1.msra.mxu0 %v2248
        %v2250 = vand.u32 %v1783, 4294901760
        %v2251 = vsub.f32 %v1783, %v2250
        %v2252 = vand.u32 %v2251, 4294901760
        %v2253 = vsub.f32 %v2251, %v2252
        %v2254 = vand.u32 %v2253, 4294901760
        %2255 = vmatprep.subr.mxu0 %v2254
        %v2256 = vand.u32 %v1782, 4294901760
        %v2257 = vsub.f32 %v1782, %v2256
        %v2258 = vand.u32 %v2257, 4294901760
        %v2259 = vsub.f32 %v2257, %v2258
        %v2260 = vand.u32 %v2259, 4294901760
        %2261 = vmatpush1.msra.mxu0 %v2260
        %v2262 = vand.u32 %v1786, 4294901760
        %v2263 = vsub.f32 %v1786, %v2262
        %v2264 = vand.u32 %v2263, 4294901760
        %v2265 = vsub.f32 %v2263, %v2264
        %v2266 = vand.u32 %v2265, 4294901760
        %2267 = vmatprep.subr.mxu0 %v2266
        %v2268 = vand.u32 %v1785, 4294901760
        %v2269 = vsub.f32 %v1785, %v2268
        %v2270 = vand.u32 %v2269, 4294901760
        %v2271 = vsub.f32 %v2269, %v2270
        %v2272 = vand.u32 %v2271, 4294901760
        %2273 = vmatpush1.msra.mxu0 %v2272
        %v2274 = vand.u32 %v1789, 4294901760
        %v2275 = vsub.f32 %v1789, %v2274
        %v2276 = vand.u32 %v2275, 4294901760
        %v2277 = vsub.f32 %v2275, %v2276
        %v2278 = vand.u32 %v2277, 4294901760
        %2279 = vmatprep.subr.mxu0 %v2278
        %v2280 = vand.u32 %v1788, 4294901760
        %v2281 = vsub.f32 %v1788, %v2280
        %v2282 = vand.u32 %v2281, 4294901760
        %v2283 = vsub.f32 %v2281, %v2282
        %v2284 = vand.u32 %v2283, 4294901760
        %2285 = vmatpush1.msra.mxu0 %v2284
        %v2286 = vand.u32 %v1792, 4294901760
        %v2287 = vsub.f32 %v1792, %v2286
        %v2288 = vand.u32 %v2287, 4294901760
        %v2289 = vsub.f32 %v2287, %v2288
        %v2290 = vand.u32 %v2289, 4294901760
        %2291 = vmatprep.subr.mxu0 %v2290
        %v2292 = vand.u32 %v1791, 4294901760
        %v2293 = vsub.f32 %v1791, %v2292
        %v2294 = vand.u32 %v2293, 4294901760
        %v2295 = vsub.f32 %v2293, %v2294
        %v2296 = vand.u32 %v2295, 4294901760
        %2297 = vmatpush1.msra.mxu0 %v2296
        %v2298 = vand.u32 %v1795, 4294901760
        %v2299 = vsub.f32 %v1795, %v2298
        %v2300 = vand.u32 %v2299, 4294901760
        %v2301 = vsub.f32 %v2299, %v2300
        %v2302 = vand.u32 %v2301, 4294901760
        %2303 = vmatprep.subr.mxu0 %v2302
        %v2304 = vand.u32 %v1794, 4294901760
        %v2305 = vsub.f32 %v1794, %v2304
        %v2306 = vand.u32 %v2305, 4294901760
        %v2307 = vsub.f32 %v2305, %v2306
        %v2308 = vand.u32 %v2307, 4294901760
        %2309 = vmatpush1.msra.mxu0 %v2308
        %v2310 = vand.u32 %v1798, 4294901760
        %v2311 = vsub.f32 %v1798, %v2310
        %v2312 = vand.u32 %v2311, 4294901760
        %v2313 = vsub.f32 %v2311, %v2312
        %v2314 = vand.u32 %v2313, 4294901760
        %2315 = vmatprep.subr.mxu0 %v2314
        %v2316 = vand.u32 %v1797, 4294901760
        %v2317 = vsub.f32 %v1797, %v2316
        %v2318 = vand.u32 %v2317, 4294901760
        %v2319 = vsub.f32 %v2317, %v2318
        %v2320 = vand.u32 %v2319, 4294901760
        %2321 = vmatpush1.msra.mxu0 %v2320
        %v2322 = vand.u32 %v1801, 4294901760
        %v2323 = vsub.f32 %v1801, %v2322
        %v2324 = vand.u32 %v2323, 4294901760
        %v2325 = vsub.f32 %v2323, %v2324
        %v2326 = vand.u32 %v2325, 4294901760
        %2327 = vmatprep.subr.mxu0 %v2326
        %v2328 = vand.u32 %v1800, 4294901760
        %v2329 = vsub.f32 %v1800, %v2328
        %v2330 = vand.u32 %v2329, 4294901760
        %v2331 = vsub.f32 %v2329, %v2330
        %v2332 = vand.u32 %v2331, 4294901760
        %2333 = vmatpush1.msra.mxu0 %v2332
        %v2334 = vand.u32 %v1804, 4294901760
        %v2335 = vsub.f32 %v1804, %v2334
        %v2336 = vand.u32 %v2335, 4294901760
        %v2337 = vsub.f32 %v2335, %v2336
        %v2338 = vand.u32 %v2337, 4294901760
        %2339 = vmatprep.subr.mxu0 %v2338
        %v2340 = vand.u32 %v1803, 4294901760
        %v2341 = vsub.f32 %v1803, %v2340
        %v2342 = vand.u32 %v2341, 4294901760
        %v2343 = vsub.f32 %v2341, %v2342
        %v2344 = vand.u32 %v2343, 4294901760
        %2345 = vmatpush1.msra.mxu0 %v2344
        %v2346 = vand.u32 %v1807, 4294901760
        %v2347 = vsub.f32 %v1807, %v2346
        %v2348 = vand.u32 %v2347, 4294901760
        %v2349 = vsub.f32 %v2347, %v2348
        %v2350 = vand.u32 %v2349, 4294901760
        %2351 = vmatprep.subr.mxu0 %v2350
        %v2352 = vand.u32 %v1806, 4294901760
        %v2353 = vsub.f32 %v1806, %v2352
        %v2354 = vand.u32 %v2353, 4294901760
        %v2355 = vsub.f32 %v2353, %v2354
        %v2356 = vand.u32 %v2355, 4294901760
        %2357 = vmatpush1.msra.mxu0 %v2356
        %v2358 = vand.u32 %v1810, 4294901760
        %v2359 = vsub.f32 %v1810, %v2358
        %v2360 = vand.u32 %v2359, 4294901760
        %v2361 = vsub.f32 %v2359, %v2360
        %v2362 = vand.u32 %v2361, 4294901760
        %2363 = vmatprep.subr.mxu0 %v2362
        %v2364 = vand.u32 %v1809, 4294901760
        %v2365 = vsub.f32 %v1809, %v2364
        %v2366 = vand.u32 %v2365, 4294901760
        %v2367 = vsub.f32 %v2365, %v2366
        %v2368 = vand.u32 %v2367, 4294901760
        %2369 = vmatpush1.msra.mxu0 %v2368
        %v2370 = vand.u32 %v1813, 4294901760
        %v2371 = vsub.f32 %v1813, %v2370
        %v2372 = vand.u32 %v2371, 4294901760
        %v2373 = vsub.f32 %v2371, %v2372
        %v2374 = vand.u32 %v2373, 4294901760
        %2375 = vmatprep.subr.mxu0 %v2374
        %v2376 = vand.u32 %v1812, 4294901760
        %v2377 = vsub.f32 %v1812, %v2376
        %v2378 = vand.u32 %v2377, 4294901760
        %v2379 = vsub.f32 %v2377, %v2378
        %v2380 = vand.u32 %v2379, 4294901760
        %2381 = vmatpush1.msra.mxu0 %v2380
        %v2382 = vand.u32 %v1816, 4294901760
        %v2383 = vsub.f32 %v1816, %v2382
        %v2384 = vand.u32 %v2383, 4294901760
        %v2385 = vsub.f32 %v2383, %v2384
        %v2386 = vand.u32 %v2385, 4294901760
        %2387 = vmatprep.subr.mxu0 %v2386
        %v2388 = vand.u32 %v1815, 4294901760
        %v2389 = vsub.f32 %v1815, %v2388
        %v2390 = vand.u32 %v2389, 4294901760
        %v2391 = vsub.f32 %v2389, %v2390
        %v2392 = vand.u32 %v2391, 4294901760
        %2393 = vmatpush1.msra.mxu0 %v2392
        %v2394 = vand.u32 %v1819, 4294901760
        %v2395 = vsub.f32 %v1819, %v2394
        %v2396 = vand.u32 %v2395, 4294901760
        %v2397 = vsub.f32 %v2395, %v2396
        %v2398 = vand.u32 %v2397, 4294901760
        %2399 = vmatprep.subr.mxu0 %v2398
        %v2400 = vand.u32 %v1818, 4294901760
        %v2401 = vsub.f32 %v1818, %v2400
        %v2402 = vand.u32 %v2401, 4294901760
        %v2403 = vsub.f32 %v2401, %v2402
        %v2404 = vand.u32 %v2403, 4294901760
        %2405 = vmatpush1.msra.mxu0 %v2404
        %v2406 = vand.u32 %v1822, 4294901760
        %v2407 = vsub.f32 %v1822, %v2406
        %v2408 = vand.u32 %v2407, 4294901760
        %v2409 = vsub.f32 %v2407, %v2408
        %v2410 = vand.u32 %v2409, 4294901760
        %2411 = vmatprep.subr.mxu0 %v2410
        %v2412 = vand.u32 %v1821, 4294901760
        %v2413 = vsub.f32 %v1821, %v2412
        %v2414 = vand.u32 %v2413, 4294901760
        %v2415 = vsub.f32 %v2413, %v2414
        %v2416 = vand.u32 %v2415, 4294901760
        %2417 = vmatpush1.msra.mxu0 %v2416
        %v2418 = vand.u32 %v1721, 4294901760
        %2419 = vmatprep.mubr.f32.mxu0 %v2418
        %v2420 = vand.u32 %v1720, 4294901760
        %2421 = vmatmul.mubr.f32.gmra.mrb[0].mxu0 %v2420
        %v2422 = vpop.f32.mrb[0].mxu0
        %v2423 = vadd.f32 %v1982, %v2422
        %v2424 = vpop.f32.mrb[0].mxu0
        %v2425 = vadd.f32 %v1984, %v2424
        %v2426 = vand.u32 %v1723, 4294901760
        %2427 = vmatprep.mubr.f32.mxu0 %v2426
        %v2428 = vand.u32 %v1722, 4294901760
        %2429 = vmatmul.mubr.f32.gmra.mrb[0].mxu0 %v2428
        %v2430 = vpop.f32.mrb[0].mxu0
        %v2431 = vadd.f32 %v1998, %v2430
        %v2432 = vpop.f32.mrb[0].mxu0
        %v2433 = vadd.f32 %v2000, %v2432
        %v2434 = vand.u32 %v1725, 4294901760
        %2435 = vmatprep.mubr.f32.mxu0 %v2434
        %v2436 = vand.u32 %v1724, 4294901760
        %2437 = vmatmul.mubr.f32.gmra.mrb[0].mxu0 %v2436
        %v2438 = vpop.f32.mrb[0].mxu0
        %v2439 = vadd.f32 %v2014, %v2438
        %v2440 = vpop.f32.mrb[0].mxu0
        %v2441 = vadd.f32 %v2016, %v2440
        %v2442 = vand.u32 %v1727, 4294901760
        %2443 = vmatprep.mubr.f32.mxu0 %v2442
        %v2444 = vand.u32 %v1726, 4294901760
        %2445 = vmatmul.mubr.f32.gmra.mrb[0].mxu0 %v2444
        %v2446 = vpop.f32.mrb[0].mxu0
        %v2447 = vadd.f32 %v2030, %v2446
        %v2448 = vpop.f32.mrb[0].mxu0
        %v2449 = vadd.f32 %v2032, %v2448
        %2450 = vdwg.mxu0
        %v2451 = vand.u32 %v1729, 4294901760
        %v2452 = vsub.f32 %v1729, %v2451
        %2453 = vmatprep.subr.mxu0 %v2452
        %v2454 = vand.u32 %v1728, 4294901760
        %v2455 = vsub.f32 %v1728, %v2454
        %2456 = vmatpush1.msra.mxu0 %v2455
        %v2457 = vand.u32 %v1732, 4294901760
        %v2458 = vsub.f32 %v1732, %v2457
        %2459 = vmatprep.subr.mxu0 %v2458
        %v2460 = vand.u32 %v1731, 4294901760
        %v2461 = vsub.f32 %v1731, %v2460
        %2462 = vmatpush1.msra.mxu0 %v2461
        %v2463 = vand.u32 %v1735, 4294901760
        %v2464 = vsub.f32 %v1735, %v2463
        %2465 = vmatprep.subr.mxu0 %v2464
        %v2466 = vand.u32 %v1734, 4294901760
        %v2467 = vsub.f32 %v1734, %v2466
        %2468 = vmatpush1.msra.mxu0 %v2467
        %v2469 = vand.u32 %v1738, 4294901760
        %v2470 = vsub.f32 %v1738, %v2469
        %2471 = vmatprep.subr.mxu0 %v2470
        %v2472 = vand.u32 %v1737, 4294901760
        %v2473 = vsub.f32 %v1737, %v2472
        %2474 = vmatpush1.msra.mxu0 %v2473
        %v2475 = vand.u32 %v1741, 4294901760
        %v2476 = vsub.f32 %v1741, %v2475
        %2477 = vmatprep.subr.mxu0 %v2476
        %v2478 = vand.u32 %v1740, 4294901760
        %v2479 = vsub.f32 %v1740, %v2478
        %2480 = vmatpush1.msra.mxu0 %v2479
        %v2481 = vand.u32 %v1744, 4294901760
        %v2482 = vsub.f32 %v1744, %v2481
        %2483 = vmatprep.subr.mxu0 %v2482
        %v2484 = vand.u32 %v1743, 4294901760
        %v2485 = vsub.f32 %v1743, %v2484
        %2486 = vmatpush1.msra.mxu0 %v2485
        %v2487 = vand.u32 %v1747, 4294901760
        %v2488 = vsub.f32 %v1747, %v2487
        %2489 = vmatprep.subr.mxu0 %v2488
        %v2490 = vand.u32 %v1746, 4294901760
        %v2491 = vsub.f32 %v1746, %v2490
        %2492 = vmatpush1.msra.mxu0 %v2491
        %v2493 = vand.u32 %v1750, 4294901760
        %v2494 = vsub.f32 %v1750, %v2493
        %2495 = vmatprep.subr.mxu0 %v2494
        %v2496 = vand.u32 %v1749, 4294901760
        %v2497 = vsub.f32 %v1749, %v2496
        %2498 = vmatpush1.msra.mxu0 %v2497
        %v2499 = vand.u32 %v1753, 4294901760
        %v2500 = vsub.f32 %v1753, %v2499
        %2501 = vmatprep.subr.mxu0 %v2500
        %v2502 = vand.u32 %v1752, 4294901760
        %v2503 = vsub.f32 %v1752, %v2502
        %2504 = vmatpush1.msra.mxu0 %v2503
        %v2505 = vand.u32 %v1756, 4294901760
        %v2506 = vsub.f32 %v1756, %v2505
        %2507 = vmatprep.subr.mxu0 %v2506
        %v2508 = vand.u32 %v1755, 4294901760
        %v2509 = vsub.f32 %v1755, %v2508
        %2510 = vmatpush1.msra.mxu0 %v2509
        %v2511 = vand.u32 %v1759, 4294901760
        %v2512 = vsub.f32 %v1759, %v2511
        %2513 = vmatprep.subr.mxu0 %v2512
        %v2514 = vand.u32 %v1758, 4294901760
        %v2515 = vsub.f32 %v1758, %v2514
        %2516 = vmatpush1.msra.mxu0 %v2515
        %v2517 = vand.u32 %v1762, 4294901760
        %v2518 = vsub.f32 %v1762, %v2517
        %2519 = vmatprep.subr.mxu0 %v2518
        %v2520 = vand.u32 %v1761, 4294901760
        %v2521 = vsub.f32 %v1761, %v2520
        %2522 = vmatpush1.msra.mxu0 %v2521
        %v2523 = vand.u32 %v1765, 4294901760
        %v2524 = vsub.f32 %v1765, %v2523
        %2525 = vmatprep.subr.mxu0 %v2524
        %v2526 = vand.u32 %v1764, 4294901760
        %v2527 = vsub.f32 %v1764, %v2526
        %2528 = vmatpush1.msra.mxu0 %v2527
        %v2529 = vand.u32 %v1768, 4294901760
        %v2530 = vsub.f32 %v1768, %v2529
        %2531 = vmatprep.subr.mxu0 %v2530
        %v2532 = vand.u32 %v1767, 4294901760
        %v2533 = vsub.f32 %v1767, %v2532
        %2534 = vmatpush1.msra.mxu0 %v2533
        %v2535 = vand.u32 %v1771, 4294901760
        %v2536 = vsub.f32 %v1771, %v2535
        %2537 = vmatprep.subr.mxu0 %v2536
        %v2538 = vand.u32 %v1770, 4294901760
        %v2539 = vsub.f32 %v1770, %v2538
        %2540 = vmatpush1.msra.mxu0 %v2539
        %v2541 = vand.u32 %v1774, 4294901760
        %v2542 = vsub.f32 %v1774, %v2541
        %2543 = vmatprep.subr.mxu0 %v2542
        %v2544 = vand.u32 %v1773, 4294901760
        %v2545 = vsub.f32 %v1773, %v2544
        %2546 = vmatpush1.msra.mxu0 %v2545
        %v2547 = vand.u32 %v1777, 4294901760
        %v2548 = vsub.f32 %v1777, %v2547
        %2549 = vmatprep.subr.mxu0 %v2548
        %v2550 = vand.u32 %v1776, 4294901760
        %v2551 = vsub.f32 %v1776, %v2550
        %2552 = vmatpush1.msra.mxu0 %v2551
        %v2553 = vand.u32 %v1780, 4294901760
        %v2554 = vsub.f32 %v1780, %v2553
        %2555 = vmatprep.subr.mxu0 %v2554
        %v2556 = vand.u32 %v1779, 4294901760
        %v2557 = vsub.f32 %v1779, %v2556
        %2558 = vmatpush1.msra.mxu0 %v2557
        %v2559 = vand.u32 %v1783, 4294901760
        %v2560 = vsub.f32 %v1783, %v2559
        %2561 = vmatprep.subr.mxu0 %v2560
        %v2562 = vand.u32 %v1782, 4294901760
        %v2563 = vsub.f32 %v1782, %v2562
        %2564 = vmatpush1.msra.mxu0 %v2563
        %v2565 = vand.u32 %v1786, 4294901760
        %v2566 = vsub.f32 %v1786, %v2565
        %2567 = vmatprep.subr.mxu0 %v2566
        %v2568 = vand.u32 %v1785, 4294901760
        %v2569 = vsub.f32 %v1785, %v2568
        %2570 = vmatpush1.msra.mxu0 %v2569
        %v2571 = vand.u32 %v1789, 4294901760
        %v2572 = vsub.f32 %v1789, %v2571
        %2573 = vmatprep.subr.mxu0 %v2572
        %v2574 = vand.u32 %v1788, 4294901760
        %v2575 = vsub.f32 %v1788, %v2574
        %2576 = vmatpush1.msra.mxu0 %v2575
        %v2577 = vand.u32 %v1792, 4294901760
        %v2578 = vsub.f32 %v1792, %v2577
        %2579 = vmatprep.subr.mxu0 %v2578
        %v2580 = vand.u32 %v1791, 4294901760
        %v2581 = vsub.f32 %v1791, %v2580
        %2582 = vmatpush1.msra.mxu0 %v2581
        %v2583 = vand.u32 %v1795, 4294901760
        %v2584 = vsub.f32 %v1795, %v2583
        %2585 = vmatprep.subr.mxu0 %v2584
        %v2586 = vand.u32 %v1794, 4294901760
        %v2587 = vsub.f32 %v1794, %v2586
        %2588 = vmatpush1.msra.mxu0 %v2587
        %v2589 = vand.u32 %v1798, 4294901760
        %v2590 = vsub.f32 %v1798, %v2589
        %2591 = vmatprep.subr.mxu0 %v2590
        %v2592 = vand.u32 %v1797, 4294901760
        %v2593 = vsub.f32 %v1797, %v2592
        %2594 = vmatpush1.msra.mxu0 %v2593
        %v2595 = vand.u32 %v1801, 4294901760
        %v2596 = vsub.f32 %v1801, %v2595
        %2597 = vmatprep.subr.mxu0 %v2596
        %v2598 = vand.u32 %v1800, 4294901760
        %v2599 = vsub.f32 %v1800, %v2598
        %2600 = vmatpush1.msra.mxu0 %v2599
        %v2601 = vand.u32 %v1804, 4294901760
        %v2602 = vsub.f32 %v1804, %v2601
        %2603 = vmatprep.subr.mxu0 %v2602
        %v2604 = vand.u32 %v1803, 4294901760
        %v2605 = vsub.f32 %v1803, %v2604
        %2606 = vmatpush1.msra.mxu0 %v2605
        %v2607 = vand.u32 %v1807, 4294901760
        %v2608 = vsub.f32 %v1807, %v2607
        %2609 = vmatprep.subr.mxu0 %v2608
        %v2610 = vand.u32 %v1806, 4294901760
        %v2611 = vsub.f32 %v1806, %v2610
        %2612 = vmatpush1.msra.mxu0 %v2611
        %v2613 = vand.u32 %v1810, 4294901760
        %v2614 = vsub.f32 %v1810, %v2613
        %2615 = vmatprep.subr.mxu0 %v2614
        %v2616 = vand.u32 %v1809, 4294901760
        %v2617 = vsub.f32 %v1809, %v2616
        %2618 = vmatpush1.msra.mxu0 %v2617
        %v2619 = vand.u32 %v1813, 4294901760
        %v2620 = vsub.f32 %v1813, %v2619
        %2621 = vmatprep.subr.mxu0 %v2620
        %v2622 = vand.u32 %v1812, 4294901760
        %v2623 = vsub.f32 %v1812, %v2622
        %2624 = vmatpush1.msra.mxu0 %v2623
        %v2625 = vand.u32 %v1816, 4294901760
        %v2626 = vsub.f32 %v1816, %v2625
        %2627 = vmatprep.subr.mxu0 %v2626
        %v2628 = vand.u32 %v1815, 4294901760
        %v2629 = vsub.f32 %v1815, %v2628
        %2630 = vmatpush1.msra.mxu0 %v2629
        %v2631 = vand.u32 %v1819, 4294901760
        %v2632 = vsub.f32 %v1819, %v2631
        %2633 = vmatprep.subr.mxu0 %v2632
        %v2634 = vand.u32 %v1818, 4294901760
        %v2635 = vsub.f32 %v1818, %v2634
        %2636 = vmatpush1.msra.mxu0 %v2635
        %v2637 = vand.u32 %v1822, 4294901760
        %v2638 = vsub.f32 %v1822, %v2637
        %2639 = vmatprep.subr.mxu0 %v2638
        %v2640 = vand.u32 %v1821, 4294901760
        %v2641 = vsub.f32 %v1821, %v2640
        %2642 = vmatpush1.msra.mxu0 %v2641
        %v2643 = vand.u32 %v1721, 4294901760
        %v2644 = vsub.f32 %v1721, %v2643
        %2645 = vmatprep.mubr.f32.mxu0 %v2644
        %v2646 = vand.u32 %v1720, 4294901760
        %v2647 = vsub.f32 %v1720, %v2646
        %2648 = vmatmul.mubr.f32.gmra.mrb[0].mxu0 %v2647
        %v2649 = vpop.f32.mrb[0].mxu0
        %v2650 = vadd.f32 %v2423, %v2649
        %v2651 = vpop.f32.mrb[0].mxu0
        %v2652 = vadd.f32 %v2425, %v2651
        %v2653 = vand.u32 %v1723, 4294901760
        %v2654 = vsub.f32 %v1723, %v2653
        %2655 = vmatprep.mubr.f32.mxu0 %v2654
        %v2656 = vand.u32 %v1722, 4294901760
        %v2657 = vsub.f32 %v1722, %v2656
        %2658 = vmatmul.mubr.f32.gmra.mrb[0].mxu0 %v2657
        %v2659 = vpop.f32.mrb[0].mxu0
        %v2660 = vadd.f32 %v2431, %v2659
        %v2661 = vpop.f32.mrb[0].mxu0
        %v2662 = vadd.f32 %v2433, %v2661
        %v2663 = vand.u32 %v1725, 4294901760
        %v2664 = vsub.f32 %v1725, %v2663
        %2665 = vmatprep.mubr.f32.mxu0 %v2664
        %v2666 = vand.u32 %v1724, 4294901760
        %v2667 = vsub.f32 %v1724, %v2666
        %2668 = vmatmul.mubr.f32.gmra.mrb[0].mxu0 %v2667
        %v2669 = vpop.f32.mrb[0].mxu0
        %v2670 = vadd.f32 %v2439, %v2669
        %v2671 = vpop.f32.mrb[0].mxu0
        %v2672 = vadd.f32 %v2441, %v2671
        %v2673 = vand.u32 %v1727, 4294901760
        %v2674 = vsub.f32 %v1727, %v2673
        %2675 = vmatprep.mubr.f32.mxu0 %v2674
        %v2676 = vand.u32 %v1726, 4294901760
        %v2677 = vsub.f32 %v1726, %v2676
        %2678 = vmatmul.mubr.f32.gmra.mrb[0].mxu0 %v2677
        %v2679 = vpop.f32.mrb[0].mxu0
        %v2680 = vadd.f32 %v2447, %v2679
        %v2681 = vpop.f32.mrb[0].mxu0
        %v2682 = vadd.f32 %v2449, %v2681
        %2683 = vdwg.mxu0
        %v2684 = vand.u32 %v1729, 4294901760
        %2685 = vmatprep.subr.mxu0 %v2684
        %v2686 = vand.u32 %v1728, 4294901760
        %2687 = vmatpush1.msra.mxu0 %v2686
        %v2688 = vand.u32 %v1732, 4294901760
        %2689 = vmatprep.subr.mxu0 %v2688
        %v2690 = vand.u32 %v1731, 4294901760
        %2691 = vmatpush1.msra.mxu0 %v2690
        %v2692 = vand.u32 %v1735, 4294901760
        %2693 = vmatprep.subr.mxu0 %v2692
        %v2694 = vand.u32 %v1734, 4294901760
        %2695 = vmatpush1.msra.mxu0 %v2694
        %v2696 = vand.u32 %v1738, 4294901760
        %2697 = vmatprep.subr.mxu0 %v2696
        %v2698 = vand.u32 %v1737, 4294901760
        %2699 = vmatpush1.msra.mxu0 %v2698
        %v2700 = vand.u32 %v1741, 4294901760
        %2701 = vmatprep.subr.mxu0 %v2700
        %v2702 = vand.u32 %v1740, 4294901760
        %2703 = vmatpush1.msra.mxu0 %v2702
        %v2704 = vand.u32 %v1744, 4294901760
        %2705 = vmatprep.subr.mxu0 %v2704
        %v2706 = vand.u32 %v1743, 4294901760
        %2707 = vmatpush1.msra.mxu0 %v2706
        %v2708 = vand.u32 %v1747, 4294901760
        %2709 = vmatprep.subr.mxu0 %v2708
        %v2710 = vand.u32 %v1746, 4294901760
        %2711 = vmatpush1.msra.mxu0 %v2710
        %v2712 = vand.u32 %v1750, 4294901760
        %2713 = vmatprep.subr.mxu0 %v2712
        %v2714 = vand.u32 %v1749, 4294901760
        %2715 = vmatpush1.msra.mxu0 %v2714
        %v2716 = vand.u32 %v1753, 4294901760
        %2717 = vmatprep.subr.mxu0 %v2716
        %v2718 = vand.u32 %v1752, 4294901760
        %2719 = vmatpush1.msra.mxu0 %v2718
        %v2720 = vand.u32 %v1756, 4294901760
        %2721 = vmatprep.subr.mxu0 %v2720
        %v2722 = vand.u32 %v1755, 4294901760
        %2723 = vmatpush1.msra.mxu0 %v2722
        %v2724 = vand.u32 %v1759, 4294901760
        %2725 = vmatprep.subr.mxu0 %v2724
        %v2726 = vand.u32 %v1758, 4294901760
        %2727 = vmatpush1.msra.mxu0 %v2726
        %v2728 = vand.u32 %v1762, 4294901760
        %2729 = vmatprep.subr.mxu0 %v2728
        %v2730 = vand.u32 %v1761, 4294901760
        %2731 = vmatpush1.msra.mxu0 %v2730
        %v2732 = vand.u32 %v1765, 4294901760
        %2733 = vmatprep.subr.mxu0 %v2732
        %v2734 = vand.u32 %v1764, 4294901760
        %2735 = vmatpush1.msra.mxu0 %v2734
        %v2736 = vand.u32 %v1768, 4294901760
        %2737 = vmatprep.subr.mxu0 %v2736
        %v2738 = vand.u32 %v1767, 4294901760
        %2739 = vmatpush1.msra.mxu0 %v2738
        %v2740 = vand.u32 %v1771, 4294901760
        %2741 = vmatprep.subr.mxu0 %v2740
        %v2742 = vand.u32 %v1770, 4294901760
        %2743 = vmatpush1.msra.mxu0 %v2742
        %v2744 = vand.u32 %v1774, 4294901760
        %2745 = vmatprep.subr.mxu0 %v2744
        %v2746 = vand.u32 %v1773, 4294901760
        %2747 = vmatpush1.msra.mxu0 %v2746
        %v2748 = vand.u32 %v1777, 4294901760
        %2749 = vmatprep.subr.mxu0 %v2748
        %v2750 = vand.u32 %v1776, 4294901760
        %2751 = vmatpush1.msra.mxu0 %v2750
        %v2752 = vand.u32 %v1780, 4294901760
        %2753 = vmatprep.subr.mxu0 %v2752
        %v2754 = vand.u32 %v1779, 4294901760
        %2755 = vmatpush1.msra.mxu0 %v2754
        %v2756 = vand.u32 %v1783, 4294901760
        %2757 = vmatprep.subr.mxu0 %v2756
        %v2758 = vand.u32 %v1782, 4294901760
        %2759 = vmatpush1.msra.mxu0 %v2758
        %v2760 = vand.u32 %v1786, 4294901760
        %2761 = vmatprep.subr.mxu0 %v2760
        %v2762 = vand.u32 %v1785, 4294901760
        %2763 = vmatpush1.msra.mxu0 %v2762
        %v2764 = vand.u32 %v1789, 4294901760
        %2765 = vmatprep.subr.mxu0 %v2764
        %v2766 = vand.u32 %v1788, 4294901760
        %2767 = vmatpush1.msra.mxu0 %v2766
        %v2768 = vand.u32 %v1792, 4294901760
        %2769 = vmatprep.subr.mxu0 %v2768
        %v2770 = vand.u32 %v1791, 4294901760
        %2771 = vmatpush1.msra.mxu0 %v2770
        %v2772 = vand.u32 %v1795, 4294901760
        %2773 = vmatprep.subr.mxu0 %v2772
        %v2774 = vand.u32 %v1794, 4294901760
        %2775 = vmatpush1.msra.mxu0 %v2774
        %v2776 = vand.u32 %v1798, 4294901760
        %2777 = vmatprep.subr.mxu0 %v2776
        %v2778 = vand.u32 %v1797, 4294901760
        %2779 = vmatpush1.msra.mxu0 %v2778
        %v2780 = vand.u32 %v1801, 4294901760
        %2781 = vmatprep.subr.mxu0 %v2780
        %v2782 = vand.u32 %v1800, 4294901760
        %2783 = vmatpush1.msra.mxu0 %v2782
        %v2784 = vand.u32 %v1804, 4294901760
        %2785 = vmatprep.subr.mxu0 %v2784
        %v2786 = vand.u32 %v1803, 4294901760
        %2787 = vmatpush1.msra.mxu0 %v2786
        %v2788 = vand.u32 %v1807, 4294901760
        %2789 = vmatprep.subr.mxu0 %v2788
        %v2790 = vand.u32 %v1806, 4294901760
        %2791 = vmatpush1.msra.mxu0 %v2790
        %v2792 = vand.u32 %v1810, 4294901760
        %2793 = vmatprep.subr.mxu0 %v2792
        %v2794 = vand.u32 %v1809, 4294901760
        %2795 = vmatpush1.msra.mxu0 %v2794
        %v2796 = vand.u32 %v1813, 4294901760
        %2797 = vmatprep.subr.mxu0 %v2796
        %v2798 = vand.u32 %v1812, 4294901760
        %2799 = vmatpush1.msra.mxu0 %v2798
        %v2800 = vand.u32 %v1816, 4294901760
        %2801 = vmatprep.subr.mxu0 %v2800
        %v2802 = vand.u32 %v1815, 4294901760
        %2803 = vmatpush1.msra.mxu0 %v2802
        %v2804 = vand.u32 %v1819, 4294901760
        %2805 = vmatprep.subr.mxu0 %v2804
        %v2806 = vand.u32 %v1818, 4294901760
        %2807 = vmatpush1.msra.mxu0 %v2806
        %v2808 = vand.u32 %v1822, 4294901760
        %2809 = vmatprep.subr.mxu0 %v2808
        %v2810 = vand.u32 %v1821, 4294901760
        %2811 = vmatpush1.msra.mxu0 %v2810
        %v2812 = vand.u32 %v1721, 4294901760
        %v2813 = vsub.f32 %v1721, %v2812
        %v2814 = vand.u32 %v2813, 4294901760
        %2815 = vmatprep.mubr.f32.mxu0 %v2814
        %v2816 = vand.u32 %v1720, 4294901760
        %v2817 = vsub.f32 %v1720, %v2816
        %v2818 = vand.u32 %v2817, 4294901760
        %2819 = vmatmul.mubr.f32.gmra.mrb[0].mxu0 %v2818
        %v2820 = vpop.f32.mrb[0].mxu0
        %v2821 = vadd.f32 %v2650, %v2820
        %v2822 = vpop.f32.mrb[0].mxu0
        %v2823 = vadd.f32 %v2652, %v2822
        %v2824 = vand.u32 %v1723, 4294901760
        %v2825 = vsub.f32 %v1723, %v2824
        %v2826 = vand.u32 %v2825, 4294901760
        %2827 = vmatprep.mubr.f32.mxu0 %v2826
        %v2828 = vand.u32 %v1722, 4294901760
        %v2829 = vsub.f32 %v1722, %v2828
        %v2830 = vand.u32 %v2829, 4294901760
        %2831 = vmatmul.mubr.f32.gmra.mrb[0].mxu0 %v2830
        %v2832 = vpop.f32.mrb[0].mxu0
        %v2833 = vadd.f32 %v2660, %v2832
        %v2834 = vpop.f32.mrb[0].mxu0
        %v2835 = vadd.f32 %v2662, %v2834
        %v2836 = vand.u32 %v1725, 4294901760
        %v2837 = vsub.f32 %v1725, %v2836
        %v2838 = vand.u32 %v2837, 4294901760
        %2839 = vmatprep.mubr.f32.mxu0 %v2838
        %v2840 = vand.u32 %v1724, 4294901760
        %v2841 = vsub.f32 %v1724, %v2840
        %v2842 = vand.u32 %v2841, 4294901760
        %2843 = vmatmul.mubr.f32.gmra.mrb[0].mxu0 %v2842
        %v2844 = vpop.f32.mrb[0].mxu0
        %v2845 = vadd.f32 %v2670, %v2844
        %v2846 = vpop.f32.mrb[0].mxu0
        %v2847 = vadd.f32 %v2672, %v2846
        %v2848 = vand.u32 %v1727, 4294901760
        %v2849 = vsub.f32 %v1727, %v2848
        %v2850 = vand.u32 %v2849, 4294901760
        %2851 = vmatprep.mubr.f32.mxu0 %v2850
        %v2852 = vand.u32 %v1726, 4294901760
        %v2853 = vsub.f32 %v1726, %v2852
        %v2854 = vand.u32 %v2853, 4294901760
        %2855 = vmatmul.mubr.f32.gmra.mrb[0].mxu0 %v2854
        %v2856 = vpop.f32.mrb[0].mxu0
        %v2857 = vadd.f32 %v2680, %v2856
        %v2858 = vpop.f32.mrb[0].mxu0
        %v2859 = vadd.f32 %v2682, %v2858
        %2860 = vdwg.mxu0
        %v2861 = vand.u32 %v1729, 4294901760
        %v2862 = vsub.f32 %v1729, %v2861
        %v2863 = vand.u32 %v2862, 4294901760
        %2864 = vmatprep.subr.mxu0 %v2863
        %v2865 = vand.u32 %v1728, 4294901760
        %v2866 = vsub.f32 %v1728, %v2865
        %v2867 = vand.u32 %v2866, 4294901760
        %2868 = vmatpush1.msra.mxu0 %v2867
        %v2869 = vand.u32 %v1732, 4294901760
        %v2870 = vsub.f32 %v1732, %v2869
        %v2871 = vand.u32 %v2870, 4294901760
        %2872 = vmatprep.subr.mxu0 %v2871
        %v2873 = vand.u32 %v1731, 4294901760
        %v2874 = vsub.f32 %v1731, %v2873
        %v2875 = vand.u32 %v2874, 4294901760
        %2876 = vmatpush1.msra.mxu0 %v2875
        %v2877 = vand.u32 %v1735, 4294901760
        %v2878 = vsub.f32 %v1735, %v2877
        %v2879 = vand.u32 %v2878, 4294901760
        %2880 = vmatprep.subr.mxu0 %v2879
        %v2881 = vand.u32 %v1734, 4294901760
        %v2882 = vsub.f32 %v1734, %v2881
        %v2883 = vand.u32 %v2882, 4294901760
        %2884 = vmatpush1.msra.mxu0 %v2883
        %v2885 = vand.u32 %v1738, 4294901760
        %v2886 = vsub.f32 %v1738, %v2885
        %v2887 = vand.u32 %v2886, 4294901760
        %2888 = vmatprep.subr.mxu0 %v2887
        %v2889 = vand.u32 %v1737, 4294901760
        %v2890 = vsub.f32 %v1737, %v2889
        %v2891 = vand.u32 %v2890, 4294901760
        %2892 = vmatpush1.msra.mxu0 %v2891
        %v2893 = vand.u32 %v1741, 4294901760
        %v2894 = vsub.f32 %v1741, %v2893
        %v2895 = vand.u32 %v2894, 4294901760
        %2896 = vmatprep.subr.mxu0 %v2895
        %v2897 = vand.u32 %v1740, 4294901760
        %v2898 = vsub.f32 %v1740, %v2897
        %v2899 = vand.u32 %v2898, 4294901760
        %2900 = vmatpush1.msra.mxu0 %v2899
        %v2901 = vand.u32 %v1744, 4294901760
        %v2902 = vsub.f32 %v1744, %v2901
        %v2903 = vand.u32 %v2902, 4294901760
        %2904 = vmatprep.subr.mxu0 %v2903
        %v2905 = vand.u32 %v1743, 4294901760
        %v2906 = vsub.f32 %v1743, %v2905
        %v2907 = vand.u32 %v2906, 4294901760
        %2908 = vmatpush1.msra.mxu0 %v2907
        %v2909 = vand.u32 %v1747, 4294901760
        %v2910 = vsub.f32 %v1747, %v2909
        %v2911 = vand.u32 %v2910, 4294901760
        %2912 = vmatprep.subr.mxu0 %v2911
        %v2913 = vand.u32 %v1746, 4294901760
        %v2914 = vsub.f32 %v1746, %v2913
        %v2915 = vand.u32 %v2914, 4294901760
        %2916 = vmatpush1.msra.mxu0 %v2915
        %v2917 = vand.u32 %v1750, 4294901760
        %v2918 = vsub.f32 %v1750, %v2917
        %v2919 = vand.u32 %v2918, 4294901760
        %2920 = vmatprep.subr.mxu0 %v2919
        %v2921 = vand.u32 %v1749, 4294901760
        %v2922 = vsub.f32 %v1749, %v2921
        %v2923 = vand.u32 %v2922, 4294901760
        %2924 = vmatpush1.msra.mxu0 %v2923
        %v2925 = vand.u32 %v1753, 4294901760
        %v2926 = vsub.f32 %v1753, %v2925
        %v2927 = vand.u32 %v2926, 4294901760
        %2928 = vmatprep.subr.mxu0 %v2927
        %v2929 = vand.u32 %v1752, 4294901760
        %v2930 = vsub.f32 %v1752, %v2929
        %v2931 = vand.u32 %v2930, 4294901760
        %2932 = vmatpush1.msra.mxu0 %v2931
        %v2933 = vand.u32 %v1756, 4294901760
        %v2934 = vsub.f32 %v1756, %v2933
        %v2935 = vand.u32 %v2934, 4294901760
        %2936 = vmatprep.subr.mxu0 %v2935
        %v2937 = vand.u32 %v1755, 4294901760
        %v2938 = vsub.f32 %v1755, %v2937
        %v2939 = vand.u32 %v2938, 4294901760
        %2940 = vmatpush1.msra.mxu0 %v2939
        %v2941 = vand.u32 %v1759, 4294901760
        %v2942 = vsub.f32 %v1759, %v2941
        %v2943 = vand.u32 %v2942, 4294901760
        %2944 = vmatprep.subr.mxu0 %v2943
        %v2945 = vand.u32 %v1758, 4294901760
        %v2946 = vsub.f32 %v1758, %v2945
        %v2947 = vand.u32 %v2946, 4294901760
        %2948 = vmatpush1.msra.mxu0 %v2947
        %v2949 = vand.u32 %v1762, 4294901760
        %v2950 = vsub.f32 %v1762, %v2949
        %v2951 = vand.u32 %v2950, 4294901760
        %2952 = vmatprep.subr.mxu0 %v2951
        %v2953 = vand.u32 %v1761, 4294901760
        %v2954 = vsub.f32 %v1761, %v2953
        %v2955 = vand.u32 %v2954, 4294901760
        %2956 = vmatpush1.msra.mxu0 %v2955
        %v2957 = vand.u32 %v1765, 4294901760
        %v2958 = vsub.f32 %v1765, %v2957
        %v2959 = vand.u32 %v2958, 4294901760
        %2960 = vmatprep.subr.mxu0 %v2959
        %v2961 = vand.u32 %v1764, 4294901760
        %v2962 = vsub.f32 %v1764, %v2961
        %v2963 = vand.u32 %v2962, 4294901760
        %2964 = vmatpush1.msra.mxu0 %v2963
        %v2965 = vand.u32 %v1768, 4294901760
        %v2966 = vsub.f32 %v1768, %v2965
        %v2967 = vand.u32 %v2966, 4294901760
        %2968 = vmatprep.subr.mxu0 %v2967
        %v2969 = vand.u32 %v1767, 4294901760
        %v2970 = vsub.f32 %v1767, %v2969
        %v2971 = vand.u32 %v2970, 4294901760
        %2972 = vmatpush1.msra.mxu0 %v2971
        %v2973 = vand.u32 %v1771, 4294901760
        %v2974 = vsub.f32 %v1771, %v2973
        %v2975 = vand.u32 %v2974, 4294901760
        %2976 = vmatprep.subr.mxu0 %v2975
        %v2977 = vand.u32 %v1770, 4294901760
        %v2978 = vsub.f32 %v1770, %v2977
        %v2979 = vand.u32 %v2978, 4294901760
        %2980 = vmatpush1.msra.mxu0 %v2979
        %v2981 = vand.u32 %v1774, 4294901760
        %v2982 = vsub.f32 %v1774, %v2981
        %v2983 = vand.u32 %v2982, 4294901760
        %2984 = vmatprep.subr.mxu0 %v2983
        %v2985 = vand.u32 %v1773, 4294901760
        %v2986 = vsub.f32 %v1773, %v2985
        %v2987 = vand.u32 %v2986, 4294901760
        %2988 = vmatpush1.msra.mxu0 %v2987
        %v2989 = vand.u32 %v1777, 4294901760
        %v2990 = vsub.f32 %v1777, %v2989
        %v2991 = vand.u32 %v2990, 4294901760
        %2992 = vmatprep.subr.mxu0 %v2991
        %v2993 = vand.u32 %v1776, 4294901760
        %v2994 = vsub.f32 %v1776, %v2993
        %v2995 = vand.u32 %v2994, 4294901760
        %2996 = vmatpush1.msra.mxu0 %v2995
        %v2997 = vand.u32 %v1780, 4294901760
        %v2998 = vsub.f32 %v1780, %v2997
        %v2999 = vand.u32 %v2998, 4294901760
        %3000 = vmatprep.subr.mxu0 %v2999
        %v3001 = vand.u32 %v1779, 4294901760
        %v3002 = vsub.f32 %v1779, %v3001
        %v3003 = vand.u32 %v3002, 4294901760
        %3004 = vmatpush1.msra.mxu0 %v3003
        %v3005 = vand.u32 %v1783, 4294901760
        %v3006 = vsub.f32 %v1783, %v3005
        %v3007 = vand.u32 %v3006, 4294901760
        %3008 = vmatprep.subr.mxu0 %v3007
        %v3009 = vand.u32 %v1782, 4294901760
        %v3010 = vsub.f32 %v1782, %v3009
        %v3011 = vand.u32 %v3010, 4294901760
        %3012 = vmatpush1.msra.mxu0 %v3011
        %v3013 = vand.u32 %v1786, 4294901760
        %v3014 = vsub.f32 %v1786, %v3013
        %v3015 = vand.u32 %v3014, 4294901760
        %3016 = vmatprep.subr.mxu0 %v3015
        %v3017 = vand.u32 %v1785, 4294901760
        %v3018 = vsub.f32 %v1785, %v3017
        %v3019 = vand.u32 %v3018, 4294901760
        %3020 = vmatpush1.msra.mxu0 %v3019
        %v3021 = vand.u32 %v1789, 4294901760
        %v3022 = vsub.f32 %v1789, %v3021
        %v3023 = vand.u32 %v3022, 4294901760
        %3024 = vmatprep.subr.mxu0 %v3023
        %v3025 = vand.u32 %v1788, 4294901760
        %v3026 = vsub.f32 %v1788, %v3025
        %v3027 = vand.u32 %v3026, 4294901760
        %3028 = vmatpush1.msra.mxu0 %v3027
        %v3029 = vand.u32 %v1792, 4294901760
        %v3030 = vsub.f32 %v1792, %v3029
        %v3031 = vand.u32 %v3030, 4294901760
        %3032 = vmatprep.subr.mxu0 %v3031
        %v3033 = vand.u32 %v1791, 4294901760
        %v3034 = vsub.f32 %v1791, %v3033
        %v3035 = vand.u32 %v3034, 4294901760
        %3036 = vmatpush1.msra.mxu0 %v3035
        %v3037 = vand.u32 %v1795, 4294901760
        %v3038 = vsub.f32 %v1795, %v3037
        %v3039 = vand.u32 %v3038, 4294901760
        %3040 = vmatprep.subr.mxu0 %v3039
        %v3041 = vand.u32 %v1794, 4294901760
        %v3042 = vsub.f32 %v1794, %v3041
        %v3043 = vand.u32 %v3042, 4294901760
        %3044 = vmatpush1.msra.mxu0 %v3043
        %v3045 = vand.u32 %v1798, 4294901760
        %v3046 = vsub.f32 %v1798, %v3045
        %v3047 = vand.u32 %v3046, 4294901760
        %3048 = vmatprep.subr.mxu0 %v3047
        %v3049 = vand.u32 %v1797, 4294901760
        %v3050 = vsub.f32 %v1797, %v3049
        %v3051 = vand.u32 %v3050, 4294901760
        %3052 = vmatpush1.msra.mxu0 %v3051
        %v3053 = vand.u32 %v1801, 4294901760
        %v3054 = vsub.f32 %v1801, %v3053
        %v3055 = vand.u32 %v3054, 4294901760
        %3056 = vmatprep.subr.mxu0 %v3055
        %v3057 = vand.u32 %v1800, 4294901760
        %v3058 = vsub.f32 %v1800, %v3057
        %v3059 = vand.u32 %v3058, 4294901760
        %3060 = vmatpush1.msra.mxu0 %v3059
        %v3061 = vand.u32 %v1804, 4294901760
        %v3062 = vsub.f32 %v1804, %v3061
        %v3063 = vand.u32 %v3062, 4294901760
        %3064 = vmatprep.subr.mxu0 %v3063
        %v3065 = vand.u32 %v1803, 4294901760
        %v3066 = vsub.f32 %v1803, %v3065
        %v3067 = vand.u32 %v3066, 4294901760
        %3068 = vmatpush1.msra.mxu0 %v3067
        %v3069 = vand.u32 %v1807, 4294901760
        %v3070 = vsub.f32 %v1807, %v3069
        %v3071 = vand.u32 %v3070, 4294901760
        %3072 = vmatprep.subr.mxu0 %v3071
        %v3073 = vand.u32 %v1806, 4294901760
        %v3074 = vsub.f32 %v1806, %v3073
        %v3075 = vand.u32 %v3074, 4294901760
        %3076 = vmatpush1.msra.mxu0 %v3075
        %v3077 = vand.u32 %v1810, 4294901760
        %v3078 = vsub.f32 %v1810, %v3077
        %v3079 = vand.u32 %v3078, 4294901760
        %3080 = vmatprep.subr.mxu0 %v3079
        %v3081 = vand.u32 %v1809, 4294901760
        %v3082 = vsub.f32 %v1809, %v3081
        %v3083 = vand.u32 %v3082, 4294901760
        %3084 = vmatpush1.msra.mxu0 %v3083
        %v3085 = vand.u32 %v1813, 4294901760
        %v3086 = vsub.f32 %v1813, %v3085
        %v3087 = vand.u32 %v3086, 4294901760
        %3088 = vmatprep.subr.mxu0 %v3087
        %v3089 = vand.u32 %v1812, 4294901760
        %v3090 = vsub.f32 %v1812, %v3089
        %v3091 = vand.u32 %v3090, 4294901760
        %3092 = vmatpush1.msra.mxu0 %v3091
        %v3093 = vand.u32 %v1816, 4294901760
        %v3094 = vsub.f32 %v1816, %v3093
        %v3095 = vand.u32 %v3094, 4294901760
        %3096 = vmatprep.subr.mxu0 %v3095
        %v3097 = vand.u32 %v1815, 4294901760
        %v3098 = vsub.f32 %v1815, %v3097
        %v3099 = vand.u32 %v3098, 4294901760
        %3100 = vmatpush1.msra.mxu0 %v3099
        %v3101 = vand.u32 %v1819, 4294901760
        %v3102 = vsub.f32 %v1819, %v3101
        %v3103 = vand.u32 %v3102, 4294901760
        %3104 = vmatprep.subr.mxu0 %v3103
        %v3105 = vand.u32 %v1818, 4294901760
        %v3106 = vsub.f32 %v1818, %v3105
        %v3107 = vand.u32 %v3106, 4294901760
        %3108 = vmatpush1.msra.mxu0 %v3107
        %v3109 = vand.u32 %v1822, 4294901760
        %v3110 = vsub.f32 %v1822, %v3109
        %v3111 = vand.u32 %v3110, 4294901760
        %3112 = vmatprep.subr.mxu0 %v3111
        %v3113 = vand.u32 %v1821, 4294901760
        %v3114 = vsub.f32 %v1821, %v3113
        %v3115 = vand.u32 %v3114, 4294901760
        %3116 = vmatpush1.msra.mxu0 %v3115
        %v3117 = vand.u32 %v1721, 4294901760
        %3118 = vmatprep.mubr.f32.mxu0 %v3117
        %v3119 = vand.u32 %v1720, 4294901760
        %3120 = vmatmul.mubr.f32.gmra.mrb[0].mxu0 %v3119
        %v3121 = vpop.f32.mrb[0].mxu0
        %v3122 = vadd.f32 %v2821, %v3121
        %v3123 = vpop.f32.mrb[0].mxu0
        %v3124 = vadd.f32 %v2823, %v3123
        %v3125 = vand.u32 %v1723, 4294901760
        %3126 = vmatprep.mubr.f32.mxu0 %v3125
        %v3127 = vand.u32 %v1722, 4294901760
        %3128 = vmatmul.mubr.f32.gmra.mrb[0].mxu0 %v3127
        %v3129 = vpop.f32.mrb[0].mxu0
        %v3130 = vadd.f32 %v2833, %v3129
        %v3131 = vpop.f32.mrb[0].mxu0
        %v3132 = vadd.f32 %v2835, %v3131
        %v3133 = vand.u32 %v1725, 4294901760
        %3134 = vmatprep.mubr.f32.mxu0 %v3133
        %v3135 = vand.u32 %v1724, 4294901760
        %3136 = vmatmul.mubr.f32.gmra.mrb[0].mxu0 %v3135
        %v3137 = vpop.f32.mrb[0].mxu0
        %v3138 = vadd.f32 %v2845, %v3137
        %v3139 = vpop.f32.mrb[0].mxu0
        %v3140 = vadd.f32 %v2847, %v3139
        %v3141 = vand.u32 %v1727, 4294901760
        %3142 = vmatprep.mubr.f32.mxu0 %v3141
        %v3143 = vand.u32 %v1726, 4294901760
        %3144 = vmatmul.mubr.f32.gmra.mrb[0].mxu0 %v3143
        %v3145 = vpop.f32.mrb[0].mxu0
        %v3146 = vadd.f32 %v2857, %v3145
        %v3147 = vpop.f32.mrb[0].mxu0
        %v3148 = vadd.f32 %v2859, %v3147
        %3149 = vdwg.mxu0
        %v3150 = vand.u32 %v1729, 4294901760
        %3151 = vmatprep.subr.mxu0 %v3150
        %v3152 = vand.u32 %v1728, 4294901760
        %3153 = vmatpush1.msra.mxu0 %v3152
        %v3154 = vand.u32 %v1732, 4294901760
        %3155 = vmatprep.subr.mxu0 %v3154
        %v3156 = vand.u32 %v1731, 4294901760
        %3157 = vmatpush1.msra.mxu0 %v3156
        %v3158 = vand.u32 %v1735, 4294901760
        %3159 = vmatprep.subr.mxu0 %v3158
        %v3160 = vand.u32 %v1734, 4294901760
        %3161 = vmatpush1.msra.mxu0 %v3160
        %v3162 = vand.u32 %v1738, 4294901760
        %3163 = vmatprep.subr.mxu0 %v3162
        %v3164 = vand.u32 %v1737, 4294901760
        %3165 = vmatpush1.msra.mxu0 %v3164
        %v3166 = vand.u32 %v1741, 4294901760
        %3167 = vmatprep.subr.mxu0 %v3166
        %v3168 = vand.u32 %v1740, 4294901760
        %3169 = vmatpush1.msra.mxu0 %v3168
        %v3170 = vand.u32 %v1744, 4294901760
        %3171 = vmatprep.subr.mxu0 %v3170
        %v3172 = vand.u32 %v1743, 4294901760
        %3173 = vmatpush1.msra.mxu0 %v3172
        %v3174 = vand.u32 %v1747, 4294901760
        %3175 = vmatprep.subr.mxu0 %v3174
        %v3176 = vand.u32 %v1746, 4294901760
        %3177 = vmatpush1.msra.mxu0 %v3176
        %v3178 = vand.u32 %v1750, 4294901760
        %3179 = vmatprep.subr.mxu0 %v3178
        %v3180 = vand.u32 %v1749, 4294901760
        %3181 = vmatpush1.msra.mxu0 %v3180
        %v3182 = vand.u32 %v1753, 4294901760
        %3183 = vmatprep.subr.mxu0 %v3182
        %v3184 = vand.u32 %v1752, 4294901760
        %3185 = vmatpush1.msra.mxu0 %v3184
        %v3186 = vand.u32 %v1756, 4294901760
        %3187 = vmatprep.subr.mxu0 %v3186
        %v3188 = vand.u32 %v1755, 4294901760
        %3189 = vmatpush1.msra.mxu0 %v3188
        %v3190 = vand.u32 %v1759, 4294901760
        %3191 = vmatprep.subr.mxu0 %v3190
        %v3192 = vand.u32 %v1758, 4294901760
        %3193 = vmatpush1.msra.mxu0 %v3192
        %v3194 = vand.u32 %v1762, 4294901760
        %3195 = vmatprep.subr.mxu0 %v3194
        %v3196 = vand.u32 %v1761, 4294901760
        %3197 = vmatpush1.msra.mxu0 %v3196
        %v3198 = vand.u32 %v1765, 4294901760
        %3199 = vmatprep.subr.mxu0 %v3198
        %v3200 = vand.u32 %v1764, 4294901760
        %3201 = vmatpush1.msra.mxu0 %v3200
        %v3202 = vand.u32 %v1768, 4294901760
        %3203 = vmatprep.subr.mxu0 %v3202
        %v3204 = vand.u32 %v1767, 4294901760
        %3205 = vmatpush1.msra.mxu0 %v3204
        %v3206 = vand.u32 %v1771, 4294901760
        %3207 = vmatprep.subr.mxu0 %v3206
        %v3208 = vand.u32 %v1770, 4294901760
        %3209 = vmatpush1.msra.mxu0 %v3208
        %v3210 = vand.u32 %v1774, 4294901760
        %3211 = vmatprep.subr.mxu0 %v3210
        %v3212 = vand.u32 %v1773, 4294901760
        %3213 = vmatpush1.msra.mxu0 %v3212
        %v3214 = vand.u32 %v1777, 4294901760
        %3215 = vmatprep.subr.mxu0 %v3214
        %v3216 = vand.u32 %v1776, 4294901760
        %3217 = vmatpush1.msra.mxu0 %v3216
        %v3218 = vand.u32 %v1780, 4294901760
        %3219 = vmatprep.subr.mxu0 %v3218
        %v3220 = vand.u32 %v1779, 4294901760
        %3221 = vmatpush1.msra.mxu0 %v3220
        %v3222 = vand.u32 %v1783, 4294901760
        %3223 = vmatprep.subr.mxu0 %v3222
        %v3224 = vand.u32 %v1782, 4294901760
        %3225 = vmatpush1.msra.mxu0 %v3224
        %v3226 = vand.u32 %v1786, 4294901760
        %3227 = vmatprep.subr.mxu0 %v3226
        %v3228 = vand.u32 %v1785, 4294901760
        %3229 = vmatpush1.msra.mxu0 %v3228
        %v3230 = vand.u32 %v1789, 4294901760
        %3231 = vmatprep.subr.mxu0 %v3230
        %v3232 = vand.u32 %v1788, 4294901760
        %3233 = vmatpush1.msra.mxu0 %v3232
        %v3234 = vand.u32 %v1792, 4294901760
        %3235 = vmatprep.subr.mxu0 %v3234
        %v3236 = vand.u32 %v1791, 4294901760
        %3237 = vmatpush1.msra.mxu0 %v3236
        %v3238 = vand.u32 %v1795, 4294901760
        %3239 = vmatprep.subr.mxu0 %v3238
        %v3240 = vand.u32 %v1794, 4294901760
        %3241 = vmatpush1.msra.mxu0 %v3240
        %v3242 = vand.u32 %v1798, 4294901760
        %3243 = vmatprep.subr.mxu0 %v3242
        %v3244 = vand.u32 %v1797, 4294901760
        %3245 = vmatpush1.msra.mxu0 %v3244
        %v3246 = vand.u32 %v1801, 4294901760
        %3247 = vmatprep.subr.mxu0 %v3246
        %v3248 = vand.u32 %v1800, 4294901760
        %3249 = vmatpush1.msra.mxu0 %v3248
        %v3250 = vand.u32 %v1804, 4294901760
        %3251 = vmatprep.subr.mxu0 %v3250
        %v3252 = vand.u32 %v1803, 4294901760
        %3253 = vmatpush1.msra.mxu0 %v3252
        %v3254 = vand.u32 %v1807, 4294901760
        %3255 = vmatprep.subr.mxu0 %v3254
        %v3256 = vand.u32 %v1806, 4294901760
        %3257 = vmatpush1.msra.mxu0 %v3256
        %v3258 = vand.u32 %v1810, 4294901760
        %3259 = vmatprep.subr.mxu0 %v3258
        %v3260 = vand.u32 %v1809, 4294901760
        %3261 = vmatpush1.msra.mxu0 %v3260
        %v3262 = vand.u32 %v1813, 4294901760
        %3263 = vmatprep.subr.mxu0 %v3262
        %v3264 = vand.u32 %v1812, 4294901760
        %3265 = vmatpush1.msra.mxu0 %v3264
        %v3266 = vand.u32 %v1816, 4294901760
        %3267 = vmatprep.subr.mxu0 %v3266
        %v3268 = vand.u32 %v1815, 4294901760
        %3269 = vmatpush1.msra.mxu0 %v3268
        %v3270 = vand.u32 %v1819, 4294901760
        %3271 = vmatprep.subr.mxu0 %v3270
        %v3272 = vand.u32 %v1818, 4294901760
        %3273 = vmatpush1.msra.mxu0 %v3272
        %v3274 = vand.u32 %v1822, 4294901760
        %3275 = vmatprep.subr.mxu0 %v3274
        %v3276 = vand.u32 %v1821, 4294901760
        %3277 = vmatpush1.msra.mxu0 %v3276
        %v3278 = vand.u32 %v1721, 4294901760
        %3279 = vmatprep.mubr.f32.mxu0 %v3278
        %v3280 = vand.u32 %v1720, 4294901760
        %3281 = vmatmul.mubr.f32.gmra.mrb[0].mxu0 %v3280
        %v3282 = vpop.f32.mrb[0].mxu0
        %v3283 = vadd.f32 %v3122, %v3282
        %v3284 = vpop.f32.mrb[0].mxu0
        %v3285 = vadd.f32 %v3124, %v3284
        %v3286 = vand.u32 %v1723, 4294901760
        %3287 = vmatprep.mubr.f32.mxu0 %v3286
        %v3288 = vand.u32 %v1722, 4294901760
        %3289 = vmatmul.mubr.f32.gmra.mrb[0].mxu0 %v3288
        %v3290 = vpop.f32.mrb[0].mxu0
        %v3291 = vadd.f32 %v3130, %v3290
        %v3292 = vpop.f32.mrb[0].mxu0
        %v3293 = vadd.f32 %v3132, %v3292
        %v3294 = vand.u32 %v1725, 4294901760
        %3295 = vmatprep.mubr.f32.mxu0 %v3294
        %v3296 = vand.u32 %v1724, 4294901760
        %3297 = vmatmul.mubr.f32.gmra.mrb[0].mxu0 %v3296
        %v3298 = vpop.f32.mrb[0].mxu0
        %v3299 = vadd.f32 %v3138, %v3298
        %v3300 = vpop.f32.mrb[0].mxu0
        %v3301 = vadd.f32 %v3140, %v3300
        %v3302 = vand.u32 %v1727, 4294901760
        %3303 = vmatprep.mubr.f32.mxu0 %v3302
        %v3304 = vand.u32 %v1726, 4294901760
        %3305 = vmatmul.mubr.f32.gmra.mrb[0].mxu0 %v3304
        %v3306 = vpop.f32.mrb[0].mxu0
        %v3307 = vadd.f32 %v3146, %v3306
        %v3308 = vpop.f32.mrb[0].mxu0
        %v3309 = vadd.f32 %v3148, %v3308
        %3310 = vdwg.mxu0
        %3311 = vmatprep.subr.mxu0 0.0
        %v3312 = vand.u32 %v1730, 4294901760
        %3313 = vmatpush1.msra.mxu0 %v3312
        %3314 = vmatprep.subr.mxu0 0.0
        %v3315 = vand.u32 %v1733, 4294901760
        %3316 = vmatpush1.msra.mxu0 %v3315
        %3317 = vmatprep.subr.mxu0 0.0
        %v3318 = vand.u32 %v1736, 4294901760
        %3319 = vmatpush1.msra.mxu0 %v3318
        %3320 = vmatprep.subr.mxu0 0.0
        %v3321 = vand.u32 %v1739, 4294901760
        %3322 = vmatpush1.msra.mxu0 %v3321
        %3323 = vmatprep.subr.mxu0 0.0
        %v3324 = vand.u32 %v1742, 4294901760
        %3325 = vmatpush1.msra.mxu0 %v3324
        %3326 = vmatprep.subr.mxu0 0.0
        %v3327 = vand.u32 %v1745, 4294901760
        %3328 = vmatpush1.msra.mxu0 %v3327
        %3329 = vmatprep.subr.mxu0 0.0
        %v3330 = vand.u32 %v1748, 4294901760
        %3331 = vmatpush1.msra.mxu0 %v3330
        %3332 = vmatprep.subr.mxu0 0.0
        %v3333 = vand.u32 %v1751, 4294901760
        %3334 = vmatpush1.msra.mxu0 %v3333
        %3335 = vmatprep.subr.mxu0 0.0
        %v3336 = vand.u32 %v1754, 4294901760
        %3337 = vmatpush1.msra.mxu0 %v3336
        %3338 = vmatprep.subr.mxu0 0.0
        %v3339 = vand.u32 %v1757, 4294901760
        %3340 = vmatpush1.msra.mxu0 %v3339
        %3341 = vmatprep.subr.mxu0 0.0
        %v3342 = vand.u32 %v1760, 4294901760
        %3343 = vmatpush1.msra.mxu0 %v3342
        %3344 = vmatprep.subr.mxu0 0.0
        %v3345 = vand.u32 %v1763, 4294901760
        %3346 = vmatpush1.msra.mxu0 %v3345
        %3347 = vmatprep.subr.mxu0 0.0
        %v3348 = vand.u32 %v1766, 4294901760
        %3349 = vmatpush1.msra.mxu0 %v3348
        %3350 = vmatprep.subr.mxu0 0.0
        %v3351 = vand.u32 %v1769, 4294901760
        %3352 = vmatpush1.msra.mxu0 %v3351
        %3353 = vmatprep.subr.mxu0 0.0
        %v3354 = vand.u32 %v1772, 4294901760
        %3355 = vmatpush1.msra.mxu0 %v3354
        %3356 = vmatprep.subr.mxu0 0.0
        %v3357 = vand.u32 %v1775, 4294901760
        %3358 = vmatpush1.msra.mxu0 %v3357
        %3359 = vmatprep.subr.mxu0 0.0
        %v3360 = vand.u32 %v1778, 4294901760
        %3361 = vmatpush1.msra.mxu0 %v3360
        %3362 = vmatprep.subr.mxu0 0.0
        %v3363 = vand.u32 %v1781, 4294901760
        %3364 = vmatpush1.msra.mxu0 %v3363
        %3365 = vmatprep.subr.mxu0 0.0
        %v3366 = vand.u32 %v1784, 4294901760
        %3367 = vmatpush1.msra.mxu0 %v3366
        %3368 = vmatprep.subr.mxu0 0.0
        %v3369 = vand.u32 %v1787, 4294901760
        %3370 = vmatpush1.msra.mxu0 %v3369
        %3371 = vmatprep.subr.mxu0 0.0
        %v3372 = vand.u32 %v1790, 4294901760
        %3373 = vmatpush1.msra.mxu0 %v3372
        %3374 = vmatprep.subr.mxu0 0.0
        %v3375 = vand.u32 %v1793, 4294901760
        %3376 = vmatpush1.msra.mxu0 %v3375
        %3377 = vmatprep.subr.mxu0 0.0
        %v3378 = vand.u32 %v1796, 4294901760
        %3379 = vmatpush1.msra.mxu0 %v3378
        %3380 = vmatprep.subr.mxu0 0.0
        %v3381 = vand.u32 %v1799, 4294901760
        %3382 = vmatpush1.msra.mxu0 %v3381
        %3383 = vmatprep.subr.mxu0 0.0
        %v3384 = vand.u32 %v1802, 4294901760
        %3385 = vmatpush1.msra.mxu0 %v3384
        %3386 = vmatprep.subr.mxu0 0.0
        %v3387 = vand.u32 %v1805, 4294901760
        %3388 = vmatpush1.msra.mxu0 %v3387
        %3389 = vmatprep.subr.mxu0 0.0
        %v3390 = vand.u32 %v1808, 4294901760
        %3391 = vmatpush1.msra.mxu0 %v3390
        %3392 = vmatprep.subr.mxu0 0.0
        %v3393 = vand.u32 %v1811, 4294901760
        %3394 = vmatpush1.msra.mxu0 %v3393
        %3395 = vmatprep.subr.mxu0 0.0
        %v3396 = vand.u32 %v1814, 4294901760
        %3397 = vmatpush1.msra.mxu0 %v3396
        %3398 = vmatprep.subr.mxu0 0.0
        %v3399 = vand.u32 %v1817, 4294901760
        %3400 = vmatpush1.msra.mxu0 %v3399
        %3401 = vmatprep.subr.mxu0 0.0
        %v3402 = vand.u32 %v1820, 4294901760
        %3403 = vmatpush1.msra.mxu0 %v3402
        %3404 = vmatprep.subr.mxu0 0.0
        %v3405 = vand.u32 %v1823, 4294901760
        %3406 = vmatpush1.msra.mxu0 %v3405
        %v3407 = vand.u32 %v1721, 4294901760
        %v3408 = vsub.f32 %v1721, %v3407
        %v3409 = vand.u32 %v3408, 4294901760
        %v3410 = vsub.f32 %v3408, %v3409
        %v3411 = vand.u32 %v3410, 4294901760
        %3412 = vmatprep.mubr.f32.mxu0 %v3411
        %v3413 = vand.u32 %v1720, 4294901760
        %v3414 = vsub.f32 %v1720, %v3413
        %v3415 = vand.u32 %v3414, 4294901760
        %v3416 = vsub.f32 %v3414, %v3415
        %v3417 = vand.u32 %v3416, 4294901760
        %3418 = vmatmul.mubr.f32.gmra.mrb[0].mxu0 %v3417
        %v3419 = vpop.f32.mrb[0].mxu0
        %v3420 = vadd.f32 %v1837, %v3419
        %v3421 = vpop.f32.mrb[0].mxu0
        %v3422 = vand.u32 %v1723, 4294901760
        %v3423 = vsub.f32 %v1723, %v3422
        %v3424 = vand.u32 %v3423, 4294901760
        %v3425 = vsub.f32 %v3423, %v3424
        %v3426 = vand.u32 %v3425, 4294901760
        %3427 = vmatprep.mubr.f32.mxu0 %v3426
        %v3428 = vand.u32 %v1722, 4294901760
        %v3429 = vsub.f32 %v1722, %v3428
        %v3430 = vand.u32 %v3429, 4294901760
        %v3431 = vsub.f32 %v3429, %v3430
        %v3432 = vand.u32 %v3431, 4294901760
        %3433 = vmatmul.mubr.f32.gmra.mrb[0].mxu0 %v3432
        %v3434 = vpop.f32.mrb[0].mxu0
        %v3435 = vadd.f32 %v1837, %v3434
        %v3436 = vpop.f32.mrb[0].mxu0
        %v3437 = vand.u32 %v1725, 4294901760
        %v3438 = vsub.f32 %v1725, %v3437
        %v3439 = vand.u32 %v3438, 4294901760
        %v3440 = vsub.f32 %v3438, %v3439
        %v3441 = vand.u32 %v3440, 4294901760
        %3442 = vmatprep.mubr.f32.mxu0 %v3441
        %v3443 = vand.u32 %v1724, 4294901760
        %v3444 = vsub.f32 %v1724, %v3443
        %v3445 = vand.u32 %v3444, 4294901760
        %v3446 = vsub.f32 %v3444, %v3445
        %v3447 = vand.u32 %v3446, 4294901760
        %3448 = vmatmul.mubr.f32.gmra.mrb[0].mxu0 %v3447
        %v3449 = vpop.f32.mrb[0].mxu0
        %v3450 = vadd.f32 %v1837, %v3449
        %v3451 = vpop.f32.mrb[0].mxu0
        %v3452 = vand.u32 %v1727, 4294901760
        %v3453 = vsub.f32 %v1727, %v3452
        %v3454 = vand.u32 %v3453, 4294901760
        %v3455 = vsub.f32 %v3453, %v3454
        %v3456 = vand.u32 %v3455, 4294901760
        %3457 = vmatprep.mubr.f32.mxu0 %v3456
        %v3458 = vand.u32 %v1726, 4294901760
        %v3459 = vsub.f32 %v1726, %v3458
        %v3460 = vand.u32 %v3459, 4294901760
        %v3461 = vsub.f32 %v3459, %v3460
        %v3462 = vand.u32 %v3461, 4294901760
        %3463 = vmatmul.mubr.f32.gmra.mrb[0].mxu0 %v3462
        %v3464 = vpop.f32.mrb[0].mxu0
        %v3465 = vadd.f32 %v1837, %v3464
        %v3466 = vpop.f32.mrb[0].mxu0
        %3467 = vdwg.mxu0
        %3468 = vmatprep.subr.mxu0 0.0
        %v3469 = vand.u32 %v1730, 4294901760
        %v3470 = vsub.f32 %v1730, %v3469
        %v3471 = vand.u32 %v3470, 4294901760
        %v3472 = vsub.f32 %v3470, %v3471
        %v3473 = vand.u32 %v3472, 4294901760
        %3474 = vmatpush1.msra.mxu0 %v3473
        %3475 = vmatprep.subr.mxu0 0.0
        %v3476 = vand.u32 %v1733, 4294901760
        %v3477 = vsub.f32 %v1733, %v3476
        %v3478 = vand.u32 %v3477, 4294901760
        %v3479 = vsub.f32 %v3477, %v3478
        %v3480 = vand.u32 %v3479, 4294901760
        %3481 = vmatpush1.msra.mxu0 %v3480
        %3482 = vmatprep.subr.mxu0 0.0
        %v3483 = vand.u32 %v1736, 4294901760
        %v3484 = vsub.f32 %v1736, %v3483
        %v3485 = vand.u32 %v3484, 4294901760
        %v3486 = vsub.f32 %v3484, %v3485
        %v3487 = vand.u32 %v3486, 4294901760
        %3488 = vmatpush1.msra.mxu0 %v3487
        %3489 = vmatprep.subr.mxu0 0.0
        %v3490 = vand.u32 %v1739, 4294901760
        %v3491 = vsub.f32 %v1739, %v3490
        %v3492 = vand.u32 %v3491, 4294901760
        %v3493 = vsub.f32 %v3491, %v3492
        %v3494 = vand.u32 %v3493, 4294901760
        %3495 = vmatpush1.msra.mxu0 %v3494
        %3496 = vmatprep.subr.mxu0 0.0
        %v3497 = vand.u32 %v1742, 4294901760
        %v3498 = vsub.f32 %v1742, %v3497
        %v3499 = vand.u32 %v3498, 4294901760
        %v3500 = vsub.f32 %v3498, %v3499
        %v3501 = vand.u32 %v3500, 4294901760
        %3502 = vmatpush1.msra.mxu0 %v3501
        %3503 = vmatprep.subr.mxu0 0.0
        %v3504 = vand.u32 %v1745, 4294901760
        %v3505 = vsub.f32 %v1745, %v3504
        %v3506 = vand.u32 %v3505, 4294901760
        %v3507 = vsub.f32 %v3505, %v3506
        %v3508 = vand.u32 %v3507, 4294901760
        %3509 = vmatpush1.msra.mxu0 %v3508
        %3510 = vmatprep.subr.mxu0 0.0
        %v3511 = vand.u32 %v1748, 4294901760
        %v3512 = vsub.f32 %v1748, %v3511
        %v3513 = vand.u32 %v3512, 4294901760
        %v3514 = vsub.f32 %v3512, %v3513
        %v3515 = vand.u32 %v3514, 4294901760
        %3516 = vmatpush1.msra.mxu0 %v3515
        %3517 = vmatprep.subr.mxu0 0.0
        %v3518 = vand.u32 %v1751, 4294901760
        %v3519 = vsub.f32 %v1751, %v3518
        %v3520 = vand.u32 %v3519, 4294901760
        %v3521 = vsub.f32 %v3519, %v3520
        %v3522 = vand.u32 %v3521, 4294901760
        %3523 = vmatpush1.msra.mxu0 %v3522
        %3524 = vmatprep.subr.mxu0 0.0
        %v3525 = vand.u32 %v1754, 4294901760
        %v3526 = vsub.f32 %v1754, %v3525
        %v3527 = vand.u32 %v3526, 4294901760
        %v3528 = vsub.f32 %v3526, %v3527
        %v3529 = vand.u32 %v3528, 4294901760
        %3530 = vmatpush1.msra.mxu0 %v3529
        %3531 = vmatprep.subr.mxu0 0.0
        %v3532 = vand.u32 %v1757, 4294901760
        %v3533 = vsub.f32 %v1757, %v3532
        %v3534 = vand.u32 %v3533, 4294901760
        %v3535 = vsub.f32 %v3533, %v3534
        %v3536 = vand.u32 %v3535, 4294901760
        %3537 = vmatpush1.msra.mxu0 %v3536
        %3538 = vmatprep.subr.mxu0 0.0
        %v3539 = vand.u32 %v1760, 4294901760
        %v3540 = vsub.f32 %v1760, %v3539
        %v3541 = vand.u32 %v3540, 4294901760
        %v3542 = vsub.f32 %v3540, %v3541
        %v3543 = vand.u32 %v3542, 4294901760
        %3544 = vmatpush1.msra.mxu0 %v3543
        %3545 = vmatprep.subr.mxu0 0.0
        %v3546 = vand.u32 %v1763, 4294901760
        %v3547 = vsub.f32 %v1763, %v3546
        %v3548 = vand.u32 %v3547, 4294901760
        %v3549 = vsub.f32 %v3547, %v3548
        %v3550 = vand.u32 %v3549, 4294901760
        %3551 = vmatpush1.msra.mxu0 %v3550
        %3552 = vmatprep.subr.mxu0 0.0
        %v3553 = vand.u32 %v1766, 4294901760
        %v3554 = vsub.f32 %v1766, %v3553
        %v3555 = vand.u32 %v3554, 4294901760
        %v3556 = vsub.f32 %v3554, %v3555
        %v3557 = vand.u32 %v3556, 4294901760
        %3558 = vmatpush1.msra.mxu0 %v3557
        %3559 = vmatprep.subr.mxu0 0.0
        %v3560 = vand.u32 %v1769, 4294901760
        %v3561 = vsub.f32 %v1769, %v3560
        %v3562 = vand.u32 %v3561, 4294901760
        %v3563 = vsub.f32 %v3561, %v3562
        %v3564 = vand.u32 %v3563, 4294901760
        %3565 = vmatpush1.msra.mxu0 %v3564
        %3566 = vmatprep.subr.mxu0 0.0
        %v3567 = vand.u32 %v1772, 4294901760
        %v3568 = vsub.f32 %v1772, %v3567
        %v3569 = vand.u32 %v3568, 4294901760
        %v3570 = vsub.f32 %v3568, %v3569
        %v3571 = vand.u32 %v3570, 4294901760
        %3572 = vmatpush1.msra.mxu0 %v3571
        %3573 = vmatprep.subr.mxu0 0.0
        %v3574 = vand.u32 %v1775, 4294901760
        %v3575 = vsub.f32 %v1775, %v3574
        %v3576 = vand.u32 %v3575, 4294901760
        %v3577 = vsub.f32 %v3575, %v3576
        %v3578 = vand.u32 %v3577, 4294901760
        %3579 = vmatpush1.msra.mxu0 %v3578
        %3580 = vmatprep.subr.mxu0 0.0
        %v3581 = vand.u32 %v1778, 4294901760
        %v3582 = vsub.f32 %v1778, %v3581
        %v3583 = vand.u32 %v3582, 4294901760
        %v3584 = vsub.f32 %v3582, %v3583
        %v3585 = vand.u32 %v3584, 4294901760
        %3586 = vmatpush1.msra.mxu0 %v3585
        %3587 = vmatprep.subr.mxu0 0.0
        %v3588 = vand.u32 %v1781, 4294901760
        %v3589 = vsub.f32 %v1781, %v3588
        %v3590 = vand.u32 %v3589, 4294901760
        %v3591 = vsub.f32 %v3589, %v3590
        %v3592 = vand.u32 %v3591, 4294901760
        %3593 = vmatpush1.msra.mxu0 %v3592
        %3594 = vmatprep.subr.mxu0 0.0
        %v3595 = vand.u32 %v1784, 4294901760
        %v3596 = vsub.f32 %v1784, %v3595
        %v3597 = vand.u32 %v3596, 4294901760
        %v3598 = vsub.f32 %v3596, %v3597
        %v3599 = vand.u32 %v3598, 4294901760
        %3600 = vmatpush1.msra.mxu0 %v3599
        %3601 = vmatprep.subr.mxu0 0.0
        %v3602 = vand.u32 %v1787, 4294901760
        %v3603 = vsub.f32 %v1787, %v3602
        %v3604 = vand.u32 %v3603, 4294901760
        %v3605 = vsub.f32 %v3603, %v3604
        %v3606 = vand.u32 %v3605, 4294901760
        %3607 = vmatpush1.msra.mxu0 %v3606
        %3608 = vmatprep.subr.mxu0 0.0
        %v3609 = vand.u32 %v1790, 4294901760
        %v3610 = vsub.f32 %v1790, %v3609
        %v3611 = vand.u32 %v3610, 4294901760
        %v3612 = vsub.f32 %v3610, %v3611
        %v3613 = vand.u32 %v3612, 4294901760
        %3614 = vmatpush1.msra.mxu0 %v3613
        %3615 = vmatprep.subr.mxu0 0.0
        %v3616 = vand.u32 %v1793, 4294901760
        %v3617 = vsub.f32 %v1793, %v3616
        %v3618 = vand.u32 %v3617, 4294901760
        %v3619 = vsub.f32 %v3617, %v3618
        %v3620 = vand.u32 %v3619, 4294901760
        %3621 = vmatpush1.msra.mxu0 %v3620
        %3622 = vmatprep.subr.mxu0 0.0
        %v3623 = vand.u32 %v1796, 4294901760
        %v3624 = vsub.f32 %v1796, %v3623
        %v3625 = vand.u32 %v3624, 4294901760
        %v3626 = vsub.f32 %v3624, %v3625
        %v3627 = vand.u32 %v3626, 4294901760
        %3628 = vmatpush1.msra.mxu0 %v3627
        %3629 = vmatprep.subr.mxu0 0.0
        %v3630 = vand.u32 %v1799, 4294901760
        %v3631 = vsub.f32 %v1799, %v3630
        %v3632 = vand.u32 %v3631, 4294901760
        %v3633 = vsub.f32 %v3631, %v3632
        %v3634 = vand.u32 %v3633, 4294901760
        %3635 = vmatpush1.msra.mxu0 %v3634
        %3636 = vmatprep.subr.mxu0 0.0
        %v3637 = vand.u32 %v1802, 4294901760
        %v3638 = vsub.f32 %v1802, %v3637
        %v3639 = vand.u32 %v3638, 4294901760
        %v3640 = vsub.f32 %v3638, %v3639
        %v3641 = vand.u32 %v3640, 4294901760
        %3642 = vmatpush1.msra.mxu0 %v3641
        %3643 = vmatprep.subr.mxu0 0.0
        %v3644 = vand.u32 %v1805, 4294901760
        %v3645 = vsub.f32 %v1805, %v3644
        %v3646 = vand.u32 %v3645, 4294901760
        %v3647 = vsub.f32 %v3645, %v3646
        %v3648 = vand.u32 %v3647, 4294901760
        %3649 = vmatpush1.msra.mxu0 %v3648
        %3650 = vmatprep.subr.mxu0 0.0
        %v3651 = vand.u32 %v1808, 4294901760
        %v3652 = vsub.f32 %v1808, %v3651
        %v3653 = vand.u32 %v3652, 4294901760
        %v3654 = vsub.f32 %v3652, %v3653
        %v3655 = vand.u32 %v3654, 4294901760
        %3656 = vmatpush1.msra.mxu0 %v3655
        %3657 = vmatprep.subr.mxu0 0.0
        %v3658 = vand.u32 %v1811, 4294901760
        %v3659 = vsub.f32 %v1811, %v3658
        %v3660 = vand.u32 %v3659, 4294901760
        %v3661 = vsub.f32 %v3659, %v3660
        %v3662 = vand.u32 %v3661, 4294901760
        %3663 = vmatpush1.msra.mxu0 %v3662
        %3664 = vmatprep.subr.mxu0 0.0
        %v3665 = vand.u32 %v1814, 4294901760
        %v3666 = vsub.f32 %v1814, %v3665
        %v3667 = vand.u32 %v3666, 4294901760
        %v3668 = vsub.f32 %v3666, %v3667
        %v3669 = vand.u32 %v3668, 4294901760
        %3670 = vmatpush1.msra.mxu0 %v3669
        %3671 = vmatprep.subr.mxu0 0.0
        %v3672 = vand.u32 %v1817, 4294901760
        %v3673 = vsub.f32 %v1817, %v3672
        %v3674 = vand.u32 %v3673, 4294901760
        %v3675 = vsub.f32 %v3673, %v3674
        %v3676 = vand.u32 %v3675, 4294901760
        %3677 = vmatpush1.msra.mxu0 %v3676
        %3678 = vmatprep.subr.mxu0 0.0
        %v3679 = vand.u32 %v1820, 4294901760
        %v3680 = vsub.f32 %v1820, %v3679
        %v3681 = vand.u32 %v3680, 4294901760
        %v3682 = vsub.f32 %v3680, %v3681
        %v3683 = vand.u32 %v3682, 4294901760
        %3684 = vmatpush1.msra.mxu0 %v3683
        %3685 = vmatprep.subr.mxu0 0.0
        %v3686 = vand.u32 %v1823, 4294901760
        %v3687 = vsub.f32 %v1823, %v3686
        %v3688 = vand.u32 %v3687, 4294901760
        %v3689 = vsub.f32 %v3687, %v3688
        %v3690 = vand.u32 %v3689, 4294901760
        %3691 = vmatpush1.msra.mxu0 %v3690
        %v3692 = vand.u32 %v1721, 4294901760
        %3693 = vmatprep.mubr.f32.mxu0 %v3692
        %v3694 = vand.u32 %v1720, 4294901760
        %3695 = vmatmul.mubr.f32.gmra.mrb[0].mxu0 %v3694
        %v3696 = vpop.f32.mrb[0].mxu0
        %v3697 = vadd.f32 %v3420, %v3696
        %v3698 = vpop.f32.mrb[0].mxu0
        %v3699 = vand.u32 %v1723, 4294901760
        %3700 = vmatprep.mubr.f32.mxu0 %v3699
        %v3701 = vand.u32 %v1722, 4294901760
        %3702 = vmatmul.mubr.f32.gmra.mrb[0].mxu0 %v3701
        %v3703 = vpop.f32.mrb[0].mxu0
        %v3704 = vadd.f32 %v3435, %v3703
        %v3705 = vpop.f32.mrb[0].mxu0
        %v3706 = vand.u32 %v1725, 4294901760
        %3707 = vmatprep.mubr.f32.mxu0 %v3706
        %v3708 = vand.u32 %v1724, 4294901760
        %3709 = vmatmul.mubr.f32.gmra.mrb[0].mxu0 %v3708
        %v3710 = vpop.f32.mrb[0].mxu0
        %v3711 = vadd.f32 %v3450, %v3710
        %v3712 = vpop.f32.mrb[0].mxu0
        %v3713 = vand.u32 %v1727, 4294901760
        %3714 = vmatprep.mubr.f32.mxu0 %v3713
        %v3715 = vand.u32 %v1726, 4294901760
        %3716 = vmatmul.mubr.f32.gmra.mrb[0].mxu0 %v3715
        %v3717 = vpop.f32.mrb[0].mxu0
        %v3718 = vadd.f32 %v3465, %v3717
        %v3719 = vpop.f32.mrb[0].mxu0
        %3720 = vdwg.mxu0
        %3721 = vmatprep.subr.mxu0 0.0
        %v3722 = vand.u32 %v1730, 4294901760
        %v3723 = vsub.f32 %v1730, %v3722
        %3724 = vmatpush1.msra.mxu0 %v3723
        %3725 = vmatprep.subr.mxu0 0.0
        %v3726 = vand.u32 %v1733, 4294901760
        %v3727 = vsub.f32 %v1733, %v3726
        %3728 = vmatpush1.msra.mxu0 %v3727
        %3729 = vmatprep.subr.mxu0 0.0
        %v3730 = vand.u32 %v1736, 4294901760
        %v3731 = vsub.f32 %v1736, %v3730
        %3732 = vmatpush1.msra.mxu0 %v3731
        %3733 = vmatprep.subr.mxu0 0.0
        %v3734 = vand.u32 %v1739, 4294901760
        %v3735 = vsub.f32 %v1739, %v3734
        %3736 = vmatpush1.msra.mxu0 %v3735
        %3737 = vmatprep.subr.mxu0 0.0
        %v3738 = vand.u32 %v1742, 4294901760
        %v3739 = vsub.f32 %v1742, %v3738
        %3740 = vmatpush1.msra.mxu0 %v3739
        %3741 = vmatprep.subr.mxu0 0.0
        %v3742 = vand.u32 %v1745, 4294901760
        %v3743 = vsub.f32 %v1745, %v3742
        %3744 = vmatpush1.msra.mxu0 %v3743
        %3745 = vmatprep.subr.mxu0 0.0
        %v3746 = vand.u32 %v1748, 4294901760
        %v3747 = vsub.f32 %v1748, %v3746
        %3748 = vmatpush1.msra.mxu0 %v3747
        %3749 = vmatprep.subr.mxu0 0.0
        %v3750 = vand.u32 %v1751, 4294901760
        %v3751 = vsub.f32 %v1751, %v3750
        %3752 = vmatpush1.msra.mxu0 %v3751
        %3753 = vmatprep.subr.mxu0 0.0
        %v3754 = vand.u32 %v1754, 4294901760
        %v3755 = vsub.f32 %v1754, %v3754
        %3756 = vmatpush1.msra.mxu0 %v3755
        %3757 = vmatprep.subr.mxu0 0.0
        %v3758 = vand.u32 %v1757, 4294901760
        %v3759 = vsub.f32 %v1757, %v3758
        %3760 = vmatpush1.msra.mxu0 %v3759
        %3761 = vmatprep.subr.mxu0 0.0
        %v3762 = vand.u32 %v1760, 4294901760
        %v3763 = vsub.f32 %v1760, %v3762
        %3764 = vmatpush1.msra.mxu0 %v3763
        %3765 = vmatprep.subr.mxu0 0.0
        %v3766 = vand.u32 %v1763, 4294901760
        %v3767 = vsub.f32 %v1763, %v3766
        %3768 = vmatpush1.msra.mxu0 %v3767
        %3769 = vmatprep.subr.mxu0 0.0
        %v3770 = vand.u32 %v1766, 4294901760
        %v3771 = vsub.f32 %v1766, %v3770
        %3772 = vmatpush1.msra.mxu0 %v3771
        %3773 = vmatprep.subr.mxu0 0.0
        %v3774 = vand.u32 %v1769, 4294901760
        %v3775 = vsub.f32 %v1769, %v3774
        %3776 = vmatpush1.msra.mxu0 %v3775
        %3777 = vmatprep.subr.mxu0 0.0
        %v3778 = vand.u32 %v1772, 4294901760
        %v3779 = vsub.f32 %v1772, %v3778
        %3780 = vmatpush1.msra.mxu0 %v3779
        %3781 = vmatprep.subr.mxu0 0.0
        %v3782 = vand.u32 %v1775, 4294901760
        %v3783 = vsub.f32 %v1775, %v3782
        %3784 = vmatpush1.msra.mxu0 %v3783
        %3785 = vmatprep.subr.mxu0 0.0
        %v3786 = vand.u32 %v1778, 4294901760
        %v3787 = vsub.f32 %v1778, %v3786
        %3788 = vmatpush1.msra.mxu0 %v3787
        %3789 = vmatprep.subr.mxu0 0.0
        %v3790 = vand.u32 %v1781, 4294901760
        %v3791 = vsub.f32 %v1781, %v3790
        %3792 = vmatpush1.msra.mxu0 %v3791
        %3793 = vmatprep.subr.mxu0 0.0
        %v3794 = vand.u32 %v1784, 4294901760
        %v3795 = vsub.f32 %v1784, %v3794
        %3796 = vmatpush1.msra.mxu0 %v3795
        %3797 = vmatprep.subr.mxu0 0.0
        %v3798 = vand.u32 %v1787, 4294901760
        %v3799 = vsub.f32 %v1787, %v3798
        %3800 = vmatpush1.msra.mxu0 %v3799
        %3801 = vmatprep.subr.mxu0 0.0
        %v3802 = vand.u32 %v1790, 4294901760
        %v3803 = vsub.f32 %v1790, %v3802
        %3804 = vmatpush1.msra.mxu0 %v3803
        %3805 = vmatprep.subr.mxu0 0.0
        %v3806 = vand.u32 %v1793, 4294901760
        %v3807 = vsub.f32 %v1793, %v3806
        %3808 = vmatpush1.msra.mxu0 %v3807
        %3809 = vmatprep.subr.mxu0 0.0
        %v3810 = vand.u32 %v1796, 4294901760
        %v3811 = vsub.f32 %v1796, %v3810
        %3812 = vmatpush1.msra.mxu0 %v3811
        %3813 = vmatprep.subr.mxu0 0.0
        %v3814 = vand.u32 %v1799, 4294901760
        %v3815 = vsub.f32 %v1799, %v3814
        %3816 = vmatpush1.msra.mxu0 %v3815
        %3817 = vmatprep.subr.mxu0 0.0
        %v3818 = vand.u32 %v1802, 4294901760
        %v3819 = vsub.f32 %v1802, %v3818
        %3820 = vmatpush1.msra.mxu0 %v3819
        %3821 = vmatprep.subr.mxu0 0.0
        %v3822 = vand.u32 %v1805, 4294901760
        %v3823 = vsub.f32 %v1805, %v3822
        %3824 = vmatpush1.msra.mxu0 %v3823
        %3825 = vmatprep.subr.mxu0 0.0
        %v3826 = vand.u32 %v1808, 4294901760
        %v3827 = vsub.f32 %v1808, %v3826
        %3828 = vmatpush1.msra.mxu0 %v3827
        %3829 = vmatprep.subr.mxu0 0.0
        %v3830 = vand.u32 %v1811, 4294901760
        %v3831 = vsub.f32 %v1811, %v3830
        %3832 = vmatpush1.msra.mxu0 %v3831
        %3833 = vmatprep.subr.mxu0 0.0
        %v3834 = vand.u32 %v1814, 4294901760
        %v3835 = vsub.f32 %v1814, %v3834
        %3836 = vmatpush1.msra.mxu0 %v3835
        %3837 = vmatprep.subr.mxu0 0.0
        %v3838 = vand.u32 %v1817, 4294901760
        %v3839 = vsub.f32 %v1817, %v3838
        %3840 = vmatpush1.msra.mxu0 %v3839
        %3841 = vmatprep.subr.mxu0 0.0
        %v3842 = vand.u32 %v1820, 4294901760
        %v3843 = vsub.f32 %v1820, %v3842
        %3844 = vmatpush1.msra.mxu0 %v3843
        %3845 = vmatprep.subr.mxu0 0.0
        %v3846 = vand.u32 %v1823, 4294901760
        %v3847 = vsub.f32 %v1823, %v3846
        %3848 = vmatpush1.msra.mxu0 %v3847
        %v3849 = vand.u32 %v1721, 4294901760
        %v3850 = vsub.f32 %v1721, %v3849
        %3851 = vmatprep.mubr.f32.mxu0 %v3850
        %v3852 = vand.u32 %v1720, 4294901760
        %v3853 = vsub.f32 %v1720, %v3852
        %3854 = vmatmul.mubr.f32.gmra.mrb[0].mxu0 %v3853
        %v3855 = vpop.f32.mrb[0].mxu0
        %v3856 = vadd.f32 %v3697, %v3855
        %v3857 = vpop.f32.mrb[0].mxu0
        %v3858 = vand.u32 %v1723, 4294901760
        %v3859 = vsub.f32 %v1723, %v3858
        %3860 = vmatprep.mubr.f32.mxu0 %v3859
        %v3861 = vand.u32 %v1722, 4294901760
        %v3862 = vsub.f32 %v1722, %v3861
        %3863 = vmatmul.mubr.f32.gmra.mrb[0].mxu0 %v3862
        %v3864 = vpop.f32.mrb[0].mxu0
        %v3865 = vadd.f32 %v3704, %v3864
        %v3866 = vpop.f32.mrb[0].mxu0
        %v3867 = vand.u32 %v1725, 4294901760
        %v3868 = vsub.f32 %v1725, %v3867
        %3869 = vmatprep.mubr.f32.mxu0 %v3868
        %v3870 = vand.u32 %v1724, 4294901760
        %v3871 = vsub.f32 %v1724, %v3870
        %3872 = vmatmul.mubr.f32.gmra.mrb[0].mxu0 %v3871
        %v3873 = vpop.f32.mrb[0].mxu0
        %v3874 = vadd.f32 %v3711, %v3873
        %v3875 = vpop.f32.mrb[0].mxu0
        %v3876 = vand.u32 %v1727, 4294901760
        %v3877 = vsub.f32 %v1727, %v3876
        %3878 = vmatprep.mubr.f32.mxu0 %v3877
        %v3879 = vand.u32 %v1726, 4294901760
        %v3880 = vsub.f32 %v1726, %v3879
        %3881 = vmatmul.mubr.f32.gmra.mrb[0].mxu0 %v3880
        %v3882 = vpop.f32.mrb[0].mxu0
        %v3883 = vadd.f32 %v3718, %v3882
        %v3884 = vpop.f32.mrb[0].mxu0
        %3885 = vdwg.mxu0
        %3886 = vmatprep.subr.mxu0 0.0
        %v3887 = vand.u32 %v1730, 4294901760
        %3888 = vmatpush1.msra.mxu0 %v3887
        %3889 = vmatprep.subr.mxu0 0.0
        %v3890 = vand.u32 %v1733, 4294901760
        %3891 = vmatpush1.msra.mxu0 %v3890
        %3892 = vmatprep.subr.mxu0 0.0
        %v3893 = vand.u32 %v1736, 4294901760
        %3894 = vmatpush1.msra.mxu0 %v3893
        %3895 = vmatprep.subr.mxu0 0.0
        %v3896 = vand.u32 %v1739, 4294901760
        %3897 = vmatpush1.msra.mxu0 %v3896
        %3898 = vmatprep.subr.mxu0 0.0
        %v3899 = vand.u32 %v1742, 4294901760
        %3900 = vmatpush1.msra.mxu0 %v3899
        %3901 = vmatprep.subr.mxu0 0.0
        %v3902 = vand.u32 %v1745, 4294901760
        %3903 = vmatpush1.msra.mxu0 %v3902
        %3904 = vmatprep.subr.mxu0 0.0
        %v3905 = vand.u32 %v1748, 4294901760
        %3906 = vmatpush1.msra.mxu0 %v3905
        %3907 = vmatprep.subr.mxu0 0.0
        %v3908 = vand.u32 %v1751, 4294901760
        %3909 = vmatpush1.msra.mxu0 %v3908
        %3910 = vmatprep.subr.mxu0 0.0
        %v3911 = vand.u32 %v1754, 4294901760
        %3912 = vmatpush1.msra.mxu0 %v3911
        %3913 = vmatprep.subr.mxu0 0.0
        %v3914 = vand.u32 %v1757, 4294901760
        %3915 = vmatpush1.msra.mxu0 %v3914
        %3916 = vmatprep.subr.mxu0 0.0
        %v3917 = vand.u32 %v1760, 4294901760
        %3918 = vmatpush1.msra.mxu0 %v3917
        %3919 = vmatprep.subr.mxu0 0.0
        %v3920 = vand.u32 %v1763, 4294901760
        %3921 = vmatpush1.msra.mxu0 %v3920
        %3922 = vmatprep.subr.mxu0 0.0
        %v3923 = vand.u32 %v1766, 4294901760
        %3924 = vmatpush1.msra.mxu0 %v3923
        %3925 = vmatprep.subr.mxu0 0.0
        %v3926 = vand.u32 %v1769, 4294901760
        %3927 = vmatpush1.msra.mxu0 %v3926
        %3928 = vmatprep.subr.mxu0 0.0
        %v3929 = vand.u32 %v1772, 4294901760
        %3930 = vmatpush1.msra.mxu0 %v3929
        %3931 = vmatprep.subr.mxu0 0.0
        %v3932 = vand.u32 %v1775, 4294901760
        %3933 = vmatpush1.msra.mxu0 %v3932
        %3934 = vmatprep.subr.mxu0 0.0
        %v3935 = vand.u32 %v1778, 4294901760
        %3936 = vmatpush1.msra.mxu0 %v3935
        %3937 = vmatprep.subr.mxu0 0.0
        %v3938 = vand.u32 %v1781, 4294901760
        %3939 = vmatpush1.msra.mxu0 %v3938
        %3940 = vmatprep.subr.mxu0 0.0
        %v3941 = vand.u32 %v1784, 4294901760
        %3942 = vmatpush1.msra.mxu0 %v3941
        %3943 = vmatprep.subr.mxu0 0.0
        %v3944 = vand.u32 %v1787, 4294901760
        %3945 = vmatpush1.msra.mxu0 %v3944
        %3946 = vmatprep.subr.mxu0 0.0
        %v3947 = vand.u32 %v1790, 4294901760
        %3948 = vmatpush1.msra.mxu0 %v3947
        %3949 = vmatprep.subr.mxu0 0.0
        %v3950 = vand.u32 %v1793, 4294901760
        %3951 = vmatpush1.msra.mxu0 %v3950
        %3952 = vmatprep.subr.mxu0 0.0
        %v3953 = vand.u32 %v1796, 4294901760
        %3954 = vmatpush1.msra.mxu0 %v3953
        %3955 = vmatprep.subr.mxu0 0.0
        %v3956 = vand.u32 %v1799, 4294901760
        %3957 = vmatpush1.msra.mxu0 %v3956
        %3958 = vmatprep.subr.mxu0 0.0
        %v3959 = vand.u32 %v1802, 4294901760
        %3960 = vmatpush1.msra.mxu0 %v3959
        %3961 = vmatprep.subr.mxu0 0.0
        %v3962 = vand.u32 %v1805, 4294901760
        %3963 = vmatpush1.msra.mxu0 %v3962
        %3964 = vmatprep.subr.mxu0 0.0
        %v3965 = vand.u32 %v1808, 4294901760
        %3966 = vmatpush1.msra.mxu0 %v3965
        %3967 = vmatprep.subr.mxu0 0.0
        %v3968 = vand.u32 %v1811, 4294901760
        %3969 = vmatpush1.msra.mxu0 %v3968
        %3970 = vmatprep.subr.mxu0 0.0
        %v3971 = vand.u32 %v1814, 4294901760
        %3972 = vmatpush1.msra.mxu0 %v3971
        %3973 = vmatprep.subr.mxu0 0.0
        %v3974 = vand.u32 %v1817, 4294901760
        %3975 = vmatpush1.msra.mxu0 %v3974
        %3976 = vmatprep.subr.mxu0 0.0
        %v3977 = vand.u32 %v1820, 4294901760
        %3978 = vmatpush1.msra.mxu0 %v3977
        %3979 = vmatprep.subr.mxu0 0.0
        %v3980 = vand.u32 %v1823, 4294901760
        %3981 = vmatpush1.msra.mxu0 %v3980
        %v3982 = vand.u32 %v1721, 4294901760
        %v3983 = vsub.f32 %v1721, %v3982
        %v3984 = vand.u32 %v3983, 4294901760
        %3985 = vmatprep.mubr.f32.mxu0 %v3984
        %v3986 = vand.u32 %v1720, 4294901760
        %v3987 = vsub.f32 %v1720, %v3986
        %v3988 = vand.u32 %v3987, 4294901760
        %3989 = vmatmul.mubr.f32.gmra.mrb[0].mxu0 %v3988
        %v3990 = vpop.f32.mrb[0].mxu0
        %v3991 = vadd.f32 %v3856, %v3990
        %v3992 = vpop.f32.mrb[0].mxu0
        %v3993 = vand.u32 %v1723, 4294901760
        %v3994 = vsub.f32 %v1723, %v3993
        %v3995 = vand.u32 %v3994, 4294901760
        %3996 = vmatprep.mubr.f32.mxu0 %v3995
        %v3997 = vand.u32 %v1722, 4294901760
        %v3998 = vsub.f32 %v1722, %v3997
        %v3999 = vand.u32 %v3998, 4294901760
        %4000 = vmatmul.mubr.f32.gmra.mrb[0].mxu0 %v3999
        %v4001 = vpop.f32.mrb[0].mxu0
        %v4002 = vadd.f32 %v3865, %v4001
        %v4003 = vpop.f32.mrb[0].mxu0
        %v4004 = vand.u32 %v1725, 4294901760
        %v4005 = vsub.f32 %v1725, %v4004
        %v4006 = vand.u32 %v4005, 4294901760
        %4007 = vmatprep.mubr.f32.mxu0 %v4006
        %v4008 = vand.u32 %v1724, 4294901760
        %v4009 = vsub.f32 %v1724, %v4008
        %v4010 = vand.u32 %v4009, 4294901760
        %4011 = vmatmul.mubr.f32.gmra.mrb[0].mxu0 %v4010
        %v4012 = vpop.f32.mrb[0].mxu0
        %v4013 = vadd.f32 %v3874, %v4012
        %v4014 = vpop.f32.mrb[0].mxu0
        %v4015 = vand.u32 %v1727, 4294901760
        %v4016 = vsub.f32 %v1727, %v4015
        %v4017 = vand.u32 %v4016, 4294901760
        %4018 = vmatprep.mubr.f32.mxu0 %v4017
        %v4019 = vand.u32 %v1726, 4294901760
        %v4020 = vsub.f32 %v1726, %v4019
        %v4021 = vand.u32 %v4020, 4294901760
        %4022 = vmatmul.mubr.f32.gmra.mrb[0].mxu0 %v4021
        %v4023 = vpop.f32.mrb[0].mxu0
        %v4024 = vadd.f32 %v3883, %v4023
        %v4025 = vpop.f32.mrb[0].mxu0
        %4026 = vdwg.mxu0
        %4027 = vmatprep.subr.mxu0 0.0
        %v4028 = vand.u32 %v1730, 4294901760
        %v4029 = vsub.f32 %v1730, %v4028
        %v4030 = vand.u32 %v4029, 4294901760
        %4031 = vmatpush1.msra.mxu0 %v4030
        %4032 = vmatprep.subr.mxu0 0.0
        %v4033 = vand.u32 %v1733, 4294901760
        %v4034 = vsub.f32 %v1733, %v4033
        %v4035 = vand.u32 %v4034, 4294901760
        %4036 = vmatpush1.msra.mxu0 %v4035
        %4037 = vmatprep.subr.mxu0 0.0
        %v4038 = vand.u32 %v1736, 4294901760
        %v4039 = vsub.f32 %v1736, %v4038
        %v4040 = vand.u32 %v4039, 4294901760
        %4041 = vmatpush1.msra.mxu0 %v4040
        %4042 = vmatprep.subr.mxu0 0.0
        %v4043 = vand.u32 %v1739, 4294901760
        %v4044 = vsub.f32 %v1739, %v4043
        %v4045 = vand.u32 %v4044, 4294901760
        %4046 = vmatpush1.msra.mxu0 %v4045
        %4047 = vmatprep.subr.mxu0 0.0
        %v4048 = vand.u32 %v1742, 4294901760
        %v4049 = vsub.f32 %v1742, %v4048
        %v4050 = vand.u32 %v4049, 4294901760
        %4051 = vmatpush1.msra.mxu0 %v4050
        %4052 = vmatprep.subr.mxu0 0.0
        %v4053 = vand.u32 %v1745, 4294901760
        %v4054 = vsub.f32 %v1745, %v4053
        %v4055 = vand.u32 %v4054, 4294901760
        %4056 = vmatpush1.msra.mxu0 %v4055
        %4057 = vmatprep.subr.mxu0 0.0
        %v4058 = vand.u32 %v1748, 4294901760
        %v4059 = vsub.f32 %v1748, %v4058
        %v4060 = vand.u32 %v4059, 4294901760
        %4061 = vmatpush1.msra.mxu0 %v4060
        %4062 = vmatprep.subr.mxu0 0.0
        %v4063 = vand.u32 %v1751, 4294901760
        %v4064 = vsub.f32 %v1751, %v4063
        %v4065 = vand.u32 %v4064, 4294901760
        %4066 = vmatpush1.msra.mxu0 %v4065
        %4067 = vmatprep.subr.mxu0 0.0
        %v4068 = vand.u32 %v1754, 4294901760
        %v4069 = vsub.f32 %v1754, %v4068
        %v4070 = vand.u32 %v4069, 4294901760
        %4071 = vmatpush1.msra.mxu0 %v4070
        %4072 = vmatprep.subr.mxu0 0.0
        %v4073 = vand.u32 %v1757, 4294901760
        %v4074 = vsub.f32 %v1757, %v4073
        %v4075 = vand.u32 %v4074, 4294901760
        %4076 = vmatpush1.msra.mxu0 %v4075
        %4077 = vmatprep.subr.mxu0 0.0
        %v4078 = vand.u32 %v1760, 4294901760
        %v4079 = vsub.f32 %v1760, %v4078
        %v4080 = vand.u32 %v4079, 4294901760
        %4081 = vmatpush1.msra.mxu0 %v4080
        %4082 = vmatprep.subr.mxu0 0.0
        %v4083 = vand.u32 %v1763, 4294901760
        %v4084 = vsub.f32 %v1763, %v4083
        %v4085 = vand.u32 %v4084, 4294901760
        %4086 = vmatpush1.msra.mxu0 %v4085
        %4087 = vmatprep.subr.mxu0 0.0
        %v4088 = vand.u32 %v1766, 4294901760
        %v4089 = vsub.f32 %v1766, %v4088
        %v4090 = vand.u32 %v4089, 4294901760
        %4091 = vmatpush1.msra.mxu0 %v4090
        %4092 = vmatprep.subr.mxu0 0.0
        %v4093 = vand.u32 %v1769, 4294901760
        %v4094 = vsub.f32 %v1769, %v4093
        %v4095 = vand.u32 %v4094, 4294901760
        %4096 = vmatpush1.msra.mxu0 %v4095
        %4097 = vmatprep.subr.mxu0 0.0
        %v4098 = vand.u32 %v1772, 4294901760
        %v4099 = vsub.f32 %v1772, %v4098
        %v4100 = vand.u32 %v4099, 4294901760
        %4101 = vmatpush1.msra.mxu0 %v4100
        %4102 = vmatprep.subr.mxu0 0.0
        %v4103 = vand.u32 %v1775, 4294901760
        %v4104 = vsub.f32 %v1775, %v4103
        %v4105 = vand.u32 %v4104, 4294901760
        %4106 = vmatpush1.msra.mxu0 %v4105
        %4107 = vmatprep.subr.mxu0 0.0
        %v4108 = vand.u32 %v1778, 4294901760
        %v4109 = vsub.f32 %v1778, %v4108
        %v4110 = vand.u32 %v4109, 4294901760
        %4111 = vmatpush1.msra.mxu0 %v4110
        %4112 = vmatprep.subr.mxu0 0.0
        %v4113 = vand.u32 %v1781, 4294901760
        %v4114 = vsub.f32 %v1781, %v4113
        %v4115 = vand.u32 %v4114, 4294901760
        %4116 = vmatpush1.msra.mxu0 %v4115
        %4117 = vmatprep.subr.mxu0 0.0
        %v4118 = vand.u32 %v1784, 4294901760
        %v4119 = vsub.f32 %v1784, %v4118
        %v4120 = vand.u32 %v4119, 4294901760
        %4121 = vmatpush1.msra.mxu0 %v4120
        %4122 = vmatprep.subr.mxu0 0.0
        %v4123 = vand.u32 %v1787, 4294901760
        %v4124 = vsub.f32 %v1787, %v4123
        %v4125 = vand.u32 %v4124, 4294901760
        %4126 = vmatpush1.msra.mxu0 %v4125
        %4127 = vmatprep.subr.mxu0 0.0
        %v4128 = vand.u32 %v1790, 4294901760
        %v4129 = vsub.f32 %v1790, %v4128
        %v4130 = vand.u32 %v4129, 4294901760
        %4131 = vmatpush1.msra.mxu0 %v4130
        %4132 = vmatprep.subr.mxu0 0.0
        %v4133 = vand.u32 %v1793, 4294901760
        %v4134 = vsub.f32 %v1793, %v4133
        %v4135 = vand.u32 %v4134, 4294901760
        %4136 = vmatpush1.msra.mxu0 %v4135
        %4137 = vmatprep.subr.mxu0 0.0
        %v4138 = vand.u32 %v1796, 4294901760
        %v4139 = vsub.f32 %v1796, %v4138
        %v4140 = vand.u32 %v4139, 4294901760
        %4141 = vmatpush1.msra.mxu0 %v4140
        %4142 = vmatprep.subr.mxu0 0.0
        %v4143 = vand.u32 %v1799, 4294901760
        %v4144 = vsub.f32 %v1799, %v4143
        %v4145 = vand.u32 %v4144, 4294901760
        %4146 = vmatpush1.msra.mxu0 %v4145
        %4147 = vmatprep.subr.mxu0 0.0
        %v4148 = vand.u32 %v1802, 4294901760
        %v4149 = vsub.f32 %v1802, %v4148
        %v4150 = vand.u32 %v4149, 4294901760
        %4151 = vmatpush1.msra.mxu0 %v4150
        %4152 = vmatprep.subr.mxu0 0.0
        %v4153 = vand.u32 %v1805, 4294901760
        %v4154 = vsub.f32 %v1805, %v4153
        %v4155 = vand.u32 %v4154, 4294901760
        %4156 = vmatpush1.msra.mxu0 %v4155
        %4157 = vmatprep.subr.mxu0 0.0
        %v4158 = vand.u32 %v1808, 4294901760
        %v4159 = vsub.f32 %v1808, %v4158
        %v4160 = vand.u32 %v4159, 4294901760
        %4161 = vmatpush1.msra.mxu0 %v4160
        %4162 = vmatprep.subr.mxu0 0.0
        %v4163 = vand.u32 %v1811, 4294901760
        %v4164 = vsub.f32 %v1811, %v4163
        %v4165 = vand.u32 %v4164, 4294901760
        %4166 = vmatpush1.msra.mxu0 %v4165
        %4167 = vmatprep.subr.mxu0 0.0
        %v4168 = vand.u32 %v1814, 4294901760
        %v4169 = vsub.f32 %v1814, %v4168
        %v4170 = vand.u32 %v4169, 4294901760
        %4171 = vmatpush1.msra.mxu0 %v4170
        %4172 = vmatprep.subr.mxu0 0.0
        %v4173 = vand.u32 %v1817, 4294901760
        %v4174 = vsub.f32 %v1817, %v4173
        %v4175 = vand.u32 %v4174, 4294901760
        %4176 = vmatpush1.msra.mxu0 %v4175
        %4177 = vmatprep.subr.mxu0 0.0
        %v4178 = vand.u32 %v1820, 4294901760
        %v4179 = vsub.f32 %v1820, %v4178
        %v4180 = vand.u32 %v4179, 4294901760
        %4181 = vmatpush1.msra.mxu0 %v4180
        %4182 = vmatprep.subr.mxu0 0.0
        %v4183 = vand.u32 %v1823, 4294901760
        %v4184 = vsub.f32 %v1823, %v4183
        %v4185 = vand.u32 %v4184, 4294901760
        %4186 = vmatpush1.msra.mxu0 %v4185
        %v4187 = vand.u32 %v1721, 4294901760
        %4188 = vmatprep.mubr.f32.mxu0 %v4187
        %v4189 = vand.u32 %v1720, 4294901760
        %4190 = vmatmul.mubr.f32.gmra.mrb[0].mxu0 %v4189
        %v4191 = vpop.f32.mrb[0].mxu0
        %v4192 = vadd.f32 %v3991, %v4191
        %v4193 = vpop.f32.mrb[0].mxu0
        %v4194 = vand.u32 %v1723, 4294901760
        %4195 = vmatprep.mubr.f32.mxu0 %v4194
        %v4196 = vand.u32 %v1722, 4294901760
        %4197 = vmatmul.mubr.f32.gmra.mrb[0].mxu0 %v4196
        %v4198 = vpop.f32.mrb[0].mxu0
        %v4199 = vadd.f32 %v4002, %v4198
        %v4200 = vpop.f32.mrb[0].mxu0
        %v4201 = vand.u32 %v1725, 4294901760
        %4202 = vmatprep.mubr.f32.mxu0 %v4201
        %v4203 = vand.u32 %v1724, 4294901760
        %4204 = vmatmul.mubr.f32.gmra.mrb[0].mxu0 %v4203
        %v4205 = vpop.f32.mrb[0].mxu0
        %v4206 = vadd.f32 %v4013, %v4205
        %v4207 = vpop.f32.mrb[0].mxu0
        %v4208 = vand.u32 %v1727, 4294901760
        %4209 = vmatprep.mubr.f32.mxu0 %v4208
        %v4210 = vand.u32 %v1726, 4294901760
        %4211 = vmatmul.mubr.f32.gmra.mrb[0].mxu0 %v4210
        %v4212 = vpop.f32.mrb[0].mxu0
        %v4213 = vadd.f32 %v4024, %v4212
        %v4214 = vpop.f32.mrb[0].mxu0
        %4215 = vdwg.mxu0
        %4216 = vmatprep.subr.mxu0 0.0
        %v4217 = vand.u32 %v1730, 4294901760
        %4218 = vmatpush1.msra.mxu0 %v4217
        %4219 = vmatprep.subr.mxu0 0.0
        %v4220 = vand.u32 %v1733, 4294901760
        %4221 = vmatpush1.msra.mxu0 %v4220
        %4222 = vmatprep.subr.mxu0 0.0
        %v4223 = vand.u32 %v1736, 4294901760
        %4224 = vmatpush1.msra.mxu0 %v4223
        %4225 = vmatprep.subr.mxu0 0.0
        %v4226 = vand.u32 %v1739, 4294901760
        %4227 = vmatpush1.msra.mxu0 %v4226
        %4228 = vmatprep.subr.mxu0 0.0
        %v4229 = vand.u32 %v1742, 4294901760
        %4230 = vmatpush1.msra.mxu0 %v4229
        %4231 = vmatprep.subr.mxu0 0.0
        %v4232 = vand.u32 %v1745, 4294901760
        %4233 = vmatpush1.msra.mxu0 %v4232
        %4234 = vmatprep.subr.mxu0 0.0
        %v4235 = vand.u32 %v1748, 4294901760
        %4236 = vmatpush1.msra.mxu0 %v4235
        %4237 = vmatprep.subr.mxu0 0.0
        %v4238 = vand.u32 %v1751, 4294901760
        %4239 = vmatpush1.msra.mxu0 %v4238
        %4240 = vmatprep.subr.mxu0 0.0
        %v4241 = vand.u32 %v1754, 4294901760
        %4242 = vmatpush1.msra.mxu0 %v4241
        %4243 = vmatprep.subr.mxu0 0.0
        %v4244 = vand.u32 %v1757, 4294901760
        %4245 = vmatpush1.msra.mxu0 %v4244
        %4246 = vmatprep.subr.mxu0 0.0
        %v4247 = vand.u32 %v1760, 4294901760
        %4248 = vmatpush1.msra.mxu0 %v4247
        %4249 = vmatprep.subr.mxu0 0.0
        %v4250 = vand.u32 %v1763, 4294901760
        %4251 = vmatpush1.msra.mxu0 %v4250
        %4252 = vmatprep.subr.mxu0 0.0
        %v4253 = vand.u32 %v1766, 4294901760
        %4254 = vmatpush1.msra.mxu0 %v4253
        %4255 = vmatprep.subr.mxu0 0.0
        %v4256 = vand.u32 %v1769, 4294901760
        %4257 = vmatpush1.msra.mxu0 %v4256
        %4258 = vmatprep.subr.mxu0 0.0
        %v4259 = vand.u32 %v1772, 4294901760
        %4260 = vmatpush1.msra.mxu0 %v4259
        %4261 = vmatprep.subr.mxu0 0.0
        %v4262 = vand.u32 %v1775, 4294901760
        %4263 = vmatpush1.msra.mxu0 %v4262
        %4264 = vmatprep.subr.mxu0 0.0
        %v4265 = vand.u32 %v1778, 4294901760
        %4266 = vmatpush1.msra.mxu0 %v4265
        %4267 = vmatprep.subr.mxu0 0.0
        %v4268 = vand.u32 %v1781, 4294901760
        %4269 = vmatpush1.msra.mxu0 %v4268
        %4270 = vmatprep.subr.mxu0 0.0
        %v4271 = vand.u32 %v1784, 4294901760
        %4272 = vmatpush1.msra.mxu0 %v4271
        %4273 = vmatprep.subr.mxu0 0.0
        %v4274 = vand.u32 %v1787, 4294901760
        %4275 = vmatpush1.msra.mxu0 %v4274
        %4276 = vmatprep.subr.mxu0 0.0
        %v4277 = vand.u32 %v1790, 4294901760
        %4278 = vmatpush1.msra.mxu0 %v4277
        %4279 = vmatprep.subr.mxu0 0.0
        %v4280 = vand.u32 %v1793, 4294901760
        %4281 = vmatpush1.msra.mxu0 %v4280
        %4282 = vmatprep.subr.mxu0 0.0
        %v4283 = vand.u32 %v1796, 4294901760
        %4284 = vmatpush1.msra.mxu0 %v4283
        %4285 = vmatprep.subr.mxu0 0.0
        %v4286 = vand.u32 %v1799, 4294901760
        %4287 = vmatpush1.msra.mxu0 %v4286
        %4288 = vmatprep.subr.mxu0 0.0
        %v4289 = vand.u32 %v1802, 4294901760
        %4290 = vmatpush1.msra.mxu0 %v4289
        %4291 = vmatprep.subr.mxu0 0.0
        %v4292 = vand.u32 %v1805, 4294901760
        %4293 = vmatpush1.msra.mxu0 %v4292
        %4294 = vmatprep.subr.mxu0 0.0
        %v4295 = vand.u32 %v1808, 4294901760
        %4296 = vmatpush1.msra.mxu0 %v4295
        %4297 = vmatprep.subr.mxu0 0.0
        %v4298 = vand.u32 %v1811, 4294901760
        %4299 = vmatpush1.msra.mxu0 %v4298
        %4300 = vmatprep.subr.mxu0 0.0
        %v4301 = vand.u32 %v1814, 4294901760
        %4302 = vmatpush1.msra.mxu0 %v4301
        %4303 = vmatprep.subr.mxu0 0.0
        %v4304 = vand.u32 %v1817, 4294901760
        %4305 = vmatpush1.msra.mxu0 %v4304
        %4306 = vmatprep.subr.mxu0 0.0
        %v4307 = vand.u32 %v1820, 4294901760
        %4308 = vmatpush1.msra.mxu0 %v4307
        %4309 = vmatprep.subr.mxu0 0.0
        %v4310 = vand.u32 %v1823, 4294901760
        %4311 = vmatpush1.msra.mxu0 %v4310
        %v4312 = vand.u32 %v1721, 4294901760
        %4313 = vmatprep.mubr.f32.mxu0 %v4312
        %v4314 = vand.u32 %v1720, 4294901760
        %4315 = vmatmul.mubr.f32.gmra.mrb[0].mxu0 %v4314
        %v4316 = vpop.f32.mrb[0].mxu0
        %v4317 = vadd.f32 %v4192, %v4316
        %v4318 = vpop.f32.mrb[0].mxu0
        %v4319 = vand.u32 %v1723, 4294901760
        %4320 = vmatprep.mubr.f32.mxu0 %v4319
        %v4321 = vand.u32 %v1722, 4294901760
        %4322 = vmatmul.mubr.f32.gmra.mrb[0].mxu0 %v4321
        %v4323 = vpop.f32.mrb[0].mxu0
        %v4324 = vadd.f32 %v4199, %v4323
        %v4325 = vpop.f32.mrb[0].mxu0
        %v4326 = vand.u32 %v1725, 4294901760
        %4327 = vmatprep.mubr.f32.mxu0 %v4326
        %v4328 = vand.u32 %v1724, 4294901760
        %4329 = vmatmul.mubr.f32.gmra.mrb[0].mxu0 %v4328
        %v4330 = vpop.f32.mrb[0].mxu0
        %v4331 = vadd.f32 %v4206, %v4330
        %v4332 = vpop.f32.mrb[0].mxu0
        %v4333 = vand.u32 %v1727, 4294901760
        %4334 = vmatprep.mubr.f32.mxu0 %v4333
        %v4335 = vand.u32 %v1726, 4294901760
        %4336 = vmatmul.mubr.f32.gmra.mrb[0].mxu0 %v4335
        %v4337 = vpop.f32.mrb[0].mxu0
        %v4338 = vadd.f32 %v4213, %v4337
        %v4339 = vpop.f32.mrb[0].mxu0
        %4340 = vdwg.mxu0
        %v4341 = vand.u32 2147483647, %v3283
        %v4342 = vand.u32 2147483647, %v3291
        %v4343 = vand.u32 2147483647, %v3299
        %v4344 = vand.u32 2147483647, %v3307
        %v4345 = vand.u32 2147483647, %v3285
        %v4346 = vand.u32 2147483647, %v3293
        %v4347 = vand.u32 2147483647, %v3301
        %v4348 = vand.u32 2147483647, %v3309
        %v4349 = vmul.f32 %v1697, %v4341
        %v4350 = vmul.f32 %v1704, %v4342
        %v4351 = vmul.f32 %v1711, %v4343
        %v4352 = vmul.f32 %v1718, %v4344
        %v4353 = vld [vmem:[#allocation11] sm:$0xff]
        %v4354 = vld [vmem:[#allocation11 + $0x8] sm:$0xff]
        %v4355 = vld [vmem:[#allocation11 + $0x10] sm:$0xff]
        %v4356 = vld [vmem:[#allocation11 + $0x18] sm:$0xff]
        %v4357 = vld [vmem:[#allocation11 + $0x20] sm:$0xff]
        %v4358 = vld [vmem:[#allocation11 + $0x28] sm:$0xff]
        %v4359 = vld [vmem:[#allocation11 + $0x30] sm:$0xff]
        %v4360 = vld [vmem:[#allocation11 + $0x38] sm:$0xff]
        %v4361 = vld [vmem:[#allocation11 + $0x40] sm:$0xff]
        %v4362 = vld [vmem:[#allocation11 + $0x48] sm:$0xff]
        %v4363 = vld [vmem:[#allocation11 + $0x50] sm:$0xff]
        %v4364 = vld [vmem:[#allocation11 + $0x58] sm:$0xff]
        %v4365 = vld [vmem:[#allocation11 + $0x60] sm:$0xff]
        %v4366 = vld [vmem:[#allocation11 + $0x68] sm:$0xff]
        %v4367 = vld [vmem:[#allocation11 + $0x70] sm:$0xff]
        %v4368 = vld [vmem:[#allocation11 + $0x78] sm:$0xff]
        %4369 = vmatprep.subr.mxu0 0.0
        %v4370 = vand.u32 %v4353, 4294901760
        %4371 = vmatpush1.msra.mxu0 %v4370
        %4372 = vmatprep.subr.mxu0 0.0
        %v4373 = vand.u32 %v4354, 4294901760
        %4374 = vmatpush1.msra.mxu0 %v4373
        %4375 = vmatprep.subr.mxu0 0.0
        %v4376 = vand.u32 %v4355, 4294901760
        %4377 = vmatpush1.msra.mxu0 %v4376
        %4378 = vmatprep.subr.mxu0 0.0
        %v4379 = vand.u32 %v4356, 4294901760
        %4380 = vmatpush1.msra.mxu0 %v4379
        %4381 = vmatprep.subr.mxu0 0.0
        %v4382 = vand.u32 %v4357, 4294901760
        %4383 = vmatpush1.msra.mxu0 %v4382
        %4384 = vmatprep.subr.mxu0 0.0
        %v4385 = vand.u32 %v4358, 4294901760
        %4386 = vmatpush1.msra.mxu0 %v4385
        %4387 = vmatprep.subr.mxu0 0.0
        %v4388 = vand.u32 %v4359, 4294901760
        %4389 = vmatpush1.msra.mxu0 %v4388
        %4390 = vmatprep.subr.mxu0 0.0
        %v4391 = vand.u32 %v4360, 4294901760
        %4392 = vmatpush1.msra.mxu0 %v4391
        %4393 = vmatprep.subr.mxu0 0.0
        %v4394 = vand.u32 %v4361, 4294901760
        %4395 = vmatpush1.msra.mxu0 %v4394
        %4396 = vmatprep.subr.mxu0 0.0
        %v4397 = vand.u32 %v4362, 4294901760
        %4398 = vmatpush1.msra.mxu0 %v4397
        %4399 = vmatprep.subr.mxu0 0.0
        %v4400 = vand.u32 %v4363, 4294901760
        %4401 = vmatpush1.msra.mxu0 %v4400
        %4402 = vmatprep.subr.mxu0 0.0
        %v4403 = vand.u32 %v4364, 4294901760
        %4404 = vmatpush1.msra.mxu0 %v4403
        %4405 = vmatprep.subr.mxu0 0.0
        %v4406 = vand.u32 %v4365, 4294901760
        %4407 = vmatpush1.msra.mxu0 %v4406
        %4408 = vmatprep.subr.mxu0 0.0
        %v4409 = vand.u32 %v4366, 4294901760
        %4410 = vmatpush1.msra.mxu0 %v4409
        %4411 = vmatprep.subr.mxu0 0.0
        %v4412 = vand.u32 %v4367, 4294901760
        %4413 = vmatpush1.msra.mxu0 %v4412
        %4414 = vmatprep.subr.mxu0 0.0
        %v4415 = vand.u32 %v4368, 4294901760
        %4416 = vmatpush1.msra.mxu0 %v4415
        %4417 = vmatprep.subr.mxu0 0.0
        %4418 = vmatpush1.msra.mxu0 0.0
        %4419 = vmatprep.subr.mxu0 0.0
        %4420 = vmatpush1.msra.mxu0 0.0
        %4421 = vmatprep.subr.mxu0 0.0
        %4422 = vmatpush1.msra.mxu0 0.0
        %4423 = vmatprep.subr.mxu0 0.0
        %4424 = vmatpush1.msra.mxu0 0.0
        %4425 = vmatprep.subr.mxu0 0.0
        %4426 = vmatpush1.msra.mxu0 0.0
        %4427 = vmatprep.subr.mxu0 0.0
        %4428 = vmatpush1.msra.mxu0 0.0
        %4429 = vmatprep.subr.mxu0 0.0
        %4430 = vmatpush1.msra.mxu0 0.0
        %4431 = vmatprep.subr.mxu0 0.0
        %4432 = vmatpush1.msra.mxu0 0.0
        %4433 = vmatprep.subr.mxu0 0.0
        %4434 = vmatpush1.msra.mxu0 0.0
        %4435 = vmatprep.subr.mxu0 0.0
        %4436 = vmatpush1.msra.mxu0 0.0
        %4437 = vmatprep.subr.mxu0 0.0
        %4438 = vmatpush1.msra.mxu0 0.0
        %4439 = vmatprep.subr.mxu0 0.0
        %4440 = vmatpush1.msra.mxu0 0.0
        %4441 = vmatprep.subr.mxu0 0.0
        %4442 = vmatpush1.msra.mxu0 0.0
        %4443 = vmatprep.subr.mxu0 0.0
        %4444 = vmatpush1.msra.mxu0 0.0
        %4445 = vmatprep.subr.mxu0 0.0
        %4446 = vmatpush1.msra.mxu0 0.0
        %4447 = vmatprep.subr.mxu0 0.0
        %4448 = vmatpush1.msra.mxu0 0.0
        %4449 = vmatprep.mubr.f32.mxu0 0.0
        %v4450 = vand.u32 %v4349, 4294901760
        %v4451 = vsub.f32 %v4349, %v4450
        %v4452 = vand.u32 %v4451, 4294901760
        %v4453 = vsub.f32 %v4451, %v4452
        %v4454 = vand.u32 %v4453, 4294901760
        %4455 = vmatmul.mubr.f32.gmra.mrb[0].mxu0 %v4454
        %v4456 = vpop.f32.mrb[0].mxu0
        %v4457 = vadd.f32 %v1695, %v4456
        %v4458 = vpop.f32.mrb[0].mxu0
        %4459 = vmatprep.mubr.f32.mxu0 0.0
        %v4460 = vand.u32 %v4350, 4294901760
        %v4461 = vsub.f32 %v4350, %v4460
        %v4462 = vand.u32 %v4461, 4294901760
        %v4463 = vsub.f32 %v4461, %v4462
        %v4464 = vand.u32 %v4463, 4294901760
        %4465 = vmatmul.mubr.f32.gmra.mrb[0].mxu0 %v4464
        %v4466 = vpop.f32.mrb[0].mxu0
        %v4467 = vadd.f32 %v1702, %v4466
        %v4468 = vpop.f32.mrb[0].mxu0
        %4469 = vmatprep.mubr.f32.mxu0 0.0
        %v4470 = vand.u32 %v4351, 4294901760
        %v4471 = vsub.f32 %v4351, %v4470
        %v4472 = vand.u32 %v4471, 4294901760
        %v4473 = vsub.f32 %v4471, %v4472
        %v4474 = vand.u32 %v4473, 4294901760
        %4475 = vmatmul.mubr.f32.gmra.mrb[0].mxu0 %v4474
        %v4476 = vpop.f32.mrb[0].mxu0
        %v4477 = vadd.f32 %v1709, %v4476
        %v4478 = vpop.f32.mrb[0].mxu0
        %4479 = vmatprep.mubr.f32.mxu0 0.0
        %v4480 = vand.u32 %v4352, 4294901760
        %v4481 = vsub.f32 %v4352, %v4480
        %v4482 = vand.u32 %v4481, 4294901760
        %v4483 = vsub.f32 %v4481, %v4482
        %v4484 = vand.u32 %v4483, 4294901760
        %4485 = vmatmul.mubr.f32.gmra.mrb[0].mxu0 %v4484
        %v4486 = vpop.f32.mrb[0].mxu0
        %v4487 = vadd.f32 %v1716, %v4486
        %v4488 = vpop.f32.mrb[0].mxu0
        %4489 = vdwg.mxu0
        %4490 = vmatprep.subr.mxu0 0.0
        %v4491 = vand.u32 %v4353, 4294901760
        %v4492 = vsub.f32 %v4353, %v4491
        %v4493 = vand.u32 %v4492, 4294901760
        %v4494 = vsub.f32 %v4492, %v4493
        %v4495 = vand.u32 %v4494, 4294901760
        %4496 = vmatpush1.msra.mxu0 %v4495
        %4497 = vmatprep.subr.mxu0 0.0
        %v4498 = vand.u32 %v4354, 4294901760
        %v4499 = vsub.f32 %v4354, %v4498
        %v4500 = vand.u32 %v4499, 4294901760
        %v4501 = vsub.f32 %v4499, %v4500
        %v4502 = vand.u32 %v4501, 4294901760
        %4503 = vmatpush1.msra.mxu0 %v4502
        %4504 = vmatprep.subr.mxu0 0.0
        %v4505 = vand.u32 %v4355, 4294901760
        %v4506 = vsub.f32 %v4355, %v4505
        %v4507 = vand.u32 %v4506, 4294901760
        %v4508 = vsub.f32 %v4506, %v4507
        %v4509 = vand.u32 %v4508, 4294901760
        %4510 = vmatpush1.msra.mxu0 %v4509
        %4511 = vmatprep.subr.mxu0 0.0
        %v4512 = vand.u32 %v4356, 4294901760
        %v4513 = vsub.f32 %v4356, %v4512
        %v4514 = vand.u32 %v4513, 4294901760
        %v4515 = vsub.f32 %v4513, %v4514
        %v4516 = vand.u32 %v4515, 4294901760
        %4517 = vmatpush1.msra.mxu0 %v4516
        %4518 = vmatprep.subr.mxu0 0.0
        %v4519 = vand.u32 %v4357, 4294901760
        %v4520 = vsub.f32 %v4357, %v4519
        %v4521 = vand.u32 %v4520, 4294901760
        %v4522 = vsub.f32 %v4520, %v4521
        %v4523 = vand.u32 %v4522, 4294901760
        %4524 = vmatpush1.msra.mxu0 %v4523
        %4525 = vmatprep.subr.mxu0 0.0
        %v4526 = vand.u32 %v4358, 4294901760
        %v4527 = vsub.f32 %v4358, %v4526
        %v4528 = vand.u32 %v4527, 4294901760
        %v4529 = vsub.f32 %v4527, %v4528
        %v4530 = vand.u32 %v4529, 4294901760
        %4531 = vmatpush1.msra.mxu0 %v4530
        %4532 = vmatprep.subr.mxu0 0.0
        %v4533 = vand.u32 %v4359, 4294901760
        %v4534 = vsub.f32 %v4359, %v4533
        %v4535 = vand.u32 %v4534, 4294901760
        %v4536 = vsub.f32 %v4534, %v4535
        %v4537 = vand.u32 %v4536, 4294901760
        %4538 = vmatpush1.msra.mxu0 %v4537
        %4539 = vmatprep.subr.mxu0 0.0
        %v4540 = vand.u32 %v4360, 4294901760
        %v4541 = vsub.f32 %v4360, %v4540
        %v4542 = vand.u32 %v4541, 4294901760
        %v4543 = vsub.f32 %v4541, %v4542
        %v4544 = vand.u32 %v4543, 4294901760
        %4545 = vmatpush1.msra.mxu0 %v4544
        %4546 = vmatprep.subr.mxu0 0.0
        %v4547 = vand.u32 %v4361, 4294901760
        %v4548 = vsub.f32 %v4361, %v4547
        %v4549 = vand.u32 %v4548, 4294901760
        %v4550 = vsub.f32 %v4548, %v4549
        %v4551 = vand.u32 %v4550, 4294901760
        %4552 = vmatpush1.msra.mxu0 %v4551
        %4553 = vmatprep.subr.mxu0 0.0
        %v4554 = vand.u32 %v4362, 4294901760
        %v4555 = vsub.f32 %v4362, %v4554
        %v4556 = vand.u32 %v4555, 4294901760
        %v4557 = vsub.f32 %v4555, %v4556
        %v4558 = vand.u32 %v4557, 4294901760
        %4559 = vmatpush1.msra.mxu0 %v4558
        %4560 = vmatprep.subr.mxu0 0.0
        %v4561 = vand.u32 %v4363, 4294901760
        %v4562 = vsub.f32 %v4363, %v4561
        %v4563 = vand.u32 %v4562, 4294901760
        %v4564 = vsub.f32 %v4562, %v4563
        %v4565 = vand.u32 %v4564, 4294901760
        %4566 = vmatpush1.msra.mxu0 %v4565
        %4567 = vmatprep.subr.mxu0 0.0
        %v4568 = vand.u32 %v4364, 4294901760
        %v4569 = vsub.f32 %v4364, %v4568
        %v4570 = vand.u32 %v4569, 4294901760
        %v4571 = vsub.f32 %v4569, %v4570
        %v4572 = vand.u32 %v4571, 4294901760
        %4573 = vmatpush1.msra.mxu0 %v4572
        %4574 = vmatprep.subr.mxu0 0.0
        %v4575 = vand.u32 %v4365, 4294901760
        %v4576 = vsub.f32 %v4365, %v4575
        %v4577 = vand.u32 %v4576, 4294901760
        %v4578 = vsub.f32 %v4576, %v4577
        %v4579 = vand.u32 %v4578, 4294901760
        %4580 = vmatpush1.msra.mxu0 %v4579
        %4581 = vmatprep.subr.mxu0 0.0
        %v4582 = vand.u32 %v4366, 4294901760
        %v4583 = vsub.f32 %v4366, %v4582
        %v4584 = vand.u32 %v4583, 4294901760
        %v4585 = vsub.f32 %v4583, %v4584
        %v4586 = vand.u32 %v4585, 4294901760
        %4587 = vmatpush1.msra.mxu0 %v4586
        %4588 = vmatprep.subr.mxu0 0.0
        %v4589 = vand.u32 %v4367, 4294901760
        %v4590 = vsub.f32 %v4367, %v4589
        %v4591 = vand.u32 %v4590, 4294901760
        %v4592 = vsub.f32 %v4590, %v4591
        %v4593 = vand.u32 %v4592, 4294901760
        %4594 = vmatpush1.msra.mxu0 %v4593
        %4595 = vmatprep.subr.mxu0 0.0
        %v4596 = vand.u32 %v4368, 4294901760
        %v4597 = vsub.f32 %v4368, %v4596
        %v4598 = vand.u32 %v4597, 4294901760
        %v4599 = vsub.f32 %v4597, %v4598
        %v4600 = vand.u32 %v4599, 4294901760
        %4601 = vmatpush1.msra.mxu0 %v4600
        %4602 = vmatprep.subr.mxu0 0.0
        %4603 = vmatpush1.msra.mxu0 0.0
        %4604 = vmatprep.subr.mxu0 0.0
        %4605 = vmatpush1.msra.mxu0 0.0
        %4606 = vmatprep.subr.mxu0 0.0
        %4607 = vmatpush1.msra.mxu0 0.0
        %4608 = vmatprep.subr.mxu0 0.0
        %4609 = vmatpush1.msra.mxu0 0.0
        %4610 = vmatprep.subr.mxu0 0.0
        %4611 = vmatpush1.msra.mxu0 0.0
        %4612 = vmatprep.subr.mxu0 0.0
        %4613 = vmatpush1.msra.mxu0 0.0
        %4614 = vmatprep.subr.mxu0 0.0
        %4615 = vmatpush1.msra.mxu0 0.0
        %4616 = vmatprep.subr.mxu0 0.0
        %4617 = vmatpush1.msra.mxu0 0.0
        %4618 = vmatprep.subr.mxu0 0.0
        %4619 = vmatpush1.msra.mxu0 0.0
        %4620 = vmatprep.subr.mxu0 0.0
        %4621 = vmatpush1.msra.mxu0 0.0
        %4622 = vmatprep.subr.mxu0 0.0
        %4623 = vmatpush1.msra.mxu0 0.0
        %4624 = vmatprep.subr.mxu0 0.0
        %4625 = vmatpush1.msra.mxu0 0.0
        %4626 = vmatprep.subr.mxu0 0.0
        %4627 = vmatpush1.msra.mxu0 0.0
        %4628 = vmatprep.subr.mxu0 0.0
        %4629 = vmatpush1.msra.mxu0 0.0
        %4630 = vmatprep.subr.mxu0 0.0
        %4631 = vmatpush1.msra.mxu0 0.0
        %4632 = vmatprep.subr.mxu0 0.0
        %4633 = vmatpush1.msra.mxu0 0.0
        %4634 = vmatprep.mubr.f32.mxu0 0.0
        %v4635 = vand.u32 %v4349, 4294901760
        %4636 = vmatmul.mubr.f32.gmra.mrb[0].mxu0 %v4635
        %v4637 = vpop.f32.mrb[0].mxu0
        %v4638 = vadd.f32 %v4457, %v4637
        %v4639 = vpop.f32.mrb[0].mxu0
        %4640 = vmatprep.mubr.f32.mxu0 0.0
        %v4641 = vand.u32 %v4350, 4294901760
        %4642 = vmatmul.mubr.f32.gmra.mrb[0].mxu0 %v4641
        %v4643 = vpop.f32.mrb[0].mxu0
        %v4644 = vadd.f32 %v4467, %v4643
        %v4645 = vpop.f32.mrb[0].mxu0
        %4646 = vmatprep.mubr.f32.mxu0 0.0
        %v4647 = vand.u32 %v4351, 4294901760
        %4648 = vmatmul.mubr.f32.gmra.mrb[0].mxu0 %v4647
        %v4649 = vpop.f32.mrb[0].mxu0
        %v4650 = vadd.f32 %v4477, %v4649
        %v4651 = vpop.f32.mrb[0].mxu0
        %4652 = vmatprep.mubr.f32.mxu0 0.0
        %v4653 = vand.u32 %v4352, 4294901760
        %4654 = vmatmul.mubr.f32.gmra.mrb[0].mxu0 %v4653
        %v4655 = vpop.f32.mrb[0].mxu0
        %v4656 = vadd.f32 %v4487, %v4655
        %v4657 = vpop.f32.mrb[0].mxu0
        %4658 = vdwg.mxu0
        %4659 = vmatprep.subr.mxu0 0.0
        %v4660 = vand.u32 %v4353, 4294901760
        %v4661 = vsub.f32 %v4353, %v4660
        %4662 = vmatpush1.msra.mxu0 %v4661
        %4663 = vmatprep.subr.mxu0 0.0
        %v4664 = vand.u32 %v4354, 4294901760
        %v4665 = vsub.f32 %v4354, %v4664
        %4666 = vmatpush1.msra.mxu0 %v4665
        %4667 = vmatprep.subr.mxu0 0.0
        %v4668 = vand.u32 %v4355, 4294901760
        %v4669 = vsub.f32 %v4355, %v4668
        %4670 = vmatpush1.msra.mxu0 %v4669
        %4671 = vmatprep.subr.mxu0 0.0
        %v4672 = vand.u32 %v4356, 4294901760
        %v4673 = vsub.f32 %v4356, %v4672
        %4674 = vmatpush1.msra.mxu0 %v4673
        %4675 = vmatprep.subr.mxu0 0.0
        %v4676 = vand.u32 %v4357, 4294901760
        %v4677 = vsub.f32 %v4357, %v4676
        %4678 = vmatpush1.msra.mxu0 %v4677
        %4679 = vmatprep.subr.mxu0 0.0
        %v4680 = vand.u32 %v4358, 4294901760
        %v4681 = vsub.f32 %v4358, %v4680
        %4682 = vmatpush1.msra.mxu0 %v4681
        %4683 = vmatprep.subr.mxu0 0.0
        %v4684 = vand.u32 %v4359, 4294901760
        %v4685 = vsub.f32 %v4359, %v4684
        %4686 = vmatpush1.msra.mxu0 %v4685
        %4687 = vmatprep.subr.mxu0 0.0
        %v4688 = vand.u32 %v4360, 4294901760
        %v4689 = vsub.f32 %v4360, %v4688
        %4690 = vmatpush1.msra.mxu0 %v4689
        %4691 = vmatprep.subr.mxu0 0.0
        %v4692 = vand.u32 %v4361, 4294901760
        %v4693 = vsub.f32 %v4361, %v4692
        %4694 = vmatpush1.msra.mxu0 %v4693
        %4695 = vmatprep.subr.mxu0 0.0
        %v4696 = vand.u32 %v4362, 4294901760
        %v4697 = vsub.f32 %v4362, %v4696
        %4698 = vmatpush1.msra.mxu0 %v4697
        %4699 = vmatprep.subr.mxu0 0.0
        %v4700 = vand.u32 %v4363, 4294901760
        %v4701 = vsub.f32 %v4363, %v4700
        %4702 = vmatpush1.msra.mxu0 %v4701
        %4703 = vmatprep.subr.mxu0 0.0
        %v4704 = vand.u32 %v4364, 4294901760
        %v4705 = vsub.f32 %v4364, %v4704
        %4706 = vmatpush1.msra.mxu0 %v4705
        %4707 = vmatprep.subr.mxu0 0.0
        %v4708 = vand.u32 %v4365, 4294901760
        %v4709 = vsub.f32 %v4365, %v4708
        %4710 = vmatpush1.msra.mxu0 %v4709
        %4711 = vmatprep.subr.mxu0 0.0
        %v4712 = vand.u32 %v4366, 4294901760
        %v4713 = vsub.f32 %v4366, %v4712
        %4714 = vmatpush1.msra.mxu0 %v4713
        %4715 = vmatprep.subr.mxu0 0.0
        %v4716 = vand.u32 %v4367, 4294901760
        %v4717 = vsub.f32 %v4367, %v4716
        %4718 = vmatpush1.msra.mxu0 %v4717
        %4719 = vmatprep.subr.mxu0 0.0
        %v4720 = vand.u32 %v4368, 4294901760
        %v4721 = vsub.f32 %v4368, %v4720
        %4722 = vmatpush1.msra.mxu0 %v4721
        %4723 = vmatprep.subr.mxu0 0.0
        %4724 = vmatpush1.msra.mxu0 0.0
        %4725 = vmatprep.subr.mxu0 0.0
        %4726 = vmatpush1.msra.mxu0 0.0
        %4727 = vmatprep.subr.mxu0 0.0
        %4728 = vmatpush1.msra.mxu0 0.0
        %4729 = vmatprep.subr.mxu0 0.0
        %4730 = vmatpush1.msra.mxu0 0.0
        %4731 = vmatprep.subr.mxu0 0.0
        %4732 = vmatpush1.msra.mxu0 0.0
        %4733 = vmatprep.subr.mxu0 0.0
        %4734 = vmatpush1.msra.mxu0 0.0
        %4735 = vmatprep.subr.mxu0 0.0
        %4736 = vmatpush1.msra.mxu0 0.0
        %4737 = vmatprep.subr.mxu0 0.0
        %4738 = vmatpush1.msra.mxu0 0.0
        %4739 = vmatprep.subr.mxu0 0.0
        %4740 = vmatpush1.msra.mxu0 0.0
        %4741 = vmatprep.subr.mxu0 0.0
        %4742 = vmatpush1.msra.mxu0 0.0
        %4743 = vmatprep.subr.mxu0 0.0
        %4744 = vmatpush1.msra.mxu0 0.0
        %4745 = vmatprep.subr.mxu0 0.0
        %4746 = vmatpush1.msra.mxu0 0.0
        %4747 = vmatprep.subr.mxu0 0.0
        %4748 = vmatpush1.msra.mxu0 0.0
        %4749 = vmatprep.subr.mxu0 0.0
        %4750 = vmatpush1.msra.mxu0 0.0
        %4751 = vmatprep.subr.mxu0 0.0
        %4752 = vmatpush1.msra.mxu0 0.0
        %4753 = vmatprep.subr.mxu0 0.0
        %4754 = vmatpush1.msra.mxu0 0.0
        %4755 = vmatprep.mubr.f32.mxu0 0.0
        %v4756 = vand.u32 %v4349, 4294901760
        %v4757 = vsub.f32 %v4349, %v4756
        %4758 = vmatmul.mubr.f32.gmra.mrb[0].mxu0 %v4757
        %v4759 = vpop.f32.mrb[0].mxu0
        %v4760 = vadd.f32 %v4638, %v4759
        %v4761 = vpop.f32.mrb[0].mxu0
        %4762 = vmatprep.mubr.f32.mxu0 0.0
        %v4763 = vand.u32 %v4350, 4294901760
        %v4764 = vsub.f32 %v4350, %v4763
        %4765 = vmatmul.mubr.f32.gmra.mrb[0].mxu0 %v4764
        %v4766 = vpop.f32.mrb[0].mxu0
        %v4767 = vadd.f32 %v4644, %v4766
        %v4768 = vpop.f32.mrb[0].mxu0
        %4769 = vmatprep.mubr.f32.mxu0 0.0
        %v4770 = vand.u32 %v4351, 4294901760
        %v4771 = vsub.f32 %v4351, %v4770
        %4772 = vmatmul.mubr.f32.gmra.mrb[0].mxu0 %v4771
        %v4773 = vpop.f32.mrb[0].mxu0
        %v4774 = vadd.f32 %v4650, %v4773
        %v4775 = vpop.f32.mrb[0].mxu0
        %4776 = vmatprep.mubr.f32.mxu0 0.0
        %v4777 = vand.u32 %v4352, 4294901760
        %v4778 = vsub.f32 %v4352, %v4777
        %4779 = vmatmul.mubr.f32.gmra.mrb[0].mxu0 %v4778
        %v4780 = vpop.f32.mrb[0].mxu0
        %v4781 = vadd.f32 %v4656, %v4780
        %v4782 = vpop.f32.mrb[0].mxu0
        %4783 = vdwg.mxu0
        %4784 = vmatprep.subr.mxu0 0.0
        %v4785 = vand.u32 %v4353, 4294901760
        %4786 = vmatpush1.msra.mxu0 %v4785
        %4787 = vmatprep.subr.mxu0 0.0
        %v4788 = vand.u32 %v4354, 4294901760
        %4789 = vmatpush1.msra.mxu0 %v4788
        %4790 = vmatprep.subr.mxu0 0.0
        %v4791 = vand.u32 %v4355, 4294901760
        %4792 = vmatpush1.msra.mxu0 %v4791
        %4793 = vmatprep.subr.mxu0 0.0
        %v4794 = vand.u32 %v4356, 4294901760
        %4795 = vmatpush1.msra.mxu0 %v4794
        %4796 = vmatprep.subr.mxu0 0.0
        %v4797 = vand.u32 %v4357, 4294901760
        %4798 = vmatpush1.msra.mxu0 %v4797
        %4799 = vmatprep.subr.mxu0 0.0
        %v4800 = vand.u32 %v4358, 4294901760
        %4801 = vmatpush1.msra.mxu0 %v4800
        %4802 = vmatprep.subr.mxu0 0.0
        %v4803 = vand.u32 %v4359, 4294901760
        %4804 = vmatpush1.msra.mxu0 %v4803
        %4805 = vmatprep.subr.mxu0 0.0
        %v4806 = vand.u32 %v4360, 4294901760
        %4807 = vmatpush1.msra.mxu0 %v4806
        %4808 = vmatprep.subr.mxu0 0.0
        %v4809 = vand.u32 %v4361, 4294901760
        %4810 = vmatpush1.msra.mxu0 %v4809
        %4811 = vmatprep.subr.mxu0 0.0
        %v4812 = vand.u32 %v4362, 4294901760
        %4813 = vmatpush1.msra.mxu0 %v4812
        %4814 = vmatprep.subr.mxu0 0.0
        %v4815 = vand.u32 %v4363, 4294901760
        %4816 = vmatpush1.msra.mxu0 %v4815
        %4817 = vmatprep.subr.mxu0 0.0
        %v4818 = vand.u32 %v4364, 4294901760
        %4819 = vmatpush1.msra.mxu0 %v4818
        %4820 = vmatprep.subr.mxu0 0.0
        %v4821 = vand.u32 %v4365, 4294901760
        %4822 = vmatpush1.msra.mxu0 %v4821
        %4823 = vmatprep.subr.mxu0 0.0
        %v4824 = vand.u32 %v4366, 4294901760
        %4825 = vmatpush1.msra.mxu0 %v4824
        %4826 = vmatprep.subr.mxu0 0.0
        %v4827 = vand.u32 %v4367, 4294901760
        %4828 = vmatpush1.msra.mxu0 %v4827
        %4829 = vmatprep.subr.mxu0 0.0
        %v4830 = vand.u32 %v4368, 4294901760
        %4831 = vmatpush1.msra.mxu0 %v4830
        %4832 = vmatprep.subr.mxu0 0.0
        %4833 = vmatpush1.msra.mxu0 0.0
        %4834 = vmatprep.subr.mxu0 0.0
        %4835 = vmatpush1.msra.mxu0 0.0
        %4836 = vmatprep.subr.mxu0 0.0
        %4837 = vmatpush1.msra.mxu0 0.0
        %4838 = vmatprep.subr.mxu0 0.0
        %4839 = vmatpush1.msra.mxu0 0.0
        %4840 = vmatprep.subr.mxu0 0.0
        %4841 = vmatpush1.msra.mxu0 0.0
        %4842 = vmatprep.subr.mxu0 0.0
        %4843 = vmatpush1.msra.mxu0 0.0
        %4844 = vmatprep.subr.mxu0 0.0
        %4845 = vmatpush1.msra.mxu0 0.0
        %4846 = vmatprep.subr.mxu0 0.0
        %4847 = vmatpush1.msra.mxu0 0.0
        %4848 = vmatprep.subr.mxu0 0.0
        %4849 = vmatpush1.msra.mxu0 0.0
        %4850 = vmatprep.subr.mxu0 0.0
        %4851 = vmatpush1.msra.mxu0 0.0
        %4852 = vmatprep.subr.mxu0 0.0
        %4853 = vmatpush1.msra.mxu0 0.0
        %4854 = vmatprep.subr.mxu0 0.0
        %4855 = vmatpush1.msra.mxu0 0.0
        %4856 = vmatprep.subr.mxu0 0.0
        %4857 = vmatpush1.msra.mxu0 0.0
        %4858 = vmatprep.subr.mxu0 0.0
        %4859 = vmatpush1.msra.mxu0 0.0
        %4860 = vmatprep.subr.mxu0 0.0
        %4861 = vmatpush1.msra.mxu0 0.0
        %4862 = vmatprep.subr.mxu0 0.0
        %4863 = vmatpush1.msra.mxu0 0.0
        %4864 = vmatprep.mubr.f32.mxu0 0.0
        %v4865 = vand.u32 %v4349, 4294901760
        %v4866 = vsub.f32 %v4349, %v4865
        %v4867 = vand.u32 %v4866, 4294901760
        %4868 = vmatmul.mubr.f32.gmra.mrb[0].mxu0 %v4867
        %v4869 = vpop.f32.mrb[0].mxu0
        %v4870 = vadd.f32 %v4760, %v4869
        %v4871 = vpop.f32.mrb[0].mxu0
        %4872 = vmatprep.mubr.f32.mxu0 0.0
        %v4873 = vand.u32 %v4350, 4294901760
        %v4874 = vsub.f32 %v4350, %v4873
        %v4875 = vand.u32 %v4874, 4294901760
        %4876 = vmatmul.mubr.f32.gmra.mrb[0].mxu0 %v4875
        %v4877 = vpop.f32.mrb[0].mxu0
        %v4878 = vadd.f32 %v4767, %v4877
        %v4879 = vpop.f32.mrb[0].mxu0
        %4880 = vmatprep.mubr.f32.mxu0 0.0
        %v4881 = vand.u32 %v4351, 4294901760
        %v4882 = vsub.f32 %v4351, %v4881
        %v4883 = vand.u32 %v4882, 4294901760
        %4884 = vmatmul.mubr.f32.gmra.mrb[0].mxu0 %v4883
        %v4885 = vpop.f32.mrb[0].mxu0
        %v4886 = vadd.f32 %v4774, %v4885
        %v4887 = vpop.f32.mrb[0].mxu0
        %4888 = vmatprep.mubr.f32.mxu0 0.0
        %v4889 = vand.u32 %v4352, 4294901760
        %v4890 = vsub.f32 %v4352, %v4889
        %v4891 = vand.u32 %v4890, 4294901760
        %4892 = vmatmul.mubr.f32.gmra.mrb[0].mxu0 %v4891
        %v4893 = vpop.f32.mrb[0].mxu0
        %v4894 = vadd.f32 %v4781, %v4893
        %v4895 = vpop.f32.mrb[0].mxu0
        %4896 = vdwg.mxu0
        %4897 = vmatprep.subr.mxu0 0.0
        %v4898 = vand.u32 %v4353, 4294901760
        %v4899 = vsub.f32 %v4353, %v4898
        %v4900 = vand.u32 %v4899, 4294901760
        %4901 = vmatpush1.msra.mxu0 %v4900
        %4902 = vmatprep.subr.mxu0 0.0
        %v4903 = vand.u32 %v4354, 4294901760
        %v4904 = vsub.f32 %v4354, %v4903
        %v4905 = vand.u32 %v4904, 4294901760
        %4906 = vmatpush1.msra.mxu0 %v4905
        %4907 = vmatprep.subr.mxu0 0.0
        %v4908 = vand.u32 %v4355, 4294901760
        %v4909 = vsub.f32 %v4355, %v4908
        %v4910 = vand.u32 %v4909, 4294901760
        %4911 = vmatpush1.msra.mxu0 %v4910
        %4912 = vmatprep.subr.mxu0 0.0
        %v4913 = vand.u32 %v4356, 4294901760
        %v4914 = vsub.f32 %v4356, %v4913
        %v4915 = vand.u32 %v4914, 4294901760
        %4916 = vmatpush1.msra.mxu0 %v4915
        %4917 = vmatprep.subr.mxu0 0.0
        %v4918 = vand.u32 %v4357, 4294901760
        %v4919 = vsub.f32 %v4357, %v4918
        %v4920 = vand.u32 %v4919, 4294901760
        %4921 = vmatpush1.msra.mxu0 %v4920
        %4922 = vmatprep.subr.mxu0 0.0
        %v4923 = vand.u32 %v4358, 4294901760
        %v4924 = vsub.f32 %v4358, %v4923
        %v4925 = vand.u32 %v4924, 4294901760
        %4926 = vmatpush1.msra.mxu0 %v4925
        %4927 = vmatprep.subr.mxu0 0.0
        %v4928 = vand.u32 %v4359, 4294901760
        %v4929 = vsub.f32 %v4359, %v4928
        %v4930 = vand.u32 %v4929, 4294901760
        %4931 = vmatpush1.msra.mxu0 %v4930
        %4932 = vmatprep.subr.mxu0 0.0
        %v4933 = vand.u32 %v4360, 4294901760
        %v4934 = vsub.f32 %v4360, %v4933
        %v4935 = vand.u32 %v4934, 4294901760
        %4936 = vmatpush1.msra.mxu0 %v4935
        %4937 = vmatprep.subr.mxu0 0.0
        %v4938 = vand.u32 %v4361, 4294901760
        %v4939 = vsub.f32 %v4361, %v4938
        %v4940 = vand.u32 %v4939, 4294901760
        %4941 = vmatpush1.msra.mxu0 %v4940
        %4942 = vmatprep.subr.mxu0 0.0
        %v4943 = vand.u32 %v4362, 4294901760
        %v4944 = vsub.f32 %v4362, %v4943
        %v4945 = vand.u32 %v4944, 4294901760
        %4946 = vmatpush1.msra.mxu0 %v4945
        %4947 = vmatprep.subr.mxu0 0.0
        %v4948 = vand.u32 %v4363, 4294901760
        %v4949 = vsub.f32 %v4363, %v4948
        %v4950 = vand.u32 %v4949, 4294901760
        %4951 = vmatpush1.msra.mxu0 %v4950
        %4952 = vmatprep.subr.mxu0 0.0
        %v4953 = vand.u32 %v4364, 4294901760
        %v4954 = vsub.f32 %v4364, %v4953
        %v4955 = vand.u32 %v4954, 4294901760
        %4956 = vmatpush1.msra.mxu0 %v4955
        %4957 = vmatprep.subr.mxu0 0.0
        %v4958 = vand.u32 %v4365, 4294901760
        %v4959 = vsub.f32 %v4365, %v4958
        %v4960 = vand.u32 %v4959, 4294901760
        %4961 = vmatpush1.msra.mxu0 %v4960
        %4962 = vmatprep.subr.mxu0 0.0
        %v4963 = vand.u32 %v4366, 4294901760
        %v4964 = vsub.f32 %v4366, %v4963
        %v4965 = vand.u32 %v4964, 4294901760
        %4966 = vmatpush1.msra.mxu0 %v4965
        %4967 = vmatprep.subr.mxu0 0.0
        %v4968 = vand.u32 %v4367, 4294901760
        %v4969 = vsub.f32 %v4367, %v4968
        %v4970 = vand.u32 %v4969, 4294901760
        %4971 = vmatpush1.msra.mxu0 %v4970
        %4972 = vmatprep.subr.mxu0 0.0
        %v4973 = vand.u32 %v4368, 4294901760
        %v4974 = vsub.f32 %v4368, %v4973
        %v4975 = vand.u32 %v4974, 4294901760
        %4976 = vmatpush1.msra.mxu0 %v4975
        %4977 = vmatprep.subr.mxu0 0.0
        %4978 = vmatpush1.msra.mxu0 0.0
        %4979 = vmatprep.subr.mxu0 0.0
        %4980 = vmatpush1.msra.mxu0 0.0
        %4981 = vmatprep.subr.mxu0 0.0
        %4982 = vmatpush1.msra.mxu0 0.0
        %4983 = vmatprep.subr.mxu0 0.0
        %4984 = vmatpush1.msra.mxu0 0.0
        %4985 = vmatprep.subr.mxu0 0.0
        %4986 = vmatpush1.msra.mxu0 0.0
        %4987 = vmatprep.subr.mxu0 0.0
        %4988 = vmatpush1.msra.mxu0 0.0
        %4989 = vmatprep.subr.mxu0 0.0
        %4990 = vmatpush1.msra.mxu0 0.0
        %4991 = vmatprep.subr.mxu0 0.0
        %4992 = vmatpush1.msra.mxu0 0.0
        %4993 = vmatprep.subr.mxu0 0.0
        %4994 = vmatpush1.msra.mxu0 0.0
        %4995 = vmatprep.subr.mxu0 0.0
        %4996 = vmatpush1.msra.mxu0 0.0
        %4997 = vmatprep.subr.mxu0 0.0
        %4998 = vmatpush1.msra.mxu0 0.0
        %4999 = vmatprep.subr.mxu0 0.0
        %5000 = vmatpush1.msra.mxu0 0.0
        %5001 = vmatprep.subr.mxu0 0.0
        %5002 = vmatpush1.msra.mxu0 0.0
        %5003 = vmatprep.subr.mxu0 0.0
        %5004 = vmatpush1.msra.mxu0 0.0
        %5005 = vmatprep.subr.mxu0 0.0
        %5006 = vmatpush1.msra.mxu0 0.0
        %5007 = vmatprep.subr.mxu0 0.0
        %5008 = vmatpush1.msra.mxu0 0.0
        %5009 = vmatprep.mubr.f32.mxu0 0.0
        %v5010 = vand.u32 %v4349, 4294901760
        %5011 = vmatmul.mubr.f32.gmra.mrb[0].mxu0 %v5010
        %v5012 = vpop.f32.mrb[0].mxu0
        %v5013 = vadd.f32 %v4870, %v5012
        %v5014 = vpop.f32.mrb[0].mxu0
        %5015 = vmatprep.mubr.f32.mxu0 0.0
        %v5016 = vand.u32 %v4350, 4294901760
        %5017 = vmatmul.mubr.f32.gmra.mrb[0].mxu0 %v5016
        %v5018 = vpop.f32.mrb[0].mxu0
        %v5019 = vadd.f32 %v4878, %v5018
        %v5020 = vpop.f32.mrb[0].mxu0
        %5021 = vmatprep.mubr.f32.mxu0 0.0
        %v5022 = vand.u32 %v4351, 4294901760
        %5023 = vmatmul.mubr.f32.gmra.mrb[0].mxu0 %v5022
        %v5024 = vpop.f32.mrb[0].mxu0
        %v5025 = vadd.f32 %v4886, %v5024
        %v5026 = vpop.f32.mrb[0].mxu0
        %5027 = vmatprep.mubr.f32.mxu0 0.0
        %v5028 = vand.u32 %v4352, 4294901760
        %5029 = vmatmul.mubr.f32.gmra.mrb[0].mxu0 %v5028
        %v5030 = vpop.f32.mrb[0].mxu0
        %v5031 = vadd.f32 %v4894, %v5030
        %v5032 = vpop.f32.mrb[0].mxu0
        %5033 = vdwg.mxu0
        %5034 = vmatprep.subr.mxu0 0.0
        %v5035 = vand.u32 %v4353, 4294901760
        %5036 = vmatpush1.msra.mxu0 %v5035
        %5037 = vmatprep.subr.mxu0 0.0
        %v5038 = vand.u32 %v4354, 4294901760
        %5039 = vmatpush1.msra.mxu0 %v5038
        %5040 = vmatprep.subr.mxu0 0.0
        %v5041 = vand.u32 %v4355, 4294901760
        %5042 = vmatpush1.msra.mxu0 %v5041
        %5043 = vmatprep.subr.mxu0 0.0
        %v5044 = vand.u32 %v4356, 4294901760
        %5045 = vmatpush1.msra.mxu0 %v5044
        %5046 = vmatprep.subr.mxu0 0.0
        %v5047 = vand.u32 %v4357, 4294901760
        %5048 = vmatpush1.msra.mxu0 %v5047
        %5049 = vmatprep.subr.mxu0 0.0
        %v5050 = vand.u32 %v4358, 4294901760
        %5051 = vmatpush1.msra.mxu0 %v5050
        %5052 = vmatprep.subr.mxu0 0.0
        %v5053 = vand.u32 %v4359, 4294901760
        %5054 = vmatpush1.msra.mxu0 %v5053
        %5055 = vmatprep.subr.mxu0 0.0
        %v5056 = vand.u32 %v4360, 4294901760
        %5057 = vmatpush1.msra.mxu0 %v5056
        %5058 = vmatprep.subr.mxu0 0.0
        %v5059 = vand.u32 %v4361, 4294901760
        %5060 = vmatpush1.msra.mxu0 %v5059
        %5061 = vmatprep.subr.mxu0 0.0
        %v5062 = vand.u32 %v4362, 4294901760
        %5063 = vmatpush1.msra.mxu0 %v5062
        %5064 = vmatprep.subr.mxu0 0.0
        %v5065 = vand.u32 %v4363, 4294901760
        %5066 = vmatpush1.msra.mxu0 %v5065
        %5067 = vmatprep.subr.mxu0 0.0
        %v5068 = vand.u32 %v4364, 4294901760
        %5069 = vmatpush1.msra.mxu0 %v5068
        %5070 = vmatprep.subr.mxu0 0.0
        %v5071 = vand.u32 %v4365, 4294901760
        %5072 = vmatpush1.msra.mxu0 %v5071
        %5073 = vmatprep.subr.mxu0 0.0
        %v5074 = vand.u32 %v4366, 4294901760
        %5075 = vmatpush1.msra.mxu0 %v5074
        %5076 = vmatprep.subr.mxu0 0.0
        %v5077 = vand.u32 %v4367, 4294901760
        %5078 = vmatpush1.msra.mxu0 %v5077
        %5079 = vmatprep.subr.mxu0 0.0
        %v5080 = vand.u32 %v4368, 4294901760
        %5081 = vmatpush1.msra.mxu0 %v5080
        %5082 = vmatprep.subr.mxu0 0.0
        %5083 = vmatpush1.msra.mxu0 0.0
        %5084 = vmatprep.subr.mxu0 0.0
        %5085 = vmatpush1.msra.mxu0 0.0
        %5086 = vmatprep.subr.mxu0 0.0
        %5087 = vmatpush1.msra.mxu0 0.0
        %5088 = vmatprep.subr.mxu0 0.0
        %5089 = vmatpush1.msra.mxu0 0.0
        %5090 = vmatprep.subr.mxu0 0.0
        %5091 = vmatpush1.msra.mxu0 0.0
        %5092 = vmatprep.subr.mxu0 0.0
        %5093 = vmatpush1.msra.mxu0 0.0
        %5094 = vmatprep.subr.mxu0 0.0
        %5095 = vmatpush1.msra.mxu0 0.0
        %5096 = vmatprep.subr.mxu0 0.0
        %5097 = vmatpush1.msra.mxu0 0.0
        %5098 = vmatprep.subr.mxu0 0.0
        %5099 = vmatpush1.msra.mxu0 0.0
        %5100 = vmatprep.subr.mxu0 0.0
        %5101 = vmatpush1.msra.mxu0 0.0
        %5102 = vmatprep.subr.mxu0 0.0
        %5103 = vmatpush1.msra.mxu0 0.0
        %5104 = vmatprep.subr.mxu0 0.0
        %5105 = vmatpush1.msra.mxu0 0.0
        %5106 = vmatprep.subr.mxu0 0.0
        %5107 = vmatpush1.msra.mxu0 0.0
        %5108 = vmatprep.subr.mxu0 0.0
        %5109 = vmatpush1.msra.mxu0 0.0
        %5110 = vmatprep.subr.mxu0 0.0
        %5111 = vmatpush1.msra.mxu0 0.0
        %5112 = vmatprep.subr.mxu0 0.0
        %5113 = vmatpush1.msra.mxu0 0.0
        %5114 = vmatprep.mubr.f32.mxu0 0.0
        %v5115 = vand.u32 %v4349, 4294901760
        %5116 = vmatmul.mubr.f32.gmra.mrb[0].mxu0 %v5115
        %v5117 = vpop.f32.mrb[0].mxu0
        %v5118 = vadd.f32 %v5013, %v5117
        %v5119 = vpop.f32.mrb[0].mxu0
        %5120 = vmatprep.mubr.f32.mxu0 0.0
        %v5121 = vand.u32 %v4350, 4294901760
        %5122 = vmatmul.mubr.f32.gmra.mrb[0].mxu0 %v5121
        %v5123 = vpop.f32.mrb[0].mxu0
        %v5124 = vadd.f32 %v5019, %v5123
        %v5125 = vpop.f32.mrb[0].mxu0
        %5126 = vmatprep.mubr.f32.mxu0 0.0
        %v5127 = vand.u32 %v4351, 4294901760
        %5128 = vmatmul.mubr.f32.gmra.mrb[0].mxu0 %v5127
        %v5129 = vpop.f32.mrb[0].mxu0
        %v5130 = vadd.f32 %v5025, %v5129
        %v5131 = vpop.f32.mrb[0].mxu0
        %5132 = vmatprep.mubr.f32.mxu0 0.0
        %v5133 = vand.u32 %v4352, 4294901760
        %5134 = vmatmul.mubr.f32.gmra.mrb[0].mxu0 %v5133
        %v5135 = vpop.f32.mrb[0].mxu0
        %v5136 = vadd.f32 %v5031, %v5135
        %v5137 = vpop.f32.mrb[0].mxu0
        %5138 = vdwg.mxu0
        %v5139 = vmax.f32 %v5118, 0.0
        %v5140 = vmax.f32 %v5124, 0.0
        %v5141 = vmax.f32 %v5130, 0.0
        %v5142 = vmax.f32 %v5136, 0.0
        %v5143 = vmul.f32 %v5139, %v4345
        %v5144 = vmul.f32 %v5140, %v4346
        %v5145 = vmul.f32 %v5141, %v4347
        %v5146 = vmul.f32 %v5142, %v4348
        %vm5147 = vcmask 261120
        %v5148 = vsel %vm5147, %v5143, 0.0
        %5149 = vadd.xlane.f32.xlu0 %v5148
        %v5150 = vpop.xlane.xlu0 %5149
        %v5151 = vsel %vm5147, %v5144, 0.0
        %5152 = vadd.xlane.f32.xlu0 %v5151
        %v5153 = vpop.xlane.xlu0 %5152
        %v5154 = vsel %vm5147, %v5145, 0.0
        %5155 = vadd.xlane.f32.xlu0 %v5154
        %v5156 = vpop.xlane.xlu0 %5155
        %v5157 = vsel %vm5147, %v5146, 0.0
        %5158 = vadd.xlane.f32.xlu0 %v5157
        %v5159 = vpop.xlane.xlu0 %5158
        %v5160 = vadd.f32 %v5150, %v4317
        %v5161 = vadd.f32 %v5153, %v4324
        %v5162 = vadd.f32 %v5156, %v4331
        %v5163 = vadd.f32 %v5159, %v4338
        %vm5164 = vcmask 7168
        %5165 = vst.msk [vmem:[%s338] sm:$0xff] %vm5164, %v5160
        %5166 = vst.msk [vmem:[%s338 + $0x8] sm:$0xff] %vm5164, %v5161
        %5167 = vst.msk [vmem:[%s338 + $0x10] sm:$0xff] %vm5164, %v5162
        %5168 = vst.msk [vmem:[%s338 + $0x18] sm:$0xff] %vm5164, %v5163
        %s5169 = sand.u32 %s165, 1
        %s5170 = scalar_lea.sflag [#allocation4], %s5169
        %s5171 = sand.u32 %s165, 1
        %s5172 = smul.addr %s5171, 32
        %s5173 = scalar_lea.vmem [#allocation13], %s5172
        // Predicated region
        $region69: #{tpu_custom_call.1} parent=43 // pred_check
          %p5174 = pneg %p175
        $region70: #{tpu_custom_call.1} parent=43 // pred_check_branch
          %5176 = sbr.rel (%p5174) target = $region72
        $region71: #{tpu_custom_call.1} parent=43 // pred_region
          %s5177 = smul.u32 4, %s26
          %s5179 = ssub.s32 512, 512
          %5180 = vsyncadd %s5170, %s5179
          %s5181 = smul.addr %s5177, 128
          %s5182 = scalar_lea.hbm %s6, %s5181
          %s5183 = sshll.u32 %s5173, 4
          %s5184 = int_to_ptr.vmem [resolvable:$true] %s5183
          %5189 = dma.vmem_to_hbm [thread:$0]  %s5184, 512, %s5182, %s5170, 128, 128, 8
        $region72: #{tpu_custom_call.1} parent=43 // pred_fallthru
          _
      $region44: #{tpu_custom_call.1} parent=5 // pred_fallthru
        _
      %p5190 = scmp.le.s32.totalorder 2, %s21
      // Predicated region
      $region73: #{tpu_custom_call.1} parent=5 // pred_check
        %p5191 = pneg %p5190
      $region74: #{tpu_custom_call.1} parent=5 // pred_check_branch
        %5193 = sbr.rel (%p5191) target = $region76
      $region75: #{tpu_custom_call.1} parent=5 // pred_region
        %s5194 = ssub.s32 %s21, 2
        // Predicated region
        $region77: #{tpu_custom_call.1} parent=75 // pred_check
          %p5195 = pneg %p181
        $region78: #{tpu_custom_call.1} parent=75 // pred_check_branch
          %5197 = sbr.rel (%p5195) target = $region80
        $region79: #{tpu_custom_call.1} parent=75 // pred_region
          %s5198 = sand.u32 %s166, 1
          %s5199 = scalar_lea.sflag [#allocation4], %s5198
          %s5200 = sand.u32 %s166, 1
          %s5201 = smul.addr %s5200, 32
          %s5202 = scalar_lea.vmem [#allocation13], %s5201
          %5203 = dma.done %s5199, 512
        $region80: #{tpu_custom_call.1} parent=75 // pred_fallthru
          _
      $region76: #{tpu_custom_call.1} parent=5 // pred_fallthru
        _
    $region6: #{tpu_custom_call.1} parent=1 // loop_footer
      %s25 = sadd.s32 1, %s21
    $region7: #{tpu_custom_call.1} parent=1 // loop_footer_branch
      %20 = sbr.rel target = $region3
    $region8: #{tpu_custom_call.1} parent=1 // loop_exit
      _
    %5204 = vsyncpa [#allocation3], 1
    %s5205 = scalar_lea.sflag [#allocation3], 1
    %5206 = vsyncpa %s5205, 1
    %5207 = vsyncpa [#allocation6], 1
    %5208 = vsyncpa [#allocation9], 1
    %5209 = vsyncpa [#allocation12], 1
    %5210 = vsyncpa [#allocation4], 1
    %s5211 = scalar_lea.sflag [#allocation4], 1
    %5212 = vsyncpa %s5211, 1

</llo_original>
